<compile_context>
chip_gen: v7x
topology: tpu7x:2x2x1
jax: 0.10.0
libtpu: 0.0.40
codegen_flags: <defaults>
</compile_context>

<pallas_src>
import jax
import jax.numpy as jnp
import numpy as np
from jax.experimental import pallas as pl
from jax.experimental.pallas import tpu as pltpu


def _round_up(v, m):
    return (v + m - 1) // m * m


# ---------------------------------------------------------------------------
# Pallas kernels
# ---------------------------------------------------------------------------
def _conv_relu_pool_kernel(p00_ref, p01_ref, p10_ref, p11_ref, w_ref, b_ref,
                           o_ref):
    """Fused conv(as matmul) + bias + ReLU + 2x2 max-pool epilogue.

    p_ij holds the im2col patches of the conv-output positions that land in
    pool-window slot (i, j); rows line up across the four inputs, so pooling
    is an elementwise max of the four ReLU'd matmul results.
    """
    w = w_ref[...]
    b = b_ref[...]

    def branch(p_ref):
        acc = jnp.dot(p_ref[...], w, preferred_element_type=jnp.float32)
        return jnp.maximum(acc + b, 0.0)

    o_ref[...] = jnp.maximum(jnp.maximum(branch(p00_ref), branch(p01_ref)),
                             jnp.maximum(branch(p10_ref), branch(p11_ref)))


def _mlp3_kernel(x_ref, w1_ref, b1_ref, w2_ref, b2_ref, w3_ref, b3_ref, o_ref):
    """fc1+ReLU -> fc2+ReLU -> fc3 fully fused; intermediates stay on-chip."""
    h = jnp.dot(x_ref[...], w1_ref[...], preferred_element_type=jnp.float32)
    h = jnp.maximum(h + b1_ref[...], 0.0)
    h = jnp.dot(h, w2_ref[...], preferred_element_type=jnp.float32)
    h = jnp.maximum(h + b2_ref[...], 0.0)
    o_ref[...] = (jnp.dot(h, w3_ref[...], preferred_element_type=jnp.float32)
                  + b3_ref[...])


# ---------------------------------------------------------------------------
# Pallas wrappers
# ---------------------------------------------------------------------------
def conv_relu_pool(x, w, b, *, kh, kw, tile_m=256):
    """x: (B,H,W,C) NHWC; w: (kh*kw*C, Cout); b: (Cout,).

    Returns maxpool2x2(relu(conv_valid(x))) with shape
    (B, (H-kh+1)//2, (W-kw+1)//2, Cout)."""
    B, H, W, C = x.shape
    OH, OW = H - kh + 1, W - kw + 1
    PH, PW = OH // 2, OW // 2
    K = kh * kw * C
    N = w.shape[1]
    M = B * PH * PW

    tm = min(tile_m, _round_up(M, 8))
    Mp = _round_up(M, tm)

    # im2col grouped by 2x2 pool-window slot (data movement only, no padding
    # of K/N; only the row axis is padded to the tile size).
    mats = []
    for pi in (0, 1):
        for pj in (0, 1):
            cols = [x[:, pi + i:pi + i + 2 * PH:2, pj + j:pj + j + 2 * PW:2, :]
                    for i in range(kh) for j in range(kw)]
            m = jnp.concatenate(cols, axis=-1).reshape(M, K)
            if Mp != M:
                m = jnp.pad(m, ((0, Mp - M), (0, 0)))
            mats.append(m)

    out = pl.pallas_call(
        _conv_relu_pool_kernel,
        out_shape=jax.ShapeDtypeStruct((Mp, N), jnp.float32),
        grid=(Mp // tm,),
        in_specs=[pl.BlockSpec((tm, K), lambda i: (i, 0)) for _ in range(4)]
        + [pl.BlockSpec((K, N), lambda i: (0, 0)),
           pl.BlockSpec((1, N), lambda i: (0, 0))],
        out_specs=pl.BlockSpec((tm, N), lambda i: (i, 0)),
        compiler_params=pltpu.CompilerParams(
            dimension_semantics=("parallel",)),
    )(*mats, w, b.reshape(1, N))
    return out[:M].reshape(B, PH, PW, N)


def mlp3(x, w1, b1, w2, b2, w3, b3, *, tile_b=256):
    """Fused 3-layer MLP: relu(x@w1+b1) -> relu(.@w2+b2) -> .@w3+b3."""
    B, D = x.shape
    N_out = w3.shape[1]
    tb = min(tile_b, _round_up(B, 8))
    Bp = _round_up(B, tb)
    xp = jnp.pad(x, ((0, Bp - B), (0, 0))) if Bp != B else x

    out = pl.pallas_call(
        _mlp3_kernel,
        out_shape=jax.ShapeDtypeStruct((Bp, N_out), jnp.float32),
        grid=(Bp // tb,),
        in_specs=[
            pl.BlockSpec((tb, D), lambda i: (i, 0)),
            pl.BlockSpec(w1.shape, lambda i: (0, 0)),
            pl.BlockSpec((1, w1.shape[1]), lambda i: (0, 0)),
            pl.BlockSpec(w2.shape, lambda i: (0, 0)),
            pl.BlockSpec((1, w2.shape[1]), lambda i: (0, 0)),
            pl.BlockSpec(w3.shape, lambda i: (0, 0)),
            pl.BlockSpec((1, w3.shape[1]), lambda i: (0, 0)),
        ],
        out_specs=pl.BlockSpec((tb, N_out), lambda i: (i, 0)),
        compiler_params=pltpu.CompilerParams(
            dimension_semantics=("parallel",)),
    )(xp, w1, b1.reshape(1, -1), w2, b2.reshape(1, -1), w3, b3.reshape(1, -1))
    return out[:B]


# ---------------------------------------------------------------------------
# Full forward pass (matches torch `Cnn_image.forward` semantics)
# ---------------------------------------------------------------------------
@jax.jit
def cnn_image_forward(x_nchw, params):
    B = x_nchw.shape[0]
    x = jnp.transpose(x_nchw, (0, 2, 3, 1))                      # NCHW -> NHWC

    # conv1 (3->6, k=5) + ReLU + pool, fused
    w1 = jnp.transpose(params["conv1_w"], (2, 3, 1, 0)).reshape(5 * 5 * 3, 6)
    y = conv_relu_pool(x, w1, params["conv1_b"], kh=5, kw=5)     # (B,14,14,6)

    # conv2 (6->16, k=5) + ReLU + pool, fused
    w2 = jnp.transpose(params["conv2_w"], (2, 3, 1, 0)).reshape(5 * 5 * 6, 16)
    y = conv_relu_pool(y, w2, params["conv2_b"], kh=5, kw=5)     # (B,5,5,16)

    # flatten in torch's (C,H,W) order to match x.view(-1, 16*5*5)
    y = jnp.transpose(y, (0, 3, 1, 2)).reshape(B, 16 * 5 * 5)

    # fc1+ReLU -> fc2+ReLU -> fc3, fused into one kernel
    return mlp3(y, params["fc1_w"].T, params["fc1_b"],
                params["fc2_w"].T, params["fc2_b"],
                params["fc3_w"].T, params["fc3_b"])               # (B, 10)


# ---------------------------------------------------------------------------
# Deterministic parameter init (PyTorch-shaped, uniform(+-1/sqrt(fan_in)))
# ---------------------------------------------------------------------------
def init_params(key):
    def u(k, shape, fan_in):
        bound = 1.0 / np.sqrt(fan_in)
        return jax.random.uniform(k, shape, jnp.float32, -bound, bound)

    ks = jax.random.split(key, 10)
    return {
        "conv1_w": u(ks[0], (6, 3, 5, 5), 3 * 5 * 5),
        "conv1_b": u(ks[1], (6,), 3 * 5 * 5),
        "conv2_w": u(ks[2], (16, 6, 5, 5), 6 * 5 * 5),
        "conv2_b": u(ks[3], (16,), 6 * 5 * 5),
        "fc1_w": u(ks[4], (120, 400), 400),
        "fc1_b": u(ks[5], (120,), 400),
        "fc2_w": u(ks[6], (84, 120), 120),
        "fc2_b": u(ks[7], (84,), 120),
        "fc3_w": u(ks[8], (10, 84), 84),
        "fc3_b": u(ks[9], (10,), 84),
    }


if __name__ == "__main__":
    key = jax.random.PRNGKey(0)
    k_in, k_par = jax.random.split(key)
    # The module's forward (view(-1, 16*5*5)) implies 32x32 spatial input.
    x = jax.random.normal(k_in, (2, 3, 32, 32), jnp.float32)     # NCHW, batch=2
    params = init_params(k_par)

    out = cnn_image_forward(x, params)
    out = jax.block_until_ready(out)
    assert out.shape == (2, 10), out.shape
    assert jnp.all(jnp.isfinite(out))
    print("KERNEL_OK")
</pallas_src>

<mosaic_0001>
module attributes {stable_mosaic.version = 11 : i64} {
  func.func @_conv_relu_pool_kernel(%arg0: i32, %arg1: memref<256x75xf32, #tpu.memory_space<vmem>>, %arg2: memref<256x75xf32, #tpu.memory_space<vmem>>, %arg3: memref<256x75xf32, #tpu.memory_space<vmem>>, %arg4: memref<256x75xf32, #tpu.memory_space<vmem>>, %arg5: memref<75x6xf32, #tpu.memory_space<vmem>>, %arg6: memref<1x6xf32, #tpu.memory_space<vmem>>, %arg7: memref<256x6xf32, #tpu.memory_space<vmem>>) attributes {dimension_semantics = [#tpu.dimension_semantics<parallel>], iteration_bounds = array<i64: 2>, scalar_prefetch = 0 : i64, scratch_operands = 0 : i64, tpu.core_type = #tpu.core_type<tc>, window_params = [{transform_indices = @transform_0, window_bounds = array<i64: 256, 75>}, {transform_indices = @transform_1, window_bounds = array<i64: 256, 75>}, {transform_indices = @transform_2, window_bounds = array<i64: 256, 75>}, {transform_indices = @transform_3, window_bounds = array<i64: 256, 75>}, {pipeline_mode = #tpu.pipeline_mode<synchronous>, transform_indices = @transform_4, window_bounds = array<i64: 75, 6>}, {pipeline_mode = #tpu.pipeline_mode<synchronous>, transform_indices = @transform_5, window_bounds = array<i64: 1, 6>}, {transform_indices = @transform_6, window_bounds = array<i64: 256, 6>}]} {
    %c0 = arith.constant 0 : index
    %c0_0 = arith.constant 0 : index
    %0 = vector.load %arg5[%c0, %c0_0] : memref<75x6xf32, #tpu.memory_space<vmem>>, vector<75x6xf32>
    %c0_1 = arith.constant 0 : index
    %c0_2 = arith.constant 0 : index
    %1 = vector.load %arg6[%c0_1, %c0_2] : memref<1x6xf32, #tpu.memory_space<vmem>>, vector<1x6xf32>
    %c0_3 = arith.constant 0 : index
    %c0_4 = arith.constant 0 : index
    %2 = vector.load %arg1[%c0_3, %c0_4] : memref<256x75xf32, #tpu.memory_space<vmem>>, vector<256x75xf32>
    %cst = arith.constant dense<0.000000e+00> : vector<256x6xf32>
    %3 = tpu.matmul %2, %0, %cst {dimension_numbers = #tpu.dot_dimension_numbers<[1], [0], [0], [1], [0, 0, 1, 1], [], []>} : vector<256x75xf32>, vector<75x6xf32>, vector<256x6xf32> -> vector<256x6xf32>
    %4 = vector.broadcast %1 : vector<1x6xf32> to vector<256x6xf32>
    %5 = arith.addf %3, %4 : vector<256x6xf32>
    %cst_5 = arith.constant 0.000000e+00 : f32
    %6 = vector.broadcast %cst_5 : f32 to vector<256x6xf32>
    %7 = arith.maximumf %5, %6 : vector<256x6xf32>
    %c0_6 = arith.constant 0 : index
    %c0_7 = arith.constant 0 : index
    %8 = vector.load %arg2[%c0_6, %c0_7] : memref<256x75xf32, #tpu.memory_space<vmem>>, vector<256x75xf32>
    %cst_8 = arith.constant dense<0.000000e+00> : vector<256x6xf32>
    %9 = tpu.matmul %8, %0, %cst_8 {dimension_numbers = #tpu.dot_dimension_numbers<[1], [0], [0], [1], [0, 0, 1, 1], [], []>} : vector<256x75xf32>, vector<75x6xf32>, vector<256x6xf32> -> vector<256x6xf32>
    %10 = vector.broadcast %1 : vector<1x6xf32> to vector<256x6xf32>
    %11 = arith.addf %9, %10 : vector<256x6xf32>
    %cst_9 = arith.constant 0.000000e+00 : f32
    %12 = vector.broadcast %cst_9 : f32 to vector<256x6xf32>
    %13 = arith.maximumf %11, %12 : vector<256x6xf32>
    %14 = arith.maximumf %7, %13 : vector<256x6xf32>
    %c0_10 = arith.constant 0 : index
    %c0_11 = arith.constant 0 : index
    %15 = vector.load %arg3[%c0_10, %c0_11] : memref<256x75xf32, #tpu.memory_space<vmem>>, vector<256x75xf32>
    %cst_12 = arith.constant dense<0.000000e+00> : vector<256x6xf32>
    %16 = tpu.matmul %15, %0, %cst_12 {dimension_numbers = #tpu.dot_dimension_numbers<[1], [0], [0], [1], [0, 0, 1, 1], [], []>} : vector<256x75xf32>, vector<75x6xf32>, vector<256x6xf32> -> vector<256x6xf32>
    %17 = vector.broadcast %1 : vector<1x6xf32> to vector<256x6xf32>
    %18 = arith.addf %16, %17 : vector<256x6xf32>
    %cst_13 = arith.constant 0.000000e+00 : f32
    %19 = vector.broadcast %cst_13 : f32 to vector<256x6xf32>
    %20 = arith.maximumf %18, %19 : vector<256x6xf32>
    %c0_14 = arith.constant 0 : index
    %c0_15 = arith.constant 0 : index
    %21 = vector.load %arg4[%c0_14, %c0_15] : memref<256x75xf32, #tpu.memory_space<vmem>>, vector<256x75xf32>
    %cst_16 = arith.constant dense<0.000000e+00> : vector<256x6xf32>
    %22 = tpu.matmul %21, %0, %cst_16 {dimension_numbers = #tpu.dot_dimension_numbers<[1], [0], [0], [1], [0, 0, 1, 1], [], []>} : vector<256x75xf32>, vector<75x6xf32>, vector<256x6xf32> -> vector<256x6xf32>
    %23 = vector.broadcast %1 : vector<1x6xf32> to vector<256x6xf32>
    %24 = arith.addf %22, %23 : vector<256x6xf32>
    %cst_17 = arith.constant 0.000000e+00 : f32
    %25 = vector.broadcast %cst_17 : f32 to vector<256x6xf32>
    %26 = arith.maximumf %24, %25 : vector<256x6xf32>
    %27 = arith.maximumf %20, %26 : vector<256x6xf32>
    %28 = arith.maximumf %14, %27 : vector<256x6xf32>
    %c0_18 = arith.constant 0 : index
    %c0_19 = arith.constant 0 : index
    %29 = vector.load %arg7[%c0_18, %c0_19] : memref<256x6xf32, #tpu.memory_space<vmem>>, vector<256x6xf32>
    tpu.vector_store %arg7[%c0_18, %c0_19], %28 {strides = array<i32>} : memref<256x6xf32, #tpu.memory_space<vmem>>, vector<256x6xf32>,
    return
  }
  func.func @transform_0(%arg0: i32) -> (i32, i32) {
    %c0_i32 = arith.constant 0 : i32
    %c0_i32_0 = arith.constant 0 : i32
    return %arg0, %c0_i32 : i32, i32
  }
  func.func @transform_1(%arg0: i32) -> (i32, i32) {
    %c0_i32 = arith.constant 0 : i32
    %c0_i32_0 = arith.constant 0 : i32
    return %arg0, %c0_i32 : i32, i32
  }
  func.func @transform_2(%arg0: i32) -> (i32, i32) {
    %c0_i32 = arith.constant 0 : i32
    %c0_i32_0 = arith.constant 0 : i32
    return %arg0, %c0_i32 : i32, i32
  }
  func.func @transform_3(%arg0: i32) -> (i32, i32) {
    %c0_i32 = arith.constant 0 : i32
    %c0_i32_0 = arith.constant 0 : i32
    return %arg0, %c0_i32 : i32, i32
  }
  func.func @transform_4(%arg0: i32) -> (i32, i32) {
    %c0_i32 = arith.constant 0 : i32
    %c0_i32_0 = arith.constant 0 : i32
    %c0_i32_1 = arith.constant 0 : i32
    return %c0_i32, %c0_i32_0 : i32, i32
  }
  func.func @transform_5(%arg0: i32) -> (i32, i32) {
    %c0_i32 = arith.constant 0 : i32
    %c0_i32_0 = arith.constant 0 : i32
    %c0_i32_1 = arith.constant 0 : i32
    return %c0_i32, %c0_i32_0 : i32, i32
  }
  func.func @transform_6(%arg0: i32) -> (i32, i32) {
    %c0_i32 = arith.constant 0 : i32
    %c0_i32_0 = arith.constant 0 : i32
    return %arg0, %c0_i32 : i32, i32
  }
}

module attributes {stable_mosaic.version = 11 : i64} {
  func.func @_conv_relu_pool_kernel(%arg0: i32, %arg1: memref<56x150xf32, #tpu.memory_space<vmem>>, %arg2: memref<56x150xf32, #tpu.memory_space<vmem>>, %arg3: memref<56x150xf32, #tpu.memory_space<vmem>>, %arg4: memref<56x150xf32, #tpu.memory_space<vmem>>, %arg5: memref<150x16xf32, #tpu.memory_space<vmem>>, %arg6: memref<1x16xf32, #tpu.memory_space<vmem>>, %arg7: memref<56x16xf32, #tpu.memory_space<vmem>>) attributes {dimension_semantics = [#tpu.dimension_semantics<parallel>], iteration_bounds = array<i64: 1>, scalar_prefetch = 0 : i64, scratch_operands = 0 : i64, tpu.core_type = #tpu.core_type<tc>, window_params = [{transform_indices = @transform_0, window_bounds = array<i64: 56, 150>}, {transform_indices = @transform_1, window_bounds = array<i64: 56, 150>}, {transform_indices = @transform_2, window_bounds = array<i64: 56, 150>}, {transform_indices = @transform_3, window_bounds = array<i64: 56, 150>}, {pipeline_mode = #tpu.pipeline_mode<synchronous>, transform_indices = @transform_4, window_bounds = array<i64: 150, 16>}, {pipeline_mode = #tpu.pipeline_mode<synchronous>, transform_indices = @transform_5, window_bounds = array<i64: 1, 16>}, {transform_indices = @transform_6, window_bounds = array<i64: 56, 16>}]} {
    %c0 = arith.constant 0 : index
    %c0_0 = arith.constant 0 : index
    %0 = vector.load %arg5[%c0, %c0_0] : memref<150x16xf32, #tpu.memory_space<vmem>>, vector<150x16xf32>
    %c0_1 = arith.constant 0 : index
    %c0_2 = arith.constant 0 : index
    %1 = vector.load %arg6[%c0_1, %c0_2] : memref<1x16xf32, #tpu.memory_space<vmem>>, vector<1x16xf32>
    %c0_3 = arith.constant 0 : index
    %c0_4 = arith.constant 0 : index
    %2 = vector.load %arg1[%c0_3, %c0_4] : memref<56x150xf32, #tpu.memory_space<vmem>>, vector<56x150xf32>
    %cst = arith.constant dense<0.000000e+00> : vector<56x16xf32>
    %3 = tpu.matmul %2, %0, %cst {dimension_numbers = #tpu.dot_dimension_numbers<[1], [0], [0], [1], [0, 0, 1, 1], [], []>} : vector<56x150xf32>, vector<150x16xf32>, vector<56x16xf32> -> vector<56x16xf32>
    %4 = vector.broadcast %1 : vector<1x16xf32> to vector<56x16xf32>
    %5 = arith.addf %3, %4 : vector<56x16xf32>
    %cst_5 = arith.constant 0.000000e+00 : f32
    %6 = vector.broadcast %cst_5 : f32 to vector<56x16xf32>
    %7 = arith.maximumf %5, %6 : vector<56x16xf32>
    %c0_6 = arith.constant 0 : index
    %c0_7 = arith.constant 0 : index
    %8 = vector.load %arg2[%c0_6, %c0_7] : memref<56x150xf32, #tpu.memory_space<vmem>>, vector<56x150xf32>
    %cst_8 = arith.constant dense<0.000000e+00> : vector<56x16xf32>
    %9 = tpu.matmul %8, %0, %cst_8 {dimension_numbers = #tpu.dot_dimension_numbers<[1], [0], [0], [1], [0, 0, 1, 1], [], []>} : vector<56x150xf32>, vector<150x16xf32>, vector<56x16xf32> -> vector<56x16xf32>
    %10 = vector.broadcast %1 : vector<1x16xf32> to vector<56x16xf32>
    %11 = arith.addf %9, %10 : vector<56x16xf32>
    %cst_9 = arith.constant 0.000000e+00 : f32
    %12 = vector.broadcast %cst_9 : f32 to vector<56x16xf32>
    %13 = arith.maximumf %11, %12 : vector<56x16xf32>
    %14 = arith.maximumf %7, %13 : vector<56x16xf32>
    %c0_10 = arith.constant 0 : index
    %c0_11 = arith.constant 0 : index
    %15 = vector.load %arg3[%c0_10, %c0_11] : memref<56x150xf32, #tpu.memory_space<vmem>>, vector<56x150xf32>
    %cst_12 = arith.constant dense<0.000000e+00> : vector<56x16xf32>
    %16 = tpu.matmul %15, %0, %cst_12 {dimension_numbers = #tpu.dot_dimension_numbers<[1], [0], [0], [1], [0, 0, 1, 1], [], []>} : vector<56x150xf32>, vector<150x16xf32>, vector<56x16xf32> -> vector<56x16xf32>
    %17 = vector.broadcast %1 : vector<1x16xf32> to vector<56x16xf32>
    %18 = arith.addf %16, %17 : vector<56x16xf32>
    %cst_13 = arith.constant 0.000000e+00 : f32
    %19 = vector.broadcast %cst_13 : f32 to vector<56x16xf32>
    %20 = arith.maximumf %18, %19 : vector<56x16xf32>
    %c0_14 = arith.constant 0 : index
    %c0_15 = arith.constant 0 : index
    %21 = vector.load %arg4[%c0_14, %c0_15] : memref<56x150xf32, #tpu.memory_space<vmem>>, vector<56x150xf32>
    %cst_16 = arith.constant dense<0.000000e+00> : vector<56x16xf32>
    %22 = tpu.matmul %21, %0, %cst_16 {dimension_numbers = #tpu.dot_dimension_numbers<[1], [0], [0], [1], [0, 0, 1, 1], [], []>} : vector<56x150xf32>, vector<150x16xf32>, vector<56x16xf32> -> vector<56x16xf32>
    %23 = vector.broadcast %1 : vector<1x16xf32> to vector<56x16xf32>
    %24 = arith.addf %22, %23 : vector<56x16xf32>
    %cst_17 = arith.constant 0.000000e+00 : f32
    %25 = vector.broadcast %cst_17 : f32 to vector<56x16xf32>
    %26 = arith.maximumf %24, %25 : vector<56x16xf32>
    %27 = arith.maximumf %20, %26 : vector<56x16xf32>
    %28 = arith.maximumf %14, %27 : vector<56x16xf32>
    %c0_18 = arith.constant 0 : index
    %c0_19 = arith.constant 0 : index
    %29 = vector.load %arg7[%c0_18, %c0_19] : memref<56x16xf32, #tpu.memory_space<vmem>>, vector<56x16xf32>
    tpu.vector_store %arg7[%c0_18, %c0_19], %28 {strides = array<i32>} : memref<56x16xf32, #tpu.memory_space<vmem>>, vector<56x16xf32>,
    return
  }
  func.func @transform_0(%arg0: i32) -> (i32, i32) {
    %c0_i32 = arith.constant 0 : i32
    %c0_i32_0 = arith.constant 0 : i32
    return %arg0, %c0_i32 : i32, i32
  }
  func.func @transform_1(%arg0: i32) -> (i32, i32) {
    %c0_i32 = arith.constant 0 : i32
    %c0_i32_0 = arith.constant 0 : i32
    return %arg0, %c0_i32 : i32, i32
  }
  func.func @transform_2(%arg0: i32) -> (i32, i32) {
    %c0_i32 = arith.constant 0 : i32
    %c0_i32_0 = arith.constant 0 : i32
    return %arg0, %c0_i32 : i32, i32
  }
  func.func @transform_3(%arg0: i32) -> (i32, i32) {
    %c0_i32 = arith.constant 0 : i32
    %c0_i32_0 = arith.constant 0 : i32
    return %arg0, %c0_i32 : i32, i32
  }
  func.func @transform_4(%arg0: i32) -> (i32, i32) {
    %c0_i32 = arith.constant 0 : i32
    %c0_i32_0 = arith.constant 0 : i32
    %c0_i32_1 = arith.constant 0 : i32
    return %c0_i32, %c0_i32_0 : i32, i32
  }
  func.func @transform_5(%arg0: i32) -> (i32, i32) {
    %c0_i32 = arith.constant 0 : i32
    %c0_i32_0 = arith.constant 0 : i32
    %c0_i32_1 = arith.constant 0 : i32
    return %c0_i32, %c0_i32_0 : i32, i32
  }
  func.func @transform_6(%arg0: i32) -> (i32, i32) {
    %c0_i32 = arith.constant 0 : i32
    %c0_i32_0 = arith.constant 0 : i32
    return %arg0, %c0_i32 : i32, i32
  }
}

module attributes {stable_mosaic.version = 11 : i64} {
  func.func @_mlp3_kernel(%arg0: i32, %arg1: memref<8x400xf32, #tpu.memory_space<vmem>>, %arg2: memref<400x120xf32, #tpu.memory_space<vmem>>, %arg3: memref<1x120xf32, #tpu.memory_space<vmem>>, %arg4: memref<120x84xf32, #tpu.memory_space<vmem>>, %arg5: memref<1x84xf32, #tpu.memory_space<vmem>>, %arg6: memref<84x10xf32, #tpu.memory_space<vmem>>, %arg7: memref<1x10xf32, #tpu.memory_space<vmem>>, %arg8: memref<8x10xf32, #tpu.memory_space<vmem>>) attributes {dimension_semantics = [#tpu.dimension_semantics<parallel>], iteration_bounds = array<i64: 1>, scalar_prefetch = 0 : i64, scratch_operands = 0 : i64, tpu.core_type = #tpu.core_type<tc>, window_params = [{transform_indices = @transform_0, window_bounds = array<i64: 8, 400>}, {pipeline_mode = #tpu.pipeline_mode<synchronous>, transform_indices = @transform_1, window_bounds = array<i64: 400, 120>}, {pipeline_mode = #tpu.pipeline_mode<synchronous>, transform_indices = @transform_2, window_bounds = array<i64: 1, 120>}, {pipeline_mode = #tpu.pipeline_mode<synchronous>, transform_indices = @transform_3, window_bounds = array<i64: 120, 84>}, {pipeline_mode = #tpu.pipeline_mode<synchronous>, transform_indices = @transform_4, window_bounds = array<i64: 1, 84>}, {pipeline_mode = #tpu.pipeline_mode<synchronous>, transform_indices = @transform_5, window_bounds = array<i64: 84, 10>}, {pipeline_mode = #tpu.pipeline_mode<synchronous>, transform_indices = @transform_6, window_bounds = array<i64: 1, 10>}, {transform_indices = @transform_7, window_bounds = array<i64: 8, 10>}]} {
    %c0 = arith.constant 0 : index
    %c0_0 = arith.constant 0 : index
    %0 = vector.load %arg1[%c0, %c0_0] : memref<8x400xf32, #tpu.memory_space<vmem>>, vector<8x400xf32>
    %c0_1 = arith.constant 0 : index
    %c0_2 = arith.constant 0 : index
    %1 = vector.load %arg2[%c0_1, %c0_2] : memref<400x120xf32, #tpu.memory_space<vmem>>, vector<400x120xf32>
    %cst = arith.constant dense<0.000000e+00> : vector<8x120xf32>
    %2 = tpu.matmul %0, %1, %cst {dimension_numbers = #tpu.dot_dimension_numbers<[1], [0], [0], [1], [0, 0, 1, 1], [], []>} : vector<8x400xf32>, vector<400x120xf32>, vector<8x120xf32> -> vector<8x120xf32>
    %c0_3 = arith.constant 0 : index
    %c0_4 = arith.constant 0 : index
    %3 = vector.load %arg3[%c0_3, %c0_4] : memref<1x120xf32, #tpu.memory_space<vmem>>, vector<1x120xf32>
    %4 = vector.broadcast %3 : vector<1x120xf32> to vector<8x120xf32>
    %5 = arith.addf %2, %4 : vector<8x120xf32>
    %cst_5 = arith.constant 0.000000e+00 : f32
    %6 = vector.broadcast %cst_5 : f32 to vector<8x120xf32>
    %7 = arith.maximumf %5, %6 : vector<8x120xf32>
    %c0_6 = arith.constant 0 : index
    %c0_7 = arith.constant 0 : index
    %8 = vector.load %arg4[%c0_6, %c0_7] : memref<120x84xf32, #tpu.memory_space<vmem>>, vector<120x84xf32>
    %cst_8 = arith.constant dense<0.000000e+00> : vector<8x84xf32>
    %9 = tpu.matmul %7, %8, %cst_8 {dimension_numbers = #tpu.dot_dimension_numbers<[1], [0], [0], [1], [0, 0, 1, 1], [], []>} : vector<8x120xf32>, vector<120x84xf32>, vector<8x84xf32> -> vector<8x84xf32>
    %c0_9 = arith.constant 0 : index
    %c0_10 = arith.constant 0 : index
    %10 = vector.load %arg5[%c0_9, %c0_10] : memref<1x84xf32, #tpu.memory_space<vmem>>, vector<1x84xf32>
    %11 = vector.broadcast %10 : vector<1x84xf32> to vector<8x84xf32>
    %12 = arith.addf %9, %11 : vector<8x84xf32>
    %cst_11 = arith.constant 0.000000e+00 : f32
    %13 = vector.broadcast %cst_11 : f32 to vector<8x84xf32>
    %14 = arith.maximumf %12, %13 : vector<8x84xf32>
    %c0_12 = arith.constant 0 : index
    %c0_13 = arith.constant 0 : index
    %15 = vector.load %arg6[%c0_12, %c0_13] : memref<84x10xf32, #tpu.memory_space<vmem>>, vector<84x10xf32>
    %cst_14 = arith.constant dense<0.000000e+00> : vector<8x10xf32>
    %16 = tpu.matmul %14, %15, %cst_14 {dimension_numbers = #tpu.dot_dimension_numbers<[1], [0], [0], [1], [0, 0, 1, 1], [], []>} : vector<8x84xf32>, vector<84x10xf32>, vector<8x10xf32> -> vector<8x10xf32>
    %c0_15 = arith.constant 0 : index
    %c0_16 = arith.constant 0 : index
    %17 = vector.load %arg7[%c0_15, %c0_16] : memref<1x10xf32, #tpu.memory_space<vmem>>, vector<1x10xf32>
    %18 = vector.broadcast %17 : vector<1x10xf32> to vector<8x10xf32>
    %19 = arith.addf %16, %18 : vector<8x10xf32>
    %c0_17 = arith.constant 0 : index
    %c0_18 = arith.constant 0 : index
    %20 = vector.load %arg8[%c0_17, %c0_18] : memref<8x10xf32, #tpu.memory_space<vmem>>, vector<8x10xf32>
    tpu.vector_store %arg8[%c0_17, %c0_18], %19 {strides = array<i32>} : memref<8x10xf32, #tpu.memory_space<vmem>>, vector<8x10xf32>,
    return
  }
  func.func @transform_0(%arg0: i32) -> (i32, i32) {
    %c0_i32 = arith.constant 0 : i32
    %c0_i32_0 = arith.constant 0 : i32
    return %arg0, %c0_i32 : i32, i32
  }
  func.func @transform_1(%arg0: i32) -> (i32, i32) {
    %c0_i32 = arith.constant 0 : i32
    %c0_i32_0 = arith.constant 0 : i32
    %c0_i32_1 = arith.constant 0 : i32
    return %c0_i32, %c0_i32_0 : i32, i32
  }
  func.func @transform_2(%arg0: i32) -> (i32, i32) {
    %c0_i32 = arith.constant 0 : i32
    %c0_i32_0 = arith.constant 0 : i32
    %c0_i32_1 = arith.constant 0 : i32
    return %c0_i32, %c0_i32_0 : i32, i32
  }
  func.func @transform_3(%arg0: i32) -> (i32, i32) {
    %c0_i32 = arith.constant 0 : i32
    %c0_i32_0 = arith.constant 0 : i32
    %c0_i32_1 = arith.constant 0 : i32
    return %c0_i32, %c0_i32_0 : i32, i32
  }
  func.func @transform_4(%arg0: i32) -> (i32, i32) {
    %c0_i32 = arith.constant 0 : i32
    %c0_i32_0 = arith.constant 0 : i32
    %c0_i32_1 = arith.constant 0 : i32
    return %c0_i32, %c0_i32_0 : i32, i32
  }
  func.func @transform_5(%arg0: i32) -> (i32, i32) {
    %c0_i32 = arith.constant 0 : i32
    %c0_i32_0 = arith.constant 0 : i32
    %c0_i32_1 = arith.constant 0 : i32
    return %c0_i32, %c0_i32_0 : i32, i32
  }
  func.func @transform_6(%arg0: i32) -> (i32, i32) {
    %c0_i32 = arith.constant 0 : i32
    %c0_i32_0 = arith.constant 0 : i32
    %c0_i32_1 = arith.constant 0 : i32
    return %c0_i32, %c0_i32_0 : i32, i32
  }
  func.func @transform_7(%arg0: i32) -> (i32, i32) {
    %c0_i32 = arith.constant 0 : i32
    %c0_i32_0 = arith.constant 0 : i32
    return %arg0, %c0_i32 : i32, i32
  }
}

</mosaic_0001>

<llo_original>
// kernel: cnn_image_forward.3
$region0: #{cnn_image_forward.3}
  #allocation0 [shape = 'u32[]', space=smem, size = 0x4, offset = 0x4, fixed_abs, tag = 'smem constant byte address 0x4 - core index']
  #allocation1 [shape = 'u32[144,128]{1,0:T(1,128)}', space=vmem, size = 0x12000, scoped, tag = 'internal scratch']
  %s0 = inlined_call_operand.vmem [shape: f32[512,75], index: 0, kind: input, shape index: {}]
  %s1 = inlined_call_operand.vmem [shape: f32[512,75], index: 1, kind: input, shape index: {}]
  %s2 = inlined_call_operand.vmem [shape: f32[512,75], index: 2, kind: input, shape index: {}]
  %s3 = inlined_call_operand.vmem [shape: f32[512,75], index: 3, kind: input, shape index: {}]
  %s4 = inlined_call_operand.vmem [shape: f32[75,6], index: 4, kind: input, shape index: {}]
  %s5 = inlined_call_operand.vmem [shape: f32[1,6], index: 5, kind: input, shape index: {}]
  %s6 = inlined_call_operand.vmem [shape: f32[512,6], index: 6, kind: output, shape index: {}]
  %s7 = sld [smem:[#allocation0]]
  $region57: #{cnn_image_forward.3} parent=0
    _
  %s9 = ssub.s32 1, %s7
  %s10 = scalar_select 0, %s9, %s7
  loop: start=0, step=1, limit=4
  $region2: #{cnn_image_forward.3} parent=0 // loop_pre_header
    _
  $region3: #{cnn_image_forward.3} parent=0 // loop_header
    %s12 = sphi 0, %s16
    %p13 = scmp.ge.s32.totalorder %s12, 4
    %s22 = sphi 0, %s24
    %s25 = sphi 0, %s22
    %s26 = sphi 0, %s25
    %s42 = sphi 0, %s26
    %s48 = sphi 0, %s50
    %s51 = sphi 0, %s48
    %s52 = sphi 0, %s51
    %s68 = sphi 0, %s52
    %s74 = sphi 0, %s76
    %s77 = sphi 0, %s74
    %s78 = sphi 0, %s77
    %s94 = sphi 0, %s78
    %s100 = sphi 0, %s102
    %s103 = sphi 0, %s100
    %s104 = sphi 0, %s103
    %s120 = sphi 0, %s104
    %s124 = sphi 0, %s124
    %s126 = sphi 0, %s124
    %s127 = sphi 0, %s126
    %s141 = sphi 0, %s127
    %s145 = sphi 0, %s145
    %s147 = sphi 0, %s145
    %s148 = sphi 0, %s147
    %s162 = sphi 0, %s148
    %s168 = sphi 0, %s170
    %s171 = sphi 0, %s168
    %s172 = sphi 0, %s171
    %s188 = sphi 0, %s172
  $region4: #{cnn_image_forward.3} parent=0 // loop_header_branch
    %15 = sbr.rel (%p13) target = $region8
  $region5: #{cnn_image_forward.3} parent=0 // loop_body
    %s17 = ssub.s32 %s12, 1
    %s18 = ssub.s32 %s12, 2
    %s19 = sadd.s32 %s12, 1
    %s20 = ssub.s32 %s12, %s19
    %p21 = scmp.eq.s32.totalorder %s20, 0
    %s23 = sadd.s32 %s22, 1
    %s24 = scalar_select %p21, %s22, %s23
    %p27 = pneg %p21
    %p28 = scmp.eq.s32.totalorder %s12, 1
    %p29 = por %p27, %p28
    %p30 = scmp.ne.s32.totalorder %s22, %s25
    %p31 = scmp.eq.s32.totalorder %s12, 0
    %p32 = por %p30, %p31
    %p33 = scmp.ne.s32.totalorder %s22, %s25
    %p34 = scmp.eq.s32.totalorder %s17, 1
    %p35 = por %p33, %p34
    %p36 = scmp.ne.s32.totalorder %s25, %s26
    %p37 = scmp.eq.s32.totalorder %s17, 0
    %p38 = por %p36, %p37
    %p39 = scmp.ne.s32.totalorder %s25, %s26
    %p40 = scmp.eq.s32.totalorder %s18, 1
    %p41 = por %p39, %p40
    %p43 = scmp.ne.s32.totalorder %s26, %s42
    %p44 = scmp.eq.s32.totalorder %s18, 0
    %p45 = por %p43, %p44
    %s46 = ssub.s32 %s12, %s19
    %p47 = scmp.eq.s32.totalorder %s46, 0
    %s49 = sadd.s32 %s48, 1
    %s50 = scalar_select %p47, %s48, %s49
    %p53 = pneg %p47
    %p54 = scmp.eq.s32.totalorder %s12, 1
    %p55 = por %p53, %p54
    %p56 = scmp.ne.s32.totalorder %s48, %s51
    %p57 = scmp.eq.s32.totalorder %s12, 0
    %p58 = por %p56, %p57
    %p59 = scmp.ne.s32.totalorder %s48, %s51
    %p60 = scmp.eq.s32.totalorder %s17, 1
    %p61 = por %p59, %p60
    %p62 = scmp.ne.s32.totalorder %s51, %s52
    %p63 = scmp.eq.s32.totalorder %s17, 0
    %p64 = por %p62, %p63
    %p65 = scmp.ne.s32.totalorder %s51, %s52
    %p66 = scmp.eq.s32.totalorder %s18, 1
    %p67 = por %p65, %p66
    %p69 = scmp.ne.s32.totalorder %s52, %s68
    %p70 = scmp.eq.s32.totalorder %s18, 0
    %p71 = por %p69, %p70
    %s72 = ssub.s32 %s12, %s19
    %p73 = scmp.eq.s32.totalorder %s72, 0
    %s75 = sadd.s32 %s74, 1
    %s76 = scalar_select %p73, %s74, %s75
    %p79 = pneg %p73
    %p80 = scmp.eq.s32.totalorder %s12, 1
    %p81 = por %p79, %p80
    %p82 = scmp.ne.s32.totalorder %s74, %s77
    %p83 = scmp.eq.s32.totalorder %s12, 0
    %p84 = por %p82, %p83
    %p85 = scmp.ne.s32.totalorder %s74, %s77
    %p86 = scmp.eq.s32.totalorder %s17, 1
    %p87 = por %p85, %p86
    %p88 = scmp.ne.s32.totalorder %s77, %s78
    %p89 = scmp.eq.s32.totalorder %s17, 0
    %p90 = por %p88, %p89
    %p91 = scmp.ne.s32.totalorder %s77, %s78
    %p92 = scmp.eq.s32.totalorder %s18, 1
    %p93 = por %p91, %p92
    %p95 = scmp.ne.s32.totalorder %s78, %s94
    %p96 = scmp.eq.s32.totalorder %s18, 0
    %p97 = por %p95, %p96
    %s98 = ssub.s32 %s12, %s19
    %p99 = scmp.eq.s32.totalorder %s98, 0
    %s101 = sadd.s32 %s100, 1
    %s102 = scalar_select %p99, %s100, %s101
    %p105 = pneg %p99
    %p106 = scmp.eq.s32.totalorder %s12, 1
    %p107 = por %p105, %p106
    %p108 = scmp.ne.s32.totalorder %s100, %s103
    %p109 = scmp.eq.s32.totalorder %s12, 0
    %p110 = por %p108, %p109
    %p111 = scmp.ne.s32.totalorder %s100, %s103
    %p112 = scmp.eq.s32.totalorder %s17, 1
    %p113 = por %p111, %p112
    %p114 = scmp.ne.s32.totalorder %s103, %s104
    %p115 = scmp.eq.s32.totalorder %s17, 0
    %p116 = por %p114, %p115
    %p117 = scmp.ne.s32.totalorder %s103, %s104
    %p118 = scmp.eq.s32.totalorder %s18, 1
    %p119 = por %p117, %p118
    %p121 = scmp.ne.s32.totalorder %s104, %s120
    %p122 = scmp.eq.s32.totalorder %s18, 0
    %p123 = por %p121, %p122
    %s125 = sadd.s32 %s124, 1
    %p128 = scmp.eq.s32.totalorder %s12, 1
    %p129 = scmp.ne.s32.totalorder %s124, %s126
    %p130 = scmp.eq.s32.totalorder %s12, 0
    %p131 = por %p129, %p130
    %p132 = scmp.ne.s32.totalorder %s124, %s126
    %p133 = scmp.eq.s32.totalorder %s17, 1
    %p134 = por %p132, %p133
    %p135 = scmp.ne.s32.totalorder %s126, %s127
    %p136 = scmp.eq.s32.totalorder %s17, 0
    %p137 = por %p135, %p136
    %p138 = scmp.ne.s32.totalorder %s126, %s127
    %p139 = scmp.eq.s32.totalorder %s18, 1
    %p140 = por %p138, %p139
    %p142 = scmp.ne.s32.totalorder %s127, %s141
    %p143 = scmp.eq.s32.totalorder %s18, 0
    %p144 = por %p142, %p143
    %s146 = sadd.s32 %s145, 1
    %p149 = scmp.eq.s32.totalorder %s12, 1
    %p150 = scmp.ne.s32.totalorder %s145, %s147
    %p151 = scmp.eq.s32.totalorder %s12, 0
    %p152 = por %p150, %p151
    %p153 = scmp.ne.s32.totalorder %s145, %s147
    %p154 = scmp.eq.s32.totalorder %s17, 1
    %p155 = por %p153, %p154
    %p156 = scmp.ne.s32.totalorder %s147, %s148
    %p157 = scmp.eq.s32.totalorder %s17, 0
    %p158 = por %p156, %p157
    %p159 = scmp.ne.s32.totalorder %s147, %s148
    %p160 = scmp.eq.s32.totalorder %s18, 1
    %p161 = por %p159, %p160
    %p163 = scmp.ne.s32.totalorder %s148, %s162
    %p164 = scmp.eq.s32.totalorder %s18, 0
    %p165 = por %p163, %p164
    %s166 = ssub.s32 %s12, %s19
    %p167 = scmp.eq.s32.totalorder %s166, 0
    %s169 = sadd.s32 %s168, 1
    %s170 = scalar_select %p167, %s168, %s169
    %p173 = pneg %p167
    %p174 = scmp.eq.s32.totalorder %s12, 1
    %p175 = por %p173, %p174
    %p176 = scmp.ne.s32.totalorder %s168, %s171
    %p177 = scmp.eq.s32.totalorder %s12, 0
    %p178 = por %p176, %p177
    %p179 = scmp.ne.s32.totalorder %s168, %s171
    %p180 = scmp.eq.s32.totalorder %s17, 1
    %p181 = por %p179, %p180
    %p182 = scmp.ne.s32.totalorder %s171, %s172
    %p183 = scmp.eq.s32.totalorder %s17, 0
    %p184 = por %p182, %p183
    %p185 = scmp.ne.s32.totalorder %s171, %s172
    %p186 = scmp.eq.s32.totalorder %s18, 1
    %p187 = por %p185, %p186
    %p189 = scmp.ne.s32.totalorder %s172, %s188
    %p190 = scmp.eq.s32.totalorder %s18, 0
    %p191 = por %p189, %p190
    %p192 = scmp.le.s32.totalorder 1, %s12
    %p193 = scmp.lt.s32.totalorder %s12, 3
    %p194 = pnand %p192, %p193
    %p195 = pneg %p194
    // Predicated region
    $region9: #{cnn_image_forward.3} parent=5 // pred_check
      _
    $region10: #{cnn_image_forward.3} parent=5 // pred_check_branch
      %197 = sbr.rel (%p194) target = $region12
    $region11: #{cnn_image_forward.3} parent=5 // pred_region
      %s198 = ssub.s32 %s12, 1
      // Predicated region
      $region13: #{cnn_image_forward.3} parent=11 // pred_check
        %p199 = pneg %p137
      $region14: #{cnn_image_forward.3} parent=11 // pred_check_branch
        %201 = sbr.rel (%p199) target = $region16
      $region15: #{cnn_image_forward.3} parent=11 // pred_region
        _
      $region16: #{cnn_image_forward.3} parent=11 // pred_fallthru
        _
      // Predicated region
      $region17: #{cnn_image_forward.3} parent=11 // pred_check
        %p202 = pneg %p158
      $region18: #{cnn_image_forward.3} parent=11 // pred_check_branch
        %204 = sbr.rel (%p202) target = $region20
      $region19: #{cnn_image_forward.3} parent=11 // pred_region
        _
      $region20: #{cnn_image_forward.3} parent=11 // pred_fallthru
        _
    $region12: #{cnn_image_forward.3} parent=5 // pred_fallthru
      _
    %p205 = scmp.lt.s32.totalorder %s12, 2
    // Predicated region
    $region21: #{cnn_image_forward.3} parent=5 // pred_check
      %p206 = pneg %p205
    $region22: #{cnn_image_forward.3} parent=5 // pred_check_branch
      %208 = sbr.rel (%p206) target = $region24
    $region23: #{cnn_image_forward.3} parent=5 // pred_region
      // Predicated region
      $region25: #{cnn_image_forward.3} parent=23 // pred_check
        %p209 = pneg %p32
      $region26: #{cnn_image_forward.3} parent=23 // pred_check_branch
        %211 = sbr.rel (%p209) target = $region28
      $region27: #{cnn_image_forward.3} parent=23 // pred_region
        %s212 = smul.u32 32, %s12
        %p213 = scmp.lt.s32.totalorder %s212, 63
        %s214 = scalar_select %p213, %s212, 63
        %s215 = smul.addr %s214, 8
        %s216 = scalar_lea.vmem %s0, %s215
        %s217 = smul.u32 32, %s12
      $region28: #{cnn_image_forward.3} parent=23 // pred_fallthru
        _
      // Predicated region
      $region29: #{cnn_image_forward.3} parent=23 // pred_check
        %p218 = pneg %p58
      $region30: #{cnn_image_forward.3} parent=23 // pred_check_branch
        %220 = sbr.rel (%p218) target = $region32
      $region31: #{cnn_image_forward.3} parent=23 // pred_region
        %s221 = smul.u32 32, %s12
        %p222 = scmp.lt.s32.totalorder %s221, 63
        %s223 = scalar_select %p222, %s221, 63
        %s224 = smul.addr %s223, 8
        %s225 = scalar_lea.vmem %s1, %s224
        %s226 = smul.u32 32, %s12
      $region32: #{cnn_image_forward.3} parent=23 // pred_fallthru
        _
      // Predicated region
      $region33: #{cnn_image_forward.3} parent=23 // pred_check
        %p227 = pneg %p84
      $region34: #{cnn_image_forward.3} parent=23 // pred_check_branch
        %229 = sbr.rel (%p227) target = $region36
      $region35: #{cnn_image_forward.3} parent=23 // pred_region
        %s230 = smul.u32 32, %s12
        %p231 = scmp.lt.s32.totalorder %s230, 63
        %s232 = scalar_select %p231, %s230, 63
        %s233 = smul.addr %s232, 8
        %s234 = scalar_lea.vmem %s2, %s233
        %s235 = smul.u32 32, %s12
      $region36: #{cnn_image_forward.3} parent=23 // pred_fallthru
        _
      // Predicated region
      $region37: #{cnn_image_forward.3} parent=23 // pred_check
        %p236 = pneg %p110
      $region38: #{cnn_image_forward.3} parent=23 // pred_check_branch
        %238 = sbr.rel (%p236) target = $region40
      $region39: #{cnn_image_forward.3} parent=23 // pred_region
        %s239 = smul.u32 32, %s12
        %p240 = scmp.lt.s32.totalorder %s239, 63
        %s241 = scalar_select %p240, %s239, 63
        %s242 = smul.addr %s241, 8
        %s243 = scalar_lea.vmem %s3, %s242
        %s244 = smul.u32 32, %s12
      $region40: #{cnn_image_forward.3} parent=23 // pred_fallthru
        _
    $region24: #{cnn_image_forward.3} parent=5 // pred_fallthru
      _
    %p245 = scmp.le.s32.totalorder 1, %s12
    %p246 = scmp.lt.s32.totalorder %s12, 3
    %p247 = pnand %p245, %p246
    %p248 = pneg %p247
    // Predicated region
    $region41: #{cnn_image_forward.3} parent=5 // pred_check
      _
    $region42: #{cnn_image_forward.3} parent=5 // pred_check_branch
      %250 = sbr.rel (%p247) target = $region44
    $region43: #{cnn_image_forward.3} parent=5 // pred_region
      %s251 = ssub.s32 %s12, 1
      %s252 = smul.u32 32, %s17
      %p253 = scmp.lt.s32.totalorder %s252, 63
      %s254 = scalar_select %p253, %s252, 63
      %s255 = smul.addr %s254, 8
      %s256 = scalar_lea.vmem %s0, %s255
      %p257 = pneg %p38
      %p258 = pneg %p35
      %s259 = smul.u32 32, %s17
      %p260 = scmp.lt.s32.totalorder %s259, 63
      %s261 = scalar_select %p260, %s259, 63
      %s262 = smul.addr %s261, 8
      %s263 = scalar_lea.vmem %s1, %s262
      %p264 = pneg %p64
      %p265 = pneg %p61
      %s266 = smul.u32 32, %s17
      %p267 = scmp.lt.s32.totalorder %s266, 63
      %s268 = scalar_select %p267, %s266, 63
      %s269 = smul.addr %s268, 8
      %s270 = scalar_lea.vmem %s2, %s269
      %p271 = pneg %p90
      %p272 = pneg %p87
      %s273 = smul.u32 32, %s17
      %p274 = scmp.lt.s32.totalorder %s273, 63
      %s275 = scalar_select %p274, %s273, 63
      %s276 = smul.addr %s275, 8
      %s277 = scalar_lea.vmem %s3, %s276
      %p278 = pneg %p116
      %p279 = pneg %p113
      %p280 = pneg %p137
      %p281 = pneg %p134
      %p282 = pneg %p158
      %p283 = pneg %p155
      %p284 = pneg %p184
      %p285 = pneg %p181
      %s286 = smul.u32 32, %s17
      %p287 = scmp.lt.s32.totalorder %s286, 63
      %s288 = scalar_select %p287, %s286, 63
      %s289 = smul.addr %s288, 8
      %s290 = scalar_lea.vmem %s6, %s289
      %s291 = smul.u32 32, %s17
      %p292 = scmp.lt.s32.totalorder %s291, 63
      %s293 = scalar_select %p292, %s291, 63
      %s294 = smul.addr %s293, 8
      %s295 = scalar_lea.vmem %s0, %s294
      %s296 = smul.u32 32, %s17
      %s297 = smul.u32 32, %s17
      %p298 = scmp.lt.s32.totalorder %s297, 63
      %s299 = scalar_select %p298, %s297, 63
      %s300 = smul.addr %s299, 8
      %s301 = scalar_lea.vmem %s1, %s300
      %s302 = smul.u32 32, %s17
      %s303 = smul.u32 32, %s17
      %p304 = scmp.lt.s32.totalorder %s303, 63
      %s305 = scalar_select %p304, %s303, 63
      %s306 = smul.addr %s305, 8
      %s307 = scalar_lea.vmem %s2, %s306
      %s308 = smul.u32 32, %s17
      %s309 = smul.u32 32, %s17
      %p310 = scmp.lt.s32.totalorder %s309, 63
      %s311 = scalar_select %p310, %s309, 63
      %s312 = smul.addr %s311, 8
      %s313 = scalar_lea.vmem %s3, %s312
      %s314 = smul.u32 32, %s17
      %s315 = smul.u32 32, %s17
      %p316 = scmp.lt.s32.totalorder %s315, 63
      %s317 = scalar_select %p316, %s315, 63
      %s318 = smul.addr %s317, 8
      %s319 = scalar_lea.vmem %s6, %s318
      %s320 = smul.u32 32, %s17
      %v321 = vld [vmem:[%s4] sm:$0xff]
      %v322 = vld [vmem:[%s4 + $0x8] sm:$0xff]
      %v323 = vld [vmem:[%s4 + $0x10] sm:$0xff]
      %v324 = vld [vmem:[%s4 + $0x18] sm:$0xff]
      %v325 = vld [vmem:[%s4 + $0x20] sm:$0xff]
      %v326 = vld [vmem:[%s4 + $0x28] sm:$0xff]
      %v327 = vld [vmem:[%s4 + $0x30] sm:$0xff]
      %v328 = vld [vmem:[%s4 + $0x38] sm:$0xff]
      %v329 = vld [vmem:[%s4 + $0x40] sm:$0xff]
      %v330 = vld [vmem:[%s4 + $0x48] sm:$0x7]
      %v331 = vld [vmem:[%s5] sm:$0x1]
      %v332 = vld [vmem:[%s295] sm:$0xff]
      %v333 = vld [vmem:[%s295 + $0x8] sm:$0xff]
      %v334 = vld [vmem:[%s295 + $0x10] sm:$0xff]
      %v335 = vld [vmem:[%s295 + $0x18] sm:$0xff]
      %v336 = vld [vmem:[%s295 + $0x20] sm:$0xff]
      %v337 = vld [vmem:[%s295 + $0x28] sm:$0xff]
      %v338 = vld [vmem:[%s295 + $0x30] sm:$0xff]
      %v339 = vld [vmem:[%s295 + $0x38] sm:$0xff]
      %v340 = vld [vmem:[%s295 + $0x40] sm:$0xff]
      %v341 = vld [vmem:[%s295 + $0x48] sm:$0xff]
      %v342 = vld [vmem:[%s295 + $0x50] sm:$0xff]
      %v343 = vld [vmem:[%s295 + $0x58] sm:$0xff]
      %v344 = vld [vmem:[%s295 + $0x60] sm:$0xff]
      %v345 = vld [vmem:[%s295 + $0x68] sm:$0xff]
      %v346 = vld [vmem:[%s295 + $0x70] sm:$0xff]
      %v347 = vld [vmem:[%s295 + $0x78] sm:$0xff]
      %v348 = vld [vmem:[%s295 + $0x80] sm:$0xff]
      %v349 = vld [vmem:[%s295 + $0x88] sm:$0xff]
      %v350 = vld [vmem:[%s295 + $0x90] sm:$0xff]
      %v351 = vld [vmem:[%s295 + $0x98] sm:$0xff]
      %v352 = vld [vmem:[%s295 + $0xa0] sm:$0xff]
      %v353 = vld [vmem:[%s295 + $0xa8] sm:$0xff]
      %v354 = vld [vmem:[%s295 + $0xb0] sm:$0xff]
      %v355 = vld [vmem:[%s295 + $0xb8] sm:$0xff]
      %v356 = vld [vmem:[%s295 + $0xc0] sm:$0xff]
      %v357 = vld [vmem:[%s295 + $0xc8] sm:$0xff]
      %v358 = vld [vmem:[%s295 + $0xd0] sm:$0xff]
      %v359 = vld [vmem:[%s295 + $0xd8] sm:$0xff]
      %v360 = vld [vmem:[%s295 + $0xe0] sm:$0xff]
      %v361 = vld [vmem:[%s295 + $0xe8] sm:$0xff]
      %v362 = vld [vmem:[%s295 + $0xf0] sm:$0xff]
      %v363 = vld [vmem:[%s295 + $0xf8] sm:$0xff]
      %v365 = vlaneseq
      %v366 = vshrl.u32 %v365, 7
      %v367 = vsub.s32 0, %v366
      %v368 = vrot.slane %v331, %v367
      %vm370 = vcmask 613376
      %v372 = vsel %vm370, %v332, 0
      %v375 = vsel %vm370, %v333, 0
      %v378 = vsel %vm370, %v334, 0
      %v381 = vsel %vm370, %v335, 0
      %v384 = vsel %vm370, %v336, 0
      %v387 = vsel %vm370, %v337, 0
      %v390 = vsel %vm370, %v338, 0
      %v393 = vsel %vm370, %v339, 0
      %v396 = vsel %vm370, %v340, 0
      %v399 = vsel %vm370, %v341, 0
      %v402 = vsel %vm370, %v342, 0
      %v405 = vsel %vm370, %v343, 0
      %v408 = vsel %vm370, %v344, 0
      %v411 = vsel %vm370, %v345, 0
      %v414 = vsel %vm370, %v346, 0
      %v417 = vsel %vm370, %v347, 0
      %v420 = vsel %vm370, %v348, 0
      %v423 = vsel %vm370, %v349, 0
      %v426 = vsel %vm370, %v350, 0
      %v429 = vsel %vm370, %v351, 0
      %v432 = vsel %vm370, %v352, 0
      %v435 = vsel %vm370, %v353, 0
      %v438 = vsel %vm370, %v354, 0
      %v441 = vsel %vm370, %v355, 0
      %v444 = vsel %vm370, %v356, 0
      %v447 = vsel %vm370, %v357, 0
      %v450 = vsel %vm370, %v358, 0
      %v453 = vsel %vm370, %v359, 0
      %v456 = vsel %vm370, %v360, 0
      %v459 = vsel %vm370, %v361, 0
      %v462 = vsel %vm370, %v362, 0
      %v465 = vsel %vm370, %v363, 0
      %vm467 = vcmask 1042432
      %v469 = vsel %vm467, %v330, 0
      %471 = vmatprep.subr.mxu0 0.0
      %472 = vmatpush1.msra.mxu0 %v321
      %473 = vmatprep.subr.mxu0 0.0
      %474 = vmatpush1.msra.mxu0 %v322
      %475 = vmatprep.subr.mxu0 0.0
      %476 = vmatpush1.msra.mxu0 %v323
      %477 = vmatprep.subr.mxu0 0.0
      %478 = vmatpush1.msra.mxu0 %v324
      %479 = vmatprep.subr.mxu0 0.0
      %480 = vmatpush1.msra.mxu0 %v325
      %481 = vmatprep.subr.mxu0 0.0
      %482 = vmatpush1.msra.mxu0 %v326
      %483 = vmatprep.subr.mxu0 0.0
      %484 = vmatpush1.msra.mxu0 %v327
      %485 = vmatprep.subr.mxu0 0.0
      %486 = vmatpush1.msra.mxu0 %v328
      %487 = vmatprep.subr.mxu0 0.0
      %488 = vmatpush1.msra.mxu0 %v329
      %489 = vmatprep.subr.mxu0 0.0
      %490 = vmatpush1.msra.mxu0 %v469
      %491 = vmatprep.subr.mxu0 0.0
      %492 = vmatpush1.msra.mxu0 0.0
      %493 = vmatprep.subr.mxu0 0.0
      %494 = vmatpush1.msra.mxu0 0.0
      %495 = vmatprep.subr.mxu0 0.0
      %496 = vmatpush1.msra.mxu0 0.0
      %497 = vmatprep.subr.mxu0 0.0
      %498 = vmatpush1.msra.mxu0 0.0
      %499 = vmatprep.subr.mxu0 0.0
      %500 = vmatpush1.msra.mxu0 0.0
      %501 = vmatprep.subr.mxu0 0.0
      %502 = vmatpush1.msra.mxu0 0.0
      %503 = vmatprep.subr.mxu0 0.0
      %504 = vmatpush1.msra.mxu0 0.0
      %505 = vmatprep.subr.mxu0 0.0
      %506 = vmatpush1.msra.mxu0 0.0
      %507 = vmatprep.subr.mxu0 0.0
      %508 = vmatpush1.msra.mxu0 0.0
      %509 = vmatprep.subr.mxu0 0.0
      %510 = vmatpush1.msra.mxu0 0.0
      %511 = vmatprep.subr.mxu0 0.0
      %512 = vmatpush1.msra.mxu0 0.0
      %513 = vmatprep.subr.mxu0 0.0
      %514 = vmatpush1.msra.mxu0 0.0
      %515 = vmatprep.subr.mxu0 0.0
      %516 = vmatpush1.msra.mxu0 0.0
      %517 = vmatprep.subr.mxu0 0.0
      %518 = vmatpush1.msra.mxu0 0.0
      %519 = vmatprep.subr.mxu0 0.0
      %520 = vmatpush1.msra.mxu0 0.0
      %521 = vmatprep.subr.mxu0 0.0
      %522 = vmatpush1.msra.mxu0 0.0
      %523 = vmatprep.subr.mxu0 0.0
      %524 = vmatpush1.msra.mxu0 0.0
      %525 = vmatprep.subr.mxu0 0.0
      %526 = vmatpush1.msra.mxu0 0.0
      %527 = vmatprep.subr.mxu0 0.0
      %528 = vmatpush1.msra.mxu0 0.0
      %529 = vmatprep.subr.mxu0 0.0
      %530 = vmatpush1.msra.mxu0 0.0
      %531 = vmatprep.subr.mxu0 0.0
      %532 = vmatpush1.msra.mxu0 0.0
      %533 = vmatprep.subr.mxu0 0.0
      %534 = vmatpush1.msra.mxu0 0.0
      %535 = vmatprep.mubr.f32.mxu0 0.0
      %536 = vmatmul.mubr.f32.gmra.mrb[0].mxu0 %v372
      %v537 = vpop.f32.mrb[0].mxu0
      %v538 = vadd.f32 %v368, %v537
      %v539 = vpop.f32.mrb[0].mxu0
      %540 = vmatprep.mubr.f32.mxu0 0.0
      %541 = vmatmul.mubr.f32.gmra.mrb[0].mxu0 %v375
      %v542 = vpop.f32.mrb[0].mxu0
      %v543 = vadd.f32 %v368, %v542
      %v544 = vpop.f32.mrb[0].mxu0
      %545 = vmatprep.mubr.f32.mxu0 0.0
      %546 = vmatmul.mubr.f32.gmra.mrb[0].mxu0 %v378
      %v547 = vpop.f32.mrb[0].mxu0
      %v548 = vadd.f32 %v368, %v547
      %v549 = vpop.f32.mrb[0].mxu0
      %550 = vmatprep.mubr.f32.mxu0 0.0
      %551 = vmatmul.mubr.f32.gmra.mrb[0].mxu0 %v381
      %v552 = vpop.f32.mrb[0].mxu0
      %v553 = vadd.f32 %v368, %v552
      %v554 = vpop.f32.mrb[0].mxu0
      %555 = vmatprep.mubr.f32.mxu0 0.0
      %556 = vmatmul.mubr.f32.gmra.mrb[0].mxu0 %v384
      %v557 = vpop.f32.mrb[0].mxu0
      %v558 = vadd.f32 %v368, %v557
      %v559 = vpop.f32.mrb[0].mxu0
      %560 = vmatprep.mubr.f32.mxu0 0.0
      %561 = vmatmul.mubr.f32.gmra.mrb[0].mxu0 %v387
      %v562 = vpop.f32.mrb[0].mxu0
      %v563 = vadd.f32 %v368, %v562
      %v564 = vpop.f32.mrb[0].mxu0
      %565 = vmatprep.mubr.f32.mxu0 0.0
      %566 = vmatmul.mubr.f32.gmra.mrb[0].mxu0 %v390
      %v567 = vpop.f32.mrb[0].mxu0
      %v568 = vadd.f32 %v368, %v567
      %v569 = vpop.f32.mrb[0].mxu0
      %570 = vmatprep.mubr.f32.mxu0 0.0
      %571 = vmatmul.mubr.f32.gmra.mrb[0].mxu0 %v393
      %v572 = vpop.f32.mrb[0].mxu0
      %v573 = vadd.f32 %v368, %v572
      %v574 = vpop.f32.mrb[0].mxu0
      %575 = vmatprep.mubr.f32.mxu0 0.0
      %576 = vmatmul.mubr.f32.gmra.mrb[0].mxu0 %v396
      %v577 = vpop.f32.mrb[0].mxu0
      %v578 = vadd.f32 %v368, %v577
      %v579 = vpop.f32.mrb[0].mxu0
      %580 = vmatprep.mubr.f32.mxu0 0.0
      %581 = vmatmul.mubr.f32.gmra.mrb[0].mxu0 %v399
      %v582 = vpop.f32.mrb[0].mxu0
      %v583 = vadd.f32 %v368, %v582
      %v584 = vpop.f32.mrb[0].mxu0
      %585 = vmatprep.mubr.f32.mxu0 0.0
      %586 = vmatmul.mubr.f32.gmra.mrb[0].mxu0 %v402
      %v587 = vpop.f32.mrb[0].mxu0
      %v588 = vadd.f32 %v368, %v587
      %v589 = vpop.f32.mrb[0].mxu0
      %590 = vmatprep.mubr.f32.mxu0 0.0
      %591 = vmatmul.mubr.f32.gmra.mrb[0].mxu0 %v405
      %v592 = vpop.f32.mrb[0].mxu0
      %v593 = vadd.f32 %v368, %v592
      %v594 = vpop.f32.mrb[0].mxu0
      %595 = vmatprep.mubr.f32.mxu0 0.0
      %596 = vmatmul.mubr.f32.gmra.mrb[0].mxu0 %v408
      %v597 = vpop.f32.mrb[0].mxu0
      %v598 = vadd.f32 %v368, %v597
      %v599 = vpop.f32.mrb[0].mxu0
      %600 = vmatprep.mubr.f32.mxu0 0.0
      %601 = vmatmul.mubr.f32.gmra.mrb[0].mxu0 %v411
      %v602 = vpop.f32.mrb[0].mxu0
      %v603 = vadd.f32 %v368, %v602
      %v604 = vpop.f32.mrb[0].mxu0
      %605 = vmatprep.mubr.f32.mxu0 0.0
      %606 = vmatmul.mubr.f32.gmra.mrb[0].mxu0 %v414
      %v607 = vpop.f32.mrb[0].mxu0
      %v608 = vadd.f32 %v368, %v607
      %v609 = vpop.f32.mrb[0].mxu0
      %610 = vmatprep.mubr.f32.mxu0 0.0
      %611 = vmatmul.mubr.f32.gmra.mrb[0].mxu0 %v417
      %v612 = vpop.f32.mrb[0].mxu0
      %v613 = vadd.f32 %v368, %v612
      %v614 = vpop.f32.mrb[0].mxu0
      %615 = vmatprep.mubr.f32.mxu0 0.0
      %616 = vmatmul.mubr.f32.gmra.mrb[0].mxu0 %v420
      %v617 = vpop.f32.mrb[0].mxu0
      %v618 = vadd.f32 %v368, %v617
      %v619 = vpop.f32.mrb[0].mxu0
      %620 = vmatprep.mubr.f32.mxu0 0.0
      %621 = vmatmul.mubr.f32.gmra.mrb[0].mxu0 %v423
      %v622 = vpop.f32.mrb[0].mxu0
      %v623 = vadd.f32 %v368, %v622
      %v624 = vpop.f32.mrb[0].mxu0
      %625 = vmatprep.mubr.f32.mxu0 0.0
      %626 = vmatmul.mubr.f32.gmra.mrb[0].mxu0 %v426
      %v627 = vpop.f32.mrb[0].mxu0
      %v628 = vadd.f32 %v368, %v627
      %v629 = vpop.f32.mrb[0].mxu0
      %630 = vmatprep.mubr.f32.mxu0 0.0
      %631 = vmatmul.mubr.f32.gmra.mrb[0].mxu0 %v429
      %v632 = vpop.f32.mrb[0].mxu0
      %v633 = vadd.f32 %v368, %v632
      %v634 = vpop.f32.mrb[0].mxu0
      %635 = vmatprep.mubr.f32.mxu0 0.0
      %636 = vmatmul.mubr.f32.gmra.mrb[0].mxu0 %v432
      %v637 = vpop.f32.mrb[0].mxu0
      %v638 = vadd.f32 %v368, %v637
      %v639 = vpop.f32.mrb[0].mxu0
      %640 = vmatprep.mubr.f32.mxu0 0.0
      %641 = vmatmul.mubr.f32.gmra.mrb[0].mxu0 %v435
      %v642 = vpop.f32.mrb[0].mxu0
      %v643 = vadd.f32 %v368, %v642
      %v644 = vpop.f32.mrb[0].mxu0
      %645 = vmatprep.mubr.f32.mxu0 0.0
      %646 = vmatmul.mubr.f32.gmra.mrb[0].mxu0 %v438
      %v647 = vpop.f32.mrb[0].mxu0
      %v648 = vadd.f32 %v368, %v647
      %v649 = vpop.f32.mrb[0].mxu0
      %650 = vmatprep.mubr.f32.mxu0 0.0
      %651 = vmatmul.mubr.f32.gmra.mrb[0].mxu0 %v441
      %v652 = vpop.f32.mrb[0].mxu0
      %v653 = vadd.f32 %v368, %v652
      %v654 = vpop.f32.mrb[0].mxu0
      %655 = vmatprep.mubr.f32.mxu0 0.0
      %656 = vmatmul.mubr.f32.gmra.mrb[0].mxu0 %v444
      %v657 = vpop.f32.mrb[0].mxu0
      %v658 = vadd.f32 %v368, %v657
      %v659 = vpop.f32.mrb[0].mxu0
      %660 = vmatprep.mubr.f32.mxu0 0.0
      %661 = vmatmul.mubr.f32.gmra.mrb[0].mxu0 %v447
      %v662 = vpop.f32.mrb[0].mxu0
      %v663 = vadd.f32 %v368, %v662
      %v664 = vpop.f32.mrb[0].mxu0
      %665 = vmatprep.mubr.f32.mxu0 0.0
      %666 = vmatmul.mubr.f32.gmra.mrb[0].mxu0 %v450
      %v667 = vpop.f32.mrb[0].mxu0
      %v668 = vadd.f32 %v368, %v667
      %v669 = vpop.f32.mrb[0].mxu0
      %670 = vmatprep.mubr.f32.mxu0 0.0
      %671 = vmatmul.mubr.f32.gmra.mrb[0].mxu0 %v453
      %v672 = vpop.f32.mrb[0].mxu0
      %v673 = vadd.f32 %v368, %v672
      %v674 = vpop.f32.mrb[0].mxu0
      %675 = vmatprep.mubr.f32.mxu0 0.0
      %676 = vmatmul.mubr.f32.gmra.mrb[0].mxu0 %v456
      %v677 = vpop.f32.mrb[0].mxu0
      %v678 = vadd.f32 %v368, %v677
      %v679 = vpop.f32.mrb[0].mxu0
      %680 = vmatprep.mubr.f32.mxu0 0.0
      %681 = vmatmul.mubr.f32.gmra.mrb[0].mxu0 %v459
      %v682 = vpop.f32.mrb[0].mxu0
      %v683 = vadd.f32 %v368, %v682
      %v684 = vpop.f32.mrb[0].mxu0
      %685 = vmatprep.mubr.f32.mxu0 0.0
      %686 = vmatmul.mubr.f32.gmra.mrb[0].mxu0 %v462
      %v687 = vpop.f32.mrb[0].mxu0
      %v688 = vadd.f32 %v368, %v687
      %v689 = vpop.f32.mrb[0].mxu0
      %690 = vmatprep.mubr.f32.mxu0 0.0
      %691 = vmatmul.mubr.f32.gmra.mrb[0].mxu0 %v465
      %v692 = vpop.f32.mrb[0].mxu0
      %v693 = vadd.f32 %v368, %v692
      %v694 = vpop.f32.mrb[0].mxu0
      %695 = vdwg.mxu0
      %v696 = vmax.f32 %v538, 0.0
      %v697 = vmax.f32 %v543, 0.0
      %v698 = vmax.f32 %v548, 0.0
      %v699 = vmax.f32 %v553, 0.0
      %v700 = vmax.f32 %v558, 0.0
      %v701 = vmax.f32 %v563, 0.0
      %v702 = vmax.f32 %v568, 0.0
      %v703 = vmax.f32 %v573, 0.0
      %v704 = vmax.f32 %v578, 0.0
      %v705 = vmax.f32 %v583, 0.0
      %v706 = vmax.f32 %v588, 0.0
      %v707 = vmax.f32 %v593, 0.0
      %v708 = vmax.f32 %v598, 0.0
      %v709 = vmax.f32 %v603, 0.0
      %v710 = vmax.f32 %v608, 0.0
      %v711 = vmax.f32 %v613, 0.0
      %v712 = vmax.f32 %v618, 0.0
      %v713 = vmax.f32 %v623, 0.0
      %v714 = vmax.f32 %v628, 0.0
      %v715 = vmax.f32 %v633, 0.0
      %v716 = vmax.f32 %v638, 0.0
      %v717 = vmax.f32 %v643, 0.0
      %v718 = vmax.f32 %v648, 0.0
      %v719 = vmax.f32 %v653, 0.0
      %v720 = vmax.f32 %v658, 0.0
      %v721 = vmax.f32 %v663, 0.0
      %v722 = vmax.f32 %v668, 0.0
      %v723 = vmax.f32 %v673, 0.0
      %v724 = vmax.f32 %v678, 0.0
      %v725 = vmax.f32 %v683, 0.0
      %v726 = vmax.f32 %v688, 0.0
      %v727 = vmax.f32 %v693, 0.0
      %v728 = vld [vmem:[%s301] sm:$0xff]
      %v729 = vld [vmem:[%s301 + $0x8] sm:$0xff]
      %v730 = vld [vmem:[%s301 + $0x10] sm:$0xff]
      %v731 = vld [vmem:[%s301 + $0x18] sm:$0xff]
      %v732 = vld [vmem:[%s301 + $0x20] sm:$0xff]
      %v733 = vld [vmem:[%s301 + $0x28] sm:$0xff]
      %v734 = vld [vmem:[%s301 + $0x30] sm:$0xff]
      %v735 = vld [vmem:[%s301 + $0x38] sm:$0xff]
      %v736 = vld [vmem:[%s301 + $0x40] sm:$0xff]
      %v737 = vld [vmem:[%s301 + $0x48] sm:$0xff]
      %v738 = vld [vmem:[%s301 + $0x50] sm:$0xff]
      %v739 = vld [vmem:[%s301 + $0x58] sm:$0xff]
      %v740 = vld [vmem:[%s301 + $0x60] sm:$0xff]
      %v741 = vld [vmem:[%s301 + $0x68] sm:$0xff]
      %v742 = vld [vmem:[%s301 + $0x70] sm:$0xff]
      %v743 = vld [vmem:[%s301 + $0x78] sm:$0xff]
      %v744 = vld [vmem:[%s301 + $0x80] sm:$0xff]
      %v745 = vld [vmem:[%s301 + $0x88] sm:$0xff]
      %v746 = vld [vmem:[%s301 + $0x90] sm:$0xff]
      %v747 = vld [vmem:[%s301 + $0x98] sm:$0xff]
      %v748 = vld [vmem:[%s301 + $0xa0] sm:$0xff]
      %v749 = vld [vmem:[%s301 + $0xa8] sm:$0xff]
      %v750 = vld [vmem:[%s301 + $0xb0] sm:$0xff]
      %v751 = vld [vmem:[%s301 + $0xb8] sm:$0xff]
      %v752 = vld [vmem:[%s301 + $0xc0] sm:$0xff]
      %v753 = vld [vmem:[%s301 + $0xc8] sm:$0xff]
      %v754 = vld [vmem:[%s301 + $0xd0] sm:$0xff]
      %v755 = vld [vmem:[%s301 + $0xd8] sm:$0xff]
      %v756 = vld [vmem:[%s301 + $0xe0] sm:$0xff]
      %v757 = vld [vmem:[%s301 + $0xe8] sm:$0xff]
      %v758 = vld [vmem:[%s301 + $0xf0] sm:$0xff]
      %v759 = vld [vmem:[%s301 + $0xf8] sm:$0xff]
      %v761 = vsel %vm370, %v728, 0
      %v764 = vsel %vm370, %v729, 0
      %v767 = vsel %vm370, %v730, 0
      %v770 = vsel %vm370, %v731, 0
      %v773 = vsel %vm370, %v732, 0
      %v776 = vsel %vm370, %v733, 0
      %v779 = vsel %vm370, %v734, 0
      %v782 = vsel %vm370, %v735, 0
      %v785 = vsel %vm370, %v736, 0
      %v788 = vsel %vm370, %v737, 0
      %v791 = vsel %vm370, %v738, 0
      %v794 = vsel %vm370, %v739, 0
      %v797 = vsel %vm370, %v740, 0
      %v800 = vsel %vm370, %v741, 0
      %v803 = vsel %vm370, %v742, 0
      %v806 = vsel %vm370, %v743, 0
      %v809 = vsel %vm370, %v744, 0
      %v812 = vsel %vm370, %v745, 0
      %v815 = vsel %vm370, %v746, 0
      %v818 = vsel %vm370, %v747, 0
      %v821 = vsel %vm370, %v748, 0
      %v824 = vsel %vm370, %v749, 0
      %v827 = vsel %vm370, %v750, 0
      %v830 = vsel %vm370, %v751, 0
      %v833 = vsel %vm370, %v752, 0
      %v836 = vsel %vm370, %v753, 0
      %v839 = vsel %vm370, %v754, 0
      %v842 = vsel %vm370, %v755, 0
      %v845 = vsel %vm370, %v756, 0
      %v848 = vsel %vm370, %v757, 0
      %v851 = vsel %vm370, %v758, 0
      %v854 = vsel %vm370, %v759, 0
      %856 = vmatprep.subr.mxu0 0.0
      %857 = vmatpush1.msra.mxu0 %v321
      %858 = vmatprep.subr.mxu0 0.0
      %859 = vmatpush1.msra.mxu0 %v322
      %860 = vmatprep.subr.mxu0 0.0
      %861 = vmatpush1.msra.mxu0 %v323
      %862 = vmatprep.subr.mxu0 0.0
      %863 = vmatpush1.msra.mxu0 %v324
      %864 = vmatprep.subr.mxu0 0.0
      %865 = vmatpush1.msra.mxu0 %v325
      %866 = vmatprep.subr.mxu0 0.0
      %867 = vmatpush1.msra.mxu0 %v326
      %868 = vmatprep.subr.mxu0 0.0
      %869 = vmatpush1.msra.mxu0 %v327
      %870 = vmatprep.subr.mxu0 0.0
      %871 = vmatpush1.msra.mxu0 %v328
      %872 = vmatprep.subr.mxu0 0.0
      %873 = vmatpush1.msra.mxu0 %v329
      %874 = vmatprep.subr.mxu0 0.0
      %875 = vmatpush1.msra.mxu0 %v469
      %876 = vmatprep.subr.mxu0 0.0
      %877 = vmatpush1.msra.mxu0 0.0
      %878 = vmatprep.subr.mxu0 0.0
      %879 = vmatpush1.msra.mxu0 0.0
      %880 = vmatprep.subr.mxu0 0.0
      %881 = vmatpush1.msra.mxu0 0.0
      %882 = vmatprep.subr.mxu0 0.0
      %883 = vmatpush1.msra.mxu0 0.0
      %884 = vmatprep.subr.mxu0 0.0
      %885 = vmatpush1.msra.mxu0 0.0
      %886 = vmatprep.subr.mxu0 0.0
      %887 = vmatpush1.msra.mxu0 0.0
      %888 = vmatprep.subr.mxu0 0.0
      %889 = vmatpush1.msra.mxu0 0.0
      %890 = vmatprep.subr.mxu0 0.0
      %891 = vmatpush1.msra.mxu0 0.0
      %892 = vmatprep.subr.mxu0 0.0
      %893 = vmatpush1.msra.mxu0 0.0
      %894 = vmatprep.subr.mxu0 0.0
      %895 = vmatpush1.msra.mxu0 0.0
      %896 = vmatprep.subr.mxu0 0.0
      %897 = vmatpush1.msra.mxu0 0.0
      %898 = vmatprep.subr.mxu0 0.0
      %899 = vmatpush1.msra.mxu0 0.0
      %900 = vmatprep.subr.mxu0 0.0
      %901 = vmatpush1.msra.mxu0 0.0
      %902 = vmatprep.subr.mxu0 0.0
      %903 = vmatpush1.msra.mxu0 0.0
      %904 = vmatprep.subr.mxu0 0.0
      %905 = vmatpush1.msra.mxu0 0.0
      %906 = vmatprep.subr.mxu0 0.0
      %907 = vmatpush1.msra.mxu0 0.0
      %908 = vmatprep.subr.mxu0 0.0
      %909 = vmatpush1.msra.mxu0 0.0
      %910 = vmatprep.subr.mxu0 0.0
      %911 = vmatpush1.msra.mxu0 0.0
      %912 = vmatprep.subr.mxu0 0.0
      %913 = vmatpush1.msra.mxu0 0.0
      %914 = vmatprep.subr.mxu0 0.0
      %915 = vmatpush1.msra.mxu0 0.0
      %916 = vmatprep.subr.mxu0 0.0
      %917 = vmatpush1.msra.mxu0 0.0
      %918 = vmatprep.subr.mxu0 0.0
      %919 = vmatpush1.msra.mxu0 0.0
      %920 = vmatprep.mubr.f32.mxu0 0.0
      %921 = vmatmul.mubr.f32.gmra.mrb[0].mxu0 %v761
      %v922 = vpop.f32.mrb[0].mxu0
      %v923 = vadd.f32 %v368, %v922
      %v924 = vpop.f32.mrb[0].mxu0
      %925 = vmatprep.mubr.f32.mxu0 0.0
      %926 = vmatmul.mubr.f32.gmra.mrb[0].mxu0 %v764
      %v927 = vpop.f32.mrb[0].mxu0
      %v928 = vadd.f32 %v368, %v927
      %v929 = vpop.f32.mrb[0].mxu0
      %930 = vmatprep.mubr.f32.mxu0 0.0
      %931 = vmatmul.mubr.f32.gmra.mrb[0].mxu0 %v767
      %v932 = vpop.f32.mrb[0].mxu0
      %v933 = vadd.f32 %v368, %v932
      %v934 = vpop.f32.mrb[0].mxu0
      %935 = vmatprep.mubr.f32.mxu0 0.0
      %936 = vmatmul.mubr.f32.gmra.mrb[0].mxu0 %v770
      %v937 = vpop.f32.mrb[0].mxu0
      %v938 = vadd.f32 %v368, %v937
      %v939 = vpop.f32.mrb[0].mxu0
      %940 = vmatprep.mubr.f32.mxu0 0.0
      %941 = vmatmul.mubr.f32.gmra.mrb[0].mxu0 %v773
      %v942 = vpop.f32.mrb[0].mxu0
      %v943 = vadd.f32 %v368, %v942
      %v944 = vpop.f32.mrb[0].mxu0
      %945 = vmatprep.mubr.f32.mxu0 0.0
      %946 = vmatmul.mubr.f32.gmra.mrb[0].mxu0 %v776
      %v947 = vpop.f32.mrb[0].mxu0
      %v948 = vadd.f32 %v368, %v947
      %v949 = vpop.f32.mrb[0].mxu0
      %950 = vmatprep.mubr.f32.mxu0 0.0
      %951 = vmatmul.mubr.f32.gmra.mrb[0].mxu0 %v779
      %v952 = vpop.f32.mrb[0].mxu0
      %v953 = vadd.f32 %v368, %v952
      %v954 = vpop.f32.mrb[0].mxu0
      %955 = vmatprep.mubr.f32.mxu0 0.0
      %956 = vmatmul.mubr.f32.gmra.mrb[0].mxu0 %v782
      %v957 = vpop.f32.mrb[0].mxu0
      %v958 = vadd.f32 %v368, %v957
      %v959 = vpop.f32.mrb[0].mxu0
      %960 = vmatprep.mubr.f32.mxu0 0.0
      %961 = vmatmul.mubr.f32.gmra.mrb[0].mxu0 %v785
      %v962 = vpop.f32.mrb[0].mxu0
      %v963 = vadd.f32 %v368, %v962
      %v964 = vpop.f32.mrb[0].mxu0
      %965 = vmatprep.mubr.f32.mxu0 0.0
      %966 = vmatmul.mubr.f32.gmra.mrb[0].mxu0 %v788
      %v967 = vpop.f32.mrb[0].mxu0
      %v968 = vadd.f32 %v368, %v967
      %v969 = vpop.f32.mrb[0].mxu0
      %970 = vmatprep.mubr.f32.mxu0 0.0
      %971 = vmatmul.mubr.f32.gmra.mrb[0].mxu0 %v791
      %v972 = vpop.f32.mrb[0].mxu0
      %v973 = vadd.f32 %v368, %v972
      %v974 = vpop.f32.mrb[0].mxu0
      %975 = vmatprep.mubr.f32.mxu0 0.0
      %976 = vmatmul.mubr.f32.gmra.mrb[0].mxu0 %v794
      %v977 = vpop.f32.mrb[0].mxu0
      %v978 = vadd.f32 %v368, %v977
      %v979 = vpop.f32.mrb[0].mxu0
      %980 = vmatprep.mubr.f32.mxu0 0.0
      %981 = vmatmul.mubr.f32.gmra.mrb[0].mxu0 %v797
      %v982 = vpop.f32.mrb[0].mxu0
      %v983 = vadd.f32 %v368, %v982
      %v984 = vpop.f32.mrb[0].mxu0
      %985 = vmatprep.mubr.f32.mxu0 0.0
      %986 = vmatmul.mubr.f32.gmra.mrb[0].mxu0 %v800
      %v987 = vpop.f32.mrb[0].mxu0
      %v988 = vadd.f32 %v368, %v987
      %v989 = vpop.f32.mrb[0].mxu0
      %990 = vmatprep.mubr.f32.mxu0 0.0
      %991 = vmatmul.mubr.f32.gmra.mrb[0].mxu0 %v803
      %v992 = vpop.f32.mrb[0].mxu0
      %v993 = vadd.f32 %v368, %v992
      %v994 = vpop.f32.mrb[0].mxu0
      %995 = vmatprep.mubr.f32.mxu0 0.0
      %996 = vmatmul.mubr.f32.gmra.mrb[0].mxu0 %v806
      %v997 = vpop.f32.mrb[0].mxu0
      %v998 = vadd.f32 %v368, %v997
      %v999 = vpop.f32.mrb[0].mxu0
      %1000 = vmatprep.mubr.f32.mxu0 0.0
      %1001 = vmatmul.mubr.f32.gmra.mrb[0].mxu0 %v809
      %v1002 = vpop.f32.mrb[0].mxu0
      %v1003 = vadd.f32 %v368, %v1002
      %v1004 = vpop.f32.mrb[0].mxu0
      %1005 = vmatprep.mubr.f32.mxu0 0.0
      %1006 = vmatmul.mubr.f32.gmra.mrb[0].mxu0 %v812
      %v1007 = vpop.f32.mrb[0].mxu0
      %v1008 = vadd.f32 %v368, %v1007
      %v1009 = vpop.f32.mrb[0].mxu0
      %1010 = vmatprep.mubr.f32.mxu0 0.0
      %1011 = vmatmul.mubr.f32.gmra.mrb[0].mxu0 %v815
      %v1012 = vpop.f32.mrb[0].mxu0
      %v1013 = vadd.f32 %v368, %v1012
      %v1014 = vpop.f32.mrb[0].mxu0
      %1015 = vmatprep.mubr.f32.mxu0 0.0
      %1016 = vmatmul.mubr.f32.gmra.mrb[0].mxu0 %v818
      %v1017 = vpop.f32.mrb[0].mxu0
      %v1018 = vadd.f32 %v368, %v1017
      %v1019 = vpop.f32.mrb[0].mxu0
      %1020 = vmatprep.mubr.f32.mxu0 0.0
      %1021 = vmatmul.mubr.f32.gmra.mrb[0].mxu0 %v821
      %v1022 = vpop.f32.mrb[0].mxu0
      %v1023 = vadd.f32 %v368, %v1022
      %v1024 = vpop.f32.mrb[0].mxu0
      %1025 = vmatprep.mubr.f32.mxu0 0.0
      %1026 = vmatmul.mubr.f32.gmra.mrb[0].mxu0 %v824
      %v1027 = vpop.f32.mrb[0].mxu0
      %v1028 = vadd.f32 %v368, %v1027
      %v1029 = vpop.f32.mrb[0].mxu0
      %1030 = vmatprep.mubr.f32.mxu0 0.0
      %1031 = vmatmul.mubr.f32.gmra.mrb[0].mxu0 %v827
      %v1032 = vpop.f32.mrb[0].mxu0
      %v1033 = vadd.f32 %v368, %v1032
      %v1034 = vpop.f32.mrb[0].mxu0
      %1035 = vmatprep.mubr.f32.mxu0 0.0
      %1036 = vmatmul.mubr.f32.gmra.mrb[0].mxu0 %v830
      %v1037 = vpop.f32.mrb[0].mxu0
      %v1038 = vadd.f32 %v368, %v1037
      %v1039 = vpop.f32.mrb[0].mxu0
      %1040 = vmatprep.mubr.f32.mxu0 0.0
      %1041 = vmatmul.mubr.f32.gmra.mrb[0].mxu0 %v833
      %v1042 = vpop.f32.mrb[0].mxu0
      %v1043 = vadd.f32 %v368, %v1042
      %v1044 = vpop.f32.mrb[0].mxu0
      %1045 = vmatprep.mubr.f32.mxu0 0.0
      %1046 = vmatmul.mubr.f32.gmra.mrb[0].mxu0 %v836
      %v1047 = vpop.f32.mrb[0].mxu0
      %v1048 = vadd.f32 %v368, %v1047
      %v1049 = vpop.f32.mrb[0].mxu0
      %1050 = vmatprep.mubr.f32.mxu0 0.0
      %1051 = vmatmul.mubr.f32.gmra.mrb[0].mxu0 %v839
      %v1052 = vpop.f32.mrb[0].mxu0
      %v1053 = vadd.f32 %v368, %v1052
      %v1054 = vpop.f32.mrb[0].mxu0
      %1055 = vmatprep.mubr.f32.mxu0 0.0
      %1056 = vmatmul.mubr.f32.gmra.mrb[0].mxu0 %v842
      %v1057 = vpop.f32.mrb[0].mxu0
      %v1058 = vadd.f32 %v368, %v1057
      %v1059 = vpop.f32.mrb[0].mxu0
      %1060 = vmatprep.mubr.f32.mxu0 0.0
      %1061 = vmatmul.mubr.f32.gmra.mrb[0].mxu0 %v845
      %v1062 = vpop.f32.mrb[0].mxu0
      %v1063 = vadd.f32 %v368, %v1062
      %v1064 = vpop.f32.mrb[0].mxu0
      %1065 = vmatprep.mubr.f32.mxu0 0.0
      %1066 = vmatmul.mubr.f32.gmra.mrb[0].mxu0 %v848
      %v1067 = vpop.f32.mrb[0].mxu0
      %v1068 = vadd.f32 %v368, %v1067
      %v1069 = vpop.f32.mrb[0].mxu0
      %1070 = vmatprep.mubr.f32.mxu0 0.0
      %1071 = vmatmul.mubr.f32.gmra.mrb[0].mxu0 %v851
      %v1072 = vpop.f32.mrb[0].mxu0
      %v1073 = vadd.f32 %v368, %v1072
      %v1074 = vpop.f32.mrb[0].mxu0
      %1075 = vmatprep.mubr.f32.mxu0 0.0
      %1076 = vmatmul.mubr.f32.gmra.mrb[0].mxu0 %v854
      %v1077 = vpop.f32.mrb[0].mxu0
      %v1078 = vadd.f32 %v368, %v1077
      %v1079 = vpop.f32.mrb[0].mxu0
      %1080 = vdwg.mxu0
      %v1081 = vmax.f32 %v923, 0.0
      %v1082 = vmax.f32 %v928, 0.0
      %v1083 = vmax.f32 %v933, 0.0
      %v1084 = vmax.f32 %v938, 0.0
      %v1085 = vmax.f32 %v943, 0.0
      %v1086 = vmax.f32 %v948, 0.0
      %v1087 = vmax.f32 %v953, 0.0
      %v1088 = vmax.f32 %v958, 0.0
      %v1089 = vmax.f32 %v963, 0.0
      %v1090 = vmax.f32 %v968, 0.0
      %v1091 = vmax.f32 %v973, 0.0
      %v1092 = vmax.f32 %v978, 0.0
      %v1093 = vmax.f32 %v983, 0.0
      %v1094 = vmax.f32 %v988, 0.0
      %v1095 = vmax.f32 %v993, 0.0
      %v1096 = vmax.f32 %v998, 0.0
      %v1097 = vmax.f32 %v1003, 0.0
      %v1098 = vmax.f32 %v1008, 0.0
      %v1099 = vmax.f32 %v1013, 0.0
      %v1100 = vmax.f32 %v1018, 0.0
      %v1101 = vmax.f32 %v1023, 0.0
      %v1102 = vmax.f32 %v1028, 0.0
      %v1103 = vmax.f32 %v1033, 0.0
      %v1104 = vmax.f32 %v1038, 0.0
      %v1105 = vmax.f32 %v1043, 0.0
      %v1106 = vmax.f32 %v1048, 0.0
      %v1107 = vmax.f32 %v1053, 0.0
      %v1108 = vmax.f32 %v1058, 0.0
      %v1109 = vmax.f32 %v1063, 0.0
      %v1110 = vmax.f32 %v1068, 0.0
      %v1111 = vmax.f32 %v1073, 0.0
      %v1112 = vmax.f32 %v1078, 0.0
      %v1113 = vmax.f32 %v696, %v1081
      %v1114 = vmax.f32 %v697, %v1082
      %v1115 = vmax.f32 %v698, %v1083
      %v1116 = vmax.f32 %v699, %v1084
      %v1117 = vmax.f32 %v700, %v1085
      %v1118 = vmax.f32 %v701, %v1086
      %v1119 = vmax.f32 %v702, %v1087
      %v1120 = vmax.f32 %v703, %v1088
      %v1121 = vmax.f32 %v704, %v1089
      %v1122 = vmax.f32 %v705, %v1090
      %v1123 = vmax.f32 %v706, %v1091
      %v1124 = vmax.f32 %v707, %v1092
      %v1125 = vmax.f32 %v708, %v1093
      %v1126 = vmax.f32 %v709, %v1094
      %v1127 = vmax.f32 %v710, %v1095
      %v1128 = vmax.f32 %v711, %v1096
      %v1129 = vmax.f32 %v712, %v1097
      %v1130 = vmax.f32 %v713, %v1098
      %v1131 = vmax.f32 %v714, %v1099
      %v1132 = vmax.f32 %v715, %v1100
      %v1133 = vmax.f32 %v716, %v1101
      %v1134 = vmax.f32 %v717, %v1102
      %v1135 = vmax.f32 %v718, %v1103
      %v1136 = vmax.f32 %v719, %v1104
      %v1137 = vmax.f32 %v720, %v1105
      %v1138 = vmax.f32 %v721, %v1106
      %v1139 = vmax.f32 %v722, %v1107
      %v1140 = vmax.f32 %v723, %v1108
      %v1141 = vmax.f32 %v724, %v1109
      %v1142 = vmax.f32 %v725, %v1110
      %v1143 = vmax.f32 %v726, %v1111
      %v1144 = vmax.f32 %v727, %v1112
      %v1145 = vld [vmem:[%s307] sm:$0xff]
      %v1146 = vld [vmem:[%s307 + $0x8] sm:$0xff]
      %v1147 = vld [vmem:[%s307 + $0x10] sm:$0xff]
      %v1148 = vld [vmem:[%s307 + $0x18] sm:$0xff]
      %v1149 = vld [vmem:[%s307 + $0x20] sm:$0xff]
      %v1150 = vld [vmem:[%s307 + $0x28] sm:$0xff]
      %v1151 = vld [vmem:[%s307 + $0x30] sm:$0xff]
      %v1152 = vld [vmem:[%s307 + $0x38] sm:$0xff]
      %v1153 = vld [vmem:[%s307 + $0x40] sm:$0xff]
      %v1154 = vld [vmem:[%s307 + $0x48] sm:$0xff]
      %v1155 = vld [vmem:[%s307 + $0x50] sm:$0xff]
      %v1156 = vld [vmem:[%s307 + $0x58] sm:$0xff]
      %v1157 = vld [vmem:[%s307 + $0x60] sm:$0xff]
      %v1158 = vld [vmem:[%s307 + $0x68] sm:$0xff]
      %v1159 = vld [vmem:[%s307 + $0x70] sm:$0xff]
      %v1160 = vld [vmem:[%s307 + $0x78] sm:$0xff]
      %v1161 = vld [vmem:[%s307 + $0x80] sm:$0xff]
      %v1162 = vld [vmem:[%s307 + $0x88] sm:$0xff]
      %v1163 = vld [vmem:[%s307 + $0x90] sm:$0xff]
      %v1164 = vld [vmem:[%s307 + $0x98] sm:$0xff]
      %v1165 = vld [vmem:[%s307 + $0xa0] sm:$0xff]
      %v1166 = vld [vmem:[%s307 + $0xa8] sm:$0xff]
      %v1167 = vld [vmem:[%s307 + $0xb0] sm:$0xff]
      %v1168 = vld [vmem:[%s307 + $0xb8] sm:$0xff]
      %v1169 = vld [vmem:[%s307 + $0xc0] sm:$0xff]
      %v1170 = vld [vmem:[%s307 + $0xc8] sm:$0xff]
      %v1171 = vld [vmem:[%s307 + $0xd0] sm:$0xff]
      %v1172 = vld [vmem:[%s307 + $0xd8] sm:$0xff]
      %v1173 = vld [vmem:[%s307 + $0xe0] sm:$0xff]
      %v1174 = vld [vmem:[%s307 + $0xe8] sm:$0xff]
      %v1175 = vld [vmem:[%s307 + $0xf0] sm:$0xff]
      %v1176 = vld [vmem:[%s307 + $0xf8] sm:$0xff]
      %v1178 = vsel %vm370, %v1145, 0
      %v1181 = vsel %vm370, %v1146, 0
      %v1184 = vsel %vm370, %v1147, 0
      %v1187 = vsel %vm370, %v1148, 0
      %v1190 = vsel %vm370, %v1149, 0
      %v1193 = vsel %vm370, %v1150, 0
      %v1196 = vsel %vm370, %v1151, 0
      %v1199 = vsel %vm370, %v1152, 0
      %v1202 = vsel %vm370, %v1153, 0
      %v1205 = vsel %vm370, %v1154, 0
      %v1208 = vsel %vm370, %v1155, 0
      %v1211 = vsel %vm370, %v1156, 0
      %v1214 = vsel %vm370, %v1157, 0
      %v1217 = vsel %vm370, %v1158, 0
      %v1220 = vsel %vm370, %v1159, 0
      %v1223 = vsel %vm370, %v1160, 0
      %v1226 = vsel %vm370, %v1161, 0
      %v1229 = vsel %vm370, %v1162, 0
      %v1232 = vsel %vm370, %v1163, 0
      %v1235 = vsel %vm370, %v1164, 0
      %v1238 = vsel %vm370, %v1165, 0
      %v1241 = vsel %vm370, %v1166, 0
      %v1244 = vsel %vm370, %v1167, 0
      %v1247 = vsel %vm370, %v1168, 0
      %v1250 = vsel %vm370, %v1169, 0
      %v1253 = vsel %vm370, %v1170, 0
      %v1256 = vsel %vm370, %v1171, 0
      %v1259 = vsel %vm370, %v1172, 0
      %v1262 = vsel %vm370, %v1173, 0
      %v1265 = vsel %vm370, %v1174, 0
      %v1268 = vsel %vm370, %v1175, 0
      %v1271 = vsel %vm370, %v1176, 0
      %1273 = vmatprep.subr.mxu0 0.0
      %1274 = vmatpush1.msra.mxu0 %v321
      %1275 = vmatprep.subr.mxu0 0.0
      %1276 = vmatpush1.msra.mxu0 %v322
      %1277 = vmatprep.subr.mxu0 0.0
      %1278 = vmatpush1.msra.mxu0 %v323
      %1279 = vmatprep.subr.mxu0 0.0
      %1280 = vmatpush1.msra.mxu0 %v324
      %1281 = vmatprep.subr.mxu0 0.0
      %1282 = vmatpush1.msra.mxu0 %v325
      %1283 = vmatprep.subr.mxu0 0.0
      %1284 = vmatpush1.msra.mxu0 %v326
      %1285 = vmatprep.subr.mxu0 0.0
      %1286 = vmatpush1.msra.mxu0 %v327
      %1287 = vmatprep.subr.mxu0 0.0
      %1288 = vmatpush1.msra.mxu0 %v328
      %1289 = vmatprep.subr.mxu0 0.0
      %1290 = vmatpush1.msra.mxu0 %v329
      %1291 = vmatprep.subr.mxu0 0.0
      %1292 = vmatpush1.msra.mxu0 %v469
      %1293 = vmatprep.subr.mxu0 0.0
      %1294 = vmatpush1.msra.mxu0 0.0
      %1295 = vmatprep.subr.mxu0 0.0
      %1296 = vmatpush1.msra.mxu0 0.0
      %1297 = vmatprep.subr.mxu0 0.0
      %1298 = vmatpush1.msra.mxu0 0.0
      %1299 = vmatprep.subr.mxu0 0.0
      %1300 = vmatpush1.msra.mxu0 0.0
      %1301 = vmatprep.subr.mxu0 0.0
      %1302 = vmatpush1.msra.mxu0 0.0
      %1303 = vmatprep.subr.mxu0 0.0
      %1304 = vmatpush1.msra.mxu0 0.0
      %1305 = vmatprep.subr.mxu0 0.0
      %1306 = vmatpush1.msra.mxu0 0.0
      %1307 = vmatprep.subr.mxu0 0.0
      %1308 = vmatpush1.msra.mxu0 0.0
      %1309 = vmatprep.subr.mxu0 0.0
      %1310 = vmatpush1.msra.mxu0 0.0
      %1311 = vmatprep.subr.mxu0 0.0
      %1312 = vmatpush1.msra.mxu0 0.0
      %1313 = vmatprep.subr.mxu0 0.0
      %1314 = vmatpush1.msra.mxu0 0.0
      %1315 = vmatprep.subr.mxu0 0.0
      %1316 = vmatpush1.msra.mxu0 0.0
      %1317 = vmatprep.subr.mxu0 0.0
      %1318 = vmatpush1.msra.mxu0 0.0
      %1319 = vmatprep.subr.mxu0 0.0
      %1320 = vmatpush1.msra.mxu0 0.0
      %1321 = vmatprep.subr.mxu0 0.0
      %1322 = vmatpush1.msra.mxu0 0.0
      %1323 = vmatprep.subr.mxu0 0.0
      %1324 = vmatpush1.msra.mxu0 0.0
      %1325 = vmatprep.subr.mxu0 0.0
      %1326 = vmatpush1.msra.mxu0 0.0
      %1327 = vmatprep.subr.mxu0 0.0
      %1328 = vmatpush1.msra.mxu0 0.0
      %1329 = vmatprep.subr.mxu0 0.0
      %1330 = vmatpush1.msra.mxu0 0.0
      %1331 = vmatprep.subr.mxu0 0.0
      %1332 = vmatpush1.msra.mxu0 0.0
      %1333 = vmatprep.subr.mxu0 0.0
      %1334 = vmatpush1.msra.mxu0 0.0
      %1335 = vmatprep.subr.mxu0 0.0
      %1336 = vmatpush1.msra.mxu0 0.0
      %1337 = vmatprep.mubr.f32.mxu0 0.0
      %1338 = vmatmul.mubr.f32.gmra.mrb[0].mxu0 %v1178
      %v1339 = vpop.f32.mrb[0].mxu0
      %v1340 = vadd.f32 %v368, %v1339
      %v1341 = vpop.f32.mrb[0].mxu0
      %1342 = vmatprep.mubr.f32.mxu0 0.0
      %1343 = vmatmul.mubr.f32.gmra.mrb[0].mxu0 %v1181
      %v1344 = vpop.f32.mrb[0].mxu0
      %v1345 = vadd.f32 %v368, %v1344
      %v1346 = vpop.f32.mrb[0].mxu0
      %1347 = vmatprep.mubr.f32.mxu0 0.0
      %1348 = vmatmul.mubr.f32.gmra.mrb[0].mxu0 %v1184
      %v1349 = vpop.f32.mrb[0].mxu0
      %v1350 = vadd.f32 %v368, %v1349
      %v1351 = vpop.f32.mrb[0].mxu0
      %1352 = vmatprep.mubr.f32.mxu0 0.0
      %1353 = vmatmul.mubr.f32.gmra.mrb[0].mxu0 %v1187
      %v1354 = vpop.f32.mrb[0].mxu0
      %v1355 = vadd.f32 %v368, %v1354
      %v1356 = vpop.f32.mrb[0].mxu0
      %1357 = vmatprep.mubr.f32.mxu0 0.0
      %1358 = vmatmul.mubr.f32.gmra.mrb[0].mxu0 %v1190
      %v1359 = vpop.f32.mrb[0].mxu0
      %v1360 = vadd.f32 %v368, %v1359
      %v1361 = vpop.f32.mrb[0].mxu0
      %1362 = vmatprep.mubr.f32.mxu0 0.0
      %1363 = vmatmul.mubr.f32.gmra.mrb[0].mxu0 %v1193
      %v1364 = vpop.f32.mrb[0].mxu0
      %v1365 = vadd.f32 %v368, %v1364
      %v1366 = vpop.f32.mrb[0].mxu0
      %1367 = vmatprep.mubr.f32.mxu0 0.0
      %1368 = vmatmul.mubr.f32.gmra.mrb[0].mxu0 %v1196
      %v1369 = vpop.f32.mrb[0].mxu0
      %v1370 = vadd.f32 %v368, %v1369
      %v1371 = vpop.f32.mrb[0].mxu0
      %1372 = vmatprep.mubr.f32.mxu0 0.0
      %1373 = vmatmul.mubr.f32.gmra.mrb[0].mxu0 %v1199
      %v1374 = vpop.f32.mrb[0].mxu0
      %v1375 = vadd.f32 %v368, %v1374
      %v1376 = vpop.f32.mrb[0].mxu0
      %1377 = vmatprep.mubr.f32.mxu0 0.0
      %1378 = vmatmul.mubr.f32.gmra.mrb[0].mxu0 %v1202
      %v1379 = vpop.f32.mrb[0].mxu0
      %v1380 = vadd.f32 %v368, %v1379
      %v1381 = vpop.f32.mrb[0].mxu0
      %1382 = vmatprep.mubr.f32.mxu0 0.0
      %1383 = vmatmul.mubr.f32.gmra.mrb[0].mxu0 %v1205
      %v1384 = vpop.f32.mrb[0].mxu0
      %v1385 = vadd.f32 %v368, %v1384
      %v1386 = vpop.f32.mrb[0].mxu0
      %1387 = vmatprep.mubr.f32.mxu0 0.0
      %1388 = vmatmul.mubr.f32.gmra.mrb[0].mxu0 %v1208
      %v1389 = vpop.f32.mrb[0].mxu0
      %v1390 = vadd.f32 %v368, %v1389
      %v1391 = vpop.f32.mrb[0].mxu0
      %1392 = vmatprep.mubr.f32.mxu0 0.0
      %1393 = vmatmul.mubr.f32.gmra.mrb[0].mxu0 %v1211
      %v1394 = vpop.f32.mrb[0].mxu0
      %v1395 = vadd.f32 %v368, %v1394
      %v1396 = vpop.f32.mrb[0].mxu0
      %1397 = vmatprep.mubr.f32.mxu0 0.0
      %1398 = vmatmul.mubr.f32.gmra.mrb[0].mxu0 %v1214
      %v1399 = vpop.f32.mrb[0].mxu0
      %v1400 = vadd.f32 %v368, %v1399
      %v1401 = vpop.f32.mrb[0].mxu0
      %1402 = vmatprep.mubr.f32.mxu0 0.0
      %1403 = vmatmul.mubr.f32.gmra.mrb[0].mxu0 %v1217
      %v1404 = vpop.f32.mrb[0].mxu0
      %v1405 = vadd.f32 %v368, %v1404
      %v1406 = vpop.f32.mrb[0].mxu0
      %1407 = vmatprep.mubr.f32.mxu0 0.0
      %1408 = vmatmul.mubr.f32.gmra.mrb[0].mxu0 %v1220
      %v1409 = vpop.f32.mrb[0].mxu0
      %v1410 = vadd.f32 %v368, %v1409
      %v1411 = vpop.f32.mrb[0].mxu0
      %1412 = vmatprep.mubr.f32.mxu0 0.0
      %1413 = vmatmul.mubr.f32.gmra.mrb[0].mxu0 %v1223
      %v1414 = vpop.f32.mrb[0].mxu0
      %v1415 = vadd.f32 %v368, %v1414
      %v1416 = vpop.f32.mrb[0].mxu0
      %1417 = vmatprep.mubr.f32.mxu0 0.0
      %1418 = vmatmul.mubr.f32.gmra.mrb[0].mxu0 %v1226
      %v1419 = vpop.f32.mrb[0].mxu0
      %v1420 = vadd.f32 %v368, %v1419
      %v1421 = vpop.f32.mrb[0].mxu0
      %1422 = vmatprep.mubr.f32.mxu0 0.0
      %1423 = vmatmul.mubr.f32.gmra.mrb[0].mxu0 %v1229
      %v1424 = vpop.f32.mrb[0].mxu0
      %v1425 = vadd.f32 %v368, %v1424
      %v1426 = vpop.f32.mrb[0].mxu0
      %1427 = vmatprep.mubr.f32.mxu0 0.0
      %1428 = vmatmul.mubr.f32.gmra.mrb[0].mxu0 %v1232
      %v1429 = vpop.f32.mrb[0].mxu0
      %v1430 = vadd.f32 %v368, %v1429
      %v1431 = vpop.f32.mrb[0].mxu0
      %1432 = vmatprep.mubr.f32.mxu0 0.0
      %1433 = vmatmul.mubr.f32.gmra.mrb[0].mxu0 %v1235
      %v1434 = vpop.f32.mrb[0].mxu0
      %v1435 = vadd.f32 %v368, %v1434
      %v1436 = vpop.f32.mrb[0].mxu0
      %1437 = vmatprep.mubr.f32.mxu0 0.0
      %1438 = vmatmul.mubr.f32.gmra.mrb[0].mxu0 %v1238
      %v1439 = vpop.f32.mrb[0].mxu0
      %v1440 = vadd.f32 %v368, %v1439
      %v1441 = vpop.f32.mrb[0].mxu0
      %1442 = vmatprep.mubr.f32.mxu0 0.0
      %1443 = vmatmul.mubr.f32.gmra.mrb[0].mxu0 %v1241
      %v1444 = vpop.f32.mrb[0].mxu0
      %v1445 = vadd.f32 %v368, %v1444
      %v1446 = vpop.f32.mrb[0].mxu0
      %1447 = vmatprep.mubr.f32.mxu0 0.0
      %1448 = vmatmul.mubr.f32.gmra.mrb[0].mxu0 %v1244
      %v1449 = vpop.f32.mrb[0].mxu0
      %v1450 = vadd.f32 %v368, %v1449
      %v1451 = vpop.f32.mrb[0].mxu0
      %1452 = vmatprep.mubr.f32.mxu0 0.0
      %1453 = vmatmul.mubr.f32.gmra.mrb[0].mxu0 %v1247
      %v1454 = vpop.f32.mrb[0].mxu0
      %v1455 = vadd.f32 %v368, %v1454
      %v1456 = vpop.f32.mrb[0].mxu0
      %1457 = vmatprep.mubr.f32.mxu0 0.0
      %1458 = vmatmul.mubr.f32.gmra.mrb[0].mxu0 %v1250
      %v1459 = vpop.f32.mrb[0].mxu0
      %v1460 = vadd.f32 %v368, %v1459
      %v1461 = vpop.f32.mrb[0].mxu0
      %1462 = vmatprep.mubr.f32.mxu0 0.0
      %1463 = vmatmul.mubr.f32.gmra.mrb[0].mxu0 %v1253
      %v1464 = vpop.f32.mrb[0].mxu0
      %v1465 = vadd.f32 %v368, %v1464
      %v1466 = vpop.f32.mrb[0].mxu0
      %1467 = vmatprep.mubr.f32.mxu0 0.0
      %1468 = vmatmul.mubr.f32.gmra.mrb[0].mxu0 %v1256
      %v1469 = vpop.f32.mrb[0].mxu0
      %v1470 = vadd.f32 %v368, %v1469
      %v1471 = vpop.f32.mrb[0].mxu0
      %1472 = vmatprep.mubr.f32.mxu0 0.0
      %1473 = vmatmul.mubr.f32.gmra.mrb[0].mxu0 %v1259
      %v1474 = vpop.f32.mrb[0].mxu0
      %v1475 = vadd.f32 %v368, %v1474
      %v1476 = vpop.f32.mrb[0].mxu0
      %1477 = vmatprep.mubr.f32.mxu0 0.0
      %1478 = vmatmul.mubr.f32.gmra.mrb[0].mxu0 %v1262
      %v1479 = vpop.f32.mrb[0].mxu0
      %v1480 = vadd.f32 %v368, %v1479
      %v1481 = vpop.f32.mrb[0].mxu0
      %1482 = vmatprep.mubr.f32.mxu0 0.0
      %1483 = vmatmul.mubr.f32.gmra.mrb[0].mxu0 %v1265
      %v1484 = vpop.f32.mrb[0].mxu0
      %v1485 = vadd.f32 %v368, %v1484
      %v1486 = vpop.f32.mrb[0].mxu0
      %1487 = vmatprep.mubr.f32.mxu0 0.0
      %1488 = vmatmul.mubr.f32.gmra.mrb[0].mxu0 %v1268
      %v1489 = vpop.f32.mrb[0].mxu0
      %v1490 = vadd.f32 %v368, %v1489
      %v1491 = vpop.f32.mrb[0].mxu0
      %1492 = vmatprep.mubr.f32.mxu0 0.0
      %1493 = vmatmul.mubr.f32.gmra.mrb[0].mxu0 %v1271
      %v1494 = vpop.f32.mrb[0].mxu0
      %v1495 = vadd.f32 %v368, %v1494
      %v1496 = vpop.f32.mrb[0].mxu0
      %1497 = vdwg.mxu0
      %v1498 = vmax.f32 %v1340, 0.0
      %v1499 = vmax.f32 %v1345, 0.0
      %v1500 = vmax.f32 %v1350, 0.0
      %v1501 = vmax.f32 %v1355, 0.0
      %v1502 = vmax.f32 %v1360, 0.0
      %v1503 = vmax.f32 %v1365, 0.0
      %v1504 = vmax.f32 %v1370, 0.0
      %v1505 = vmax.f32 %v1375, 0.0
      %v1506 = vmax.f32 %v1380, 0.0
      %v1507 = vmax.f32 %v1385, 0.0
      %v1508 = vmax.f32 %v1390, 0.0
      %v1509 = vmax.f32 %v1395, 0.0
      %v1510 = vmax.f32 %v1400, 0.0
      %v1511 = vmax.f32 %v1405, 0.0
      %v1512 = vmax.f32 %v1410, 0.0
      %v1513 = vmax.f32 %v1415, 0.0
      %v1514 = vmax.f32 %v1420, 0.0
      %v1515 = vmax.f32 %v1425, 0.0
      %v1516 = vmax.f32 %v1430, 0.0
      %v1517 = vmax.f32 %v1435, 0.0
      %v1518 = vmax.f32 %v1440, 0.0
      %v1519 = vmax.f32 %v1445, 0.0
      %v1520 = vmax.f32 %v1450, 0.0
      %v1521 = vmax.f32 %v1455, 0.0
      %v1522 = vmax.f32 %v1460, 0.0
      %v1523 = vmax.f32 %v1465, 0.0
      %v1524 = vmax.f32 %v1470, 0.0
      %v1525 = vmax.f32 %v1475, 0.0
      %v1526 = vmax.f32 %v1480, 0.0
      %v1527 = vmax.f32 %v1485, 0.0
      %v1528 = vmax.f32 %v1490, 0.0
      %v1529 = vmax.f32 %v1495, 0.0
      %v1530 = vld [vmem:[%s313] sm:$0xff]
      %v1531 = vld [vmem:[%s313 + $0x8] sm:$0xff]
      %v1532 = vld [vmem:[%s313 + $0x10] sm:$0xff]
      %v1533 = vld [vmem:[%s313 + $0x18] sm:$0xff]
      %v1534 = vld [vmem:[%s313 + $0x20] sm:$0xff]
      %v1535 = vld [vmem:[%s313 + $0x28] sm:$0xff]
      %v1536 = vld [vmem:[%s313 + $0x30] sm:$0xff]
      %v1537 = vld [vmem:[%s313 + $0x38] sm:$0xff]
      %v1538 = vld [vmem:[%s313 + $0x40] sm:$0xff]
      %v1539 = vld [vmem:[%s313 + $0x48] sm:$0xff]
      %v1540 = vld [vmem:[%s313 + $0x50] sm:$0xff]
      %v1541 = vld [vmem:[%s313 + $0x58] sm:$0xff]
      %v1542 = vld [vmem:[%s313 + $0x60] sm:$0xff]
      %v1543 = vld [vmem:[%s313 + $0x68] sm:$0xff]
      %v1544 = vld [vmem:[%s313 + $0x70] sm:$0xff]
      %v1545 = vld [vmem:[%s313 + $0x78] sm:$0xff]
      %v1546 = vld [vmem:[%s313 + $0x80] sm:$0xff]
      %v1547 = vld [vmem:[%s313 + $0x88] sm:$0xff]
      %v1548 = vld [vmem:[%s313 + $0x90] sm:$0xff]
      %v1549 = vld [vmem:[%s313 + $0x98] sm:$0xff]
      %v1550 = vld [vmem:[%s313 + $0xa0] sm:$0xff]
      %v1551 = vld [vmem:[%s313 + $0xa8] sm:$0xff]
      %v1552 = vld [vmem:[%s313 + $0xb0] sm:$0xff]
      %v1553 = vld [vmem:[%s313 + $0xb8] sm:$0xff]
      %v1554 = vld [vmem:[%s313 + $0xc0] sm:$0xff]
      %v1555 = vld [vmem:[%s313 + $0xc8] sm:$0xff]
      %v1556 = vld [vmem:[%s313 + $0xd0] sm:$0xff]
      %v1557 = vld [vmem:[%s313 + $0xd8] sm:$0xff]
      %v1558 = vld [vmem:[%s313 + $0xe0] sm:$0xff]
      %v1559 = vld [vmem:[%s313 + $0xe8] sm:$0xff]
      %v1560 = vld [vmem:[%s313 + $0xf0] sm:$0xff]
      %v1561 = vld [vmem:[%s313 + $0xf8] sm:$0xff]
      %v1563 = vsel %vm370, %v1530, 0
      %v1566 = vsel %vm370, %v1531, 0
      %v1569 = vsel %vm370, %v1532, 0
      %v1572 = vsel %vm370, %v1533, 0
      %v1575 = vsel %vm370, %v1534, 0
      %v1578 = vsel %vm370, %v1535, 0
      %v1581 = vsel %vm370, %v1536, 0
      %v1584 = vsel %vm370, %v1537, 0
      %v1587 = vsel %vm370, %v1538, 0
      %v1590 = vsel %vm370, %v1539, 0
      %v1593 = vsel %vm370, %v1540, 0
      %v1596 = vsel %vm370, %v1541, 0
      %v1599 = vsel %vm370, %v1542, 0
      %v1602 = vsel %vm370, %v1543, 0
      %v1605 = vsel %vm370, %v1544, 0
      %v1608 = vsel %vm370, %v1545, 0
      %v1611 = vsel %vm370, %v1546, 0
      %v1614 = vsel %vm370, %v1547, 0
      %v1617 = vsel %vm370, %v1548, 0
      %v1620 = vsel %vm370, %v1549, 0
      %v1623 = vsel %vm370, %v1550, 0
      %v1626 = vsel %vm370, %v1551, 0
      %v1629 = vsel %vm370, %v1552, 0
      %v1632 = vsel %vm370, %v1553, 0
      %v1635 = vsel %vm370, %v1554, 0
      %v1638 = vsel %vm370, %v1555, 0
      %v1641 = vsel %vm370, %v1556, 0
      %v1644 = vsel %vm370, %v1557, 0
      %v1647 = vsel %vm370, %v1558, 0
      %v1650 = vsel %vm370, %v1559, 0
      %v1653 = vsel %vm370, %v1560, 0
      %v1656 = vsel %vm370, %v1561, 0
      %1658 = vmatprep.subr.mxu0 0.0
      %1659 = vmatpush1.msra.mxu0 %v321
      %1660 = vmatprep.subr.mxu0 0.0
      %1661 = vmatpush1.msra.mxu0 %v322
      %1662 = vmatprep.subr.mxu0 0.0
      %1663 = vmatpush1.msra.mxu0 %v323
      %1664 = vmatprep.subr.mxu0 0.0
      %1665 = vmatpush1.msra.mxu0 %v324
      %1666 = vmatprep.subr.mxu0 0.0
      %1667 = vmatpush1.msra.mxu0 %v325
      %1668 = vmatprep.subr.mxu0 0.0
      %1669 = vmatpush1.msra.mxu0 %v326
      %1670 = vmatprep.subr.mxu0 0.0
      %1671 = vmatpush1.msra.mxu0 %v327
      %1672 = vmatprep.subr.mxu0 0.0
      %1673 = vmatpush1.msra.mxu0 %v328
      %1674 = vmatprep.subr.mxu0 0.0
      %1675 = vmatpush1.msra.mxu0 %v329
      %1676 = vmatprep.subr.mxu0 0.0
      %1677 = vmatpush1.msra.mxu0 %v469
      %1678 = vmatprep.subr.mxu0 0.0
      %1679 = vmatpush1.msra.mxu0 0.0
      %1680 = vmatprep.subr.mxu0 0.0
      %1681 = vmatpush1.msra.mxu0 0.0
      %1682 = vmatprep.subr.mxu0 0.0
      %1683 = vmatpush1.msra.mxu0 0.0
      %1684 = vmatprep.subr.mxu0 0.0
      %1685 = vmatpush1.msra.mxu0 0.0
      %1686 = vmatprep.subr.mxu0 0.0
      %1687 = vmatpush1.msra.mxu0 0.0
      %1688 = vmatprep.subr.mxu0 0.0
      %1689 = vmatpush1.msra.mxu0 0.0
      %1690 = vmatprep.subr.mxu0 0.0
      %1691 = vmatpush1.msra.mxu0 0.0
      %1692 = vmatprep.subr.mxu0 0.0
      %1693 = vmatpush1.msra.mxu0 0.0
      %1694 = vmatprep.subr.mxu0 0.0
      %1695 = vmatpush1.msra.mxu0 0.0
      %1696 = vmatprep.subr.mxu0 0.0
      %1697 = vmatpush1.msra.mxu0 0.0
      %1698 = vmatprep.subr.mxu0 0.0
      %1699 = vmatpush1.msra.mxu0 0.0
      %1700 = vmatprep.subr.mxu0 0.0
      %1701 = vmatpush1.msra.mxu0 0.0
      %1702 = vmatprep.subr.mxu0 0.0
      %1703 = vmatpush1.msra.mxu0 0.0
      %1704 = vmatprep.subr.mxu0 0.0
      %1705 = vmatpush1.msra.mxu0 0.0
      %1706 = vmatprep.subr.mxu0 0.0
      %1707 = vmatpush1.msra.mxu0 0.0
      %1708 = vmatprep.subr.mxu0 0.0
      %1709 = vmatpush1.msra.mxu0 0.0
      %1710 = vmatprep.subr.mxu0 0.0
      %1711 = vmatpush1.msra.mxu0 0.0
      %1712 = vmatprep.subr.mxu0 0.0
      %1713 = vmatpush1.msra.mxu0 0.0
      %1714 = vmatprep.subr.mxu0 0.0
      %1715 = vmatpush1.msra.mxu0 0.0
      %1716 = vmatprep.subr.mxu0 0.0
      %1717 = vmatpush1.msra.mxu0 0.0
      %1718 = vmatprep.subr.mxu0 0.0
      %1719 = vmatpush1.msra.mxu0 0.0
      %1720 = vmatprep.subr.mxu0 0.0
      %1721 = vmatpush1.msra.mxu0 0.0
      %1722 = vmatprep.mubr.f32.mxu0 0.0
      %1723 = vmatmul.mubr.f32.gmra.mrb[0].mxu0 %v1563
      %v1724 = vpop.f32.mrb[0].mxu0
      %v1725 = vadd.f32 %v368, %v1724
      %v1726 = vpop.f32.mrb[0].mxu0
      %1727 = vmatprep.mubr.f32.mxu0 0.0
      %1728 = vmatmul.mubr.f32.gmra.mrb[0].mxu0 %v1566
      %v1729 = vpop.f32.mrb[0].mxu0
      %v1730 = vadd.f32 %v368, %v1729
      %v1731 = vpop.f32.mrb[0].mxu0
      %1732 = vmatprep.mubr.f32.mxu0 0.0
      %1733 = vmatmul.mubr.f32.gmra.mrb[0].mxu0 %v1569
      %v1734 = vpop.f32.mrb[0].mxu0
      %v1735 = vadd.f32 %v368, %v1734
      %v1736 = vpop.f32.mrb[0].mxu0
      %1737 = vmatprep.mubr.f32.mxu0 0.0
      %1738 = vmatmul.mubr.f32.gmra.mrb[0].mxu0 %v1572
      %v1739 = vpop.f32.mrb[0].mxu0
      %v1740 = vadd.f32 %v368, %v1739
      %v1741 = vpop.f32.mrb[0].mxu0
      %1742 = vmatprep.mubr.f32.mxu0 0.0
      %1743 = vmatmul.mubr.f32.gmra.mrb[0].mxu0 %v1575
      %v1744 = vpop.f32.mrb[0].mxu0
      %v1745 = vadd.f32 %v368, %v1744
      %v1746 = vpop.f32.mrb[0].mxu0
      %1747 = vmatprep.mubr.f32.mxu0 0.0
      %1748 = vmatmul.mubr.f32.gmra.mrb[0].mxu0 %v1578
      %v1749 = vpop.f32.mrb[0].mxu0
      %v1750 = vadd.f32 %v368, %v1749
      %v1751 = vpop.f32.mrb[0].mxu0
      %1752 = vmatprep.mubr.f32.mxu0 0.0
      %1753 = vmatmul.mubr.f32.gmra.mrb[0].mxu0 %v1581
      %v1754 = vpop.f32.mrb[0].mxu0
      %v1755 = vadd.f32 %v368, %v1754
      %v1756 = vpop.f32.mrb[0].mxu0
      %1757 = vmatprep.mubr.f32.mxu0 0.0
      %1758 = vmatmul.mubr.f32.gmra.mrb[0].mxu0 %v1584
      %v1759 = vpop.f32.mrb[0].mxu0
      %v1760 = vadd.f32 %v368, %v1759
      %v1761 = vpop.f32.mrb[0].mxu0
      %1762 = vmatprep.mubr.f32.mxu0 0.0
      %1763 = vmatmul.mubr.f32.gmra.mrb[0].mxu0 %v1587
      %v1764 = vpop.f32.mrb[0].mxu0
      %v1765 = vadd.f32 %v368, %v1764
      %v1766 = vpop.f32.mrb[0].mxu0
      %1767 = vmatprep.mubr.f32.mxu0 0.0
      %1768 = vmatmul.mubr.f32.gmra.mrb[0].mxu0 %v1590
      %v1769 = vpop.f32.mrb[0].mxu0
      %v1770 = vadd.f32 %v368, %v1769
      %v1771 = vpop.f32.mrb[0].mxu0
      %1772 = vmatprep.mubr.f32.mxu0 0.0
      %1773 = vmatmul.mubr.f32.gmra.mrb[0].mxu0 %v1593
      %v1774 = vpop.f32.mrb[0].mxu0
      %v1775 = vadd.f32 %v368, %v1774
      %v1776 = vpop.f32.mrb[0].mxu0
      %1777 = vmatprep.mubr.f32.mxu0 0.0
      %1778 = vmatmul.mubr.f32.gmra.mrb[0].mxu0 %v1596
      %v1779 = vpop.f32.mrb[0].mxu0
      %v1780 = vadd.f32 %v368, %v1779
      %v1781 = vpop.f32.mrb[0].mxu0
      %1782 = vmatprep.mubr.f32.mxu0 0.0
      %1783 = vmatmul.mubr.f32.gmra.mrb[0].mxu0 %v1599
      %v1784 = vpop.f32.mrb[0].mxu0
      %v1785 = vadd.f32 %v368, %v1784
      %v1786 = vpop.f32.mrb[0].mxu0
      %1787 = vmatprep.mubr.f32.mxu0 0.0
      %1788 = vmatmul.mubr.f32.gmra.mrb[0].mxu0 %v1602
      %v1789 = vpop.f32.mrb[0].mxu0
      %v1790 = vadd.f32 %v368, %v1789
      %v1791 = vpop.f32.mrb[0].mxu0
      %1792 = vmatprep.mubr.f32.mxu0 0.0
      %1793 = vmatmul.mubr.f32.gmra.mrb[0].mxu0 %v1605
      %v1794 = vpop.f32.mrb[0].mxu0
      %v1795 = vadd.f32 %v368, %v1794
      %v1796 = vpop.f32.mrb[0].mxu0
      %1797 = vmatprep.mubr.f32.mxu0 0.0
      %1798 = vmatmul.mubr.f32.gmra.mrb[0].mxu0 %v1608
      %v1799 = vpop.f32.mrb[0].mxu0
      %v1800 = vadd.f32 %v368, %v1799
      %v1801 = vpop.f32.mrb[0].mxu0
      %1802 = vmatprep.mubr.f32.mxu0 0.0
      %1803 = vmatmul.mubr.f32.gmra.mrb[0].mxu0 %v1611
      %v1804 = vpop.f32.mrb[0].mxu0
      %v1805 = vadd.f32 %v368, %v1804
      %v1806 = vpop.f32.mrb[0].mxu0
      %1807 = vmatprep.mubr.f32.mxu0 0.0
      %1808 = vmatmul.mubr.f32.gmra.mrb[0].mxu0 %v1614
      %v1809 = vpop.f32.mrb[0].mxu0
      %v1810 = vadd.f32 %v368, %v1809
      %v1811 = vpop.f32.mrb[0].mxu0
      %1812 = vmatprep.mubr.f32.mxu0 0.0
      %1813 = vmatmul.mubr.f32.gmra.mrb[0].mxu0 %v1617
      %v1814 = vpop.f32.mrb[0].mxu0
      %v1815 = vadd.f32 %v368, %v1814
      %v1816 = vpop.f32.mrb[0].mxu0
      %1817 = vmatprep.mubr.f32.mxu0 0.0
      %1818 = vmatmul.mubr.f32.gmra.mrb[0].mxu0 %v1620
      %v1819 = vpop.f32.mrb[0].mxu0
      %v1820 = vadd.f32 %v368, %v1819
      %v1821 = vpop.f32.mrb[0].mxu0
      %1822 = vmatprep.mubr.f32.mxu0 0.0
      %1823 = vmatmul.mubr.f32.gmra.mrb[0].mxu0 %v1623
      %v1824 = vpop.f32.mrb[0].mxu0
      %v1825 = vadd.f32 %v368, %v1824
      %v1826 = vpop.f32.mrb[0].mxu0
      %1827 = vmatprep.mubr.f32.mxu0 0.0
      %1828 = vmatmul.mubr.f32.gmra.mrb[0].mxu0 %v1626
      %v1829 = vpop.f32.mrb[0].mxu0
      %v1830 = vadd.f32 %v368, %v1829
      %v1831 = vpop.f32.mrb[0].mxu0
      %1832 = vmatprep.mubr.f32.mxu0 0.0
      %1833 = vmatmul.mubr.f32.gmra.mrb[0].mxu0 %v1629
      %v1834 = vpop.f32.mrb[0].mxu0
      %v1835 = vadd.f32 %v368, %v1834
      %v1836 = vpop.f32.mrb[0].mxu0
      %1837 = vmatprep.mubr.f32.mxu0 0.0
      %1838 = vmatmul.mubr.f32.gmra.mrb[0].mxu0 %v1632
      %v1839 = vpop.f32.mrb[0].mxu0
      %v1840 = vadd.f32 %v368, %v1839
      %v1841 = vpop.f32.mrb[0].mxu0
      %1842 = vmatprep.mubr.f32.mxu0 0.0
      %1843 = vmatmul.mubr.f32.gmra.mrb[0].mxu0 %v1635
      %v1844 = vpop.f32.mrb[0].mxu0
      %v1845 = vadd.f32 %v368, %v1844
      %v1846 = vpop.f32.mrb[0].mxu0
      %1847 = vmatprep.mubr.f32.mxu0 0.0
      %1848 = vmatmul.mubr.f32.gmra.mrb[0].mxu0 %v1638
      %v1849 = vpop.f32.mrb[0].mxu0
      %v1850 = vadd.f32 %v368, %v1849
      %v1851 = vpop.f32.mrb[0].mxu0
      %1852 = vmatprep.mubr.f32.mxu0 0.0
      %1853 = vmatmul.mubr.f32.gmra.mrb[0].mxu0 %v1641
      %v1854 = vpop.f32.mrb[0].mxu0
      %v1855 = vadd.f32 %v368, %v1854
      %v1856 = vpop.f32.mrb[0].mxu0
      %1857 = vmatprep.mubr.f32.mxu0 0.0
      %1858 = vmatmul.mubr.f32.gmra.mrb[0].mxu0 %v1644
      %v1859 = vpop.f32.mrb[0].mxu0
      %v1860 = vadd.f32 %v368, %v1859
      %v1861 = vpop.f32.mrb[0].mxu0
      %1862 = vmatprep.mubr.f32.mxu0 0.0
      %1863 = vmatmul.mubr.f32.gmra.mrb[0].mxu0 %v1647
      %v1864 = vpop.f32.mrb[0].mxu0
      %v1865 = vadd.f32 %v368, %v1864
      %v1866 = vpop.f32.mrb[0].mxu0
      %1867 = vmatprep.mubr.f32.mxu0 0.0
      %1868 = vmatmul.mubr.f32.gmra.mrb[0].mxu0 %v1650
      %v1869 = vpop.f32.mrb[0].mxu0
      %v1870 = vadd.f32 %v368, %v1869
      %v1871 = vpop.f32.mrb[0].mxu0
      %1872 = vmatprep.mubr.f32.mxu0 0.0
      %1873 = vmatmul.mubr.f32.gmra.mrb[0].mxu0 %v1653
      %v1874 = vpop.f32.mrb[0].mxu0
      %v1875 = vadd.f32 %v368, %v1874
      %v1876 = vpop.f32.mrb[0].mxu0
      %1877 = vmatprep.mubr.f32.mxu0 0.0
      %1878 = vmatmul.mubr.f32.gmra.mrb[0].mxu0 %v1656
      %v1879 = vpop.f32.mrb[0].mxu0
      %v1880 = vadd.f32 %v368, %v1879
      %v1881 = vpop.f32.mrb[0].mxu0
      %1882 = vdwg.mxu0
      %v1883 = vmax.f32 %v1725, 0.0
      %v1884 = vmax.f32 %v1730, 0.0
      %v1885 = vmax.f32 %v1735, 0.0
      %v1886 = vmax.f32 %v1740, 0.0
      %v1887 = vmax.f32 %v1745, 0.0
      %v1888 = vmax.f32 %v1750, 0.0
      %v1889 = vmax.f32 %v1755, 0.0
      %v1890 = vmax.f32 %v1760, 0.0
      %v1891 = vmax.f32 %v1765, 0.0
      %v1892 = vmax.f32 %v1770, 0.0
      %v1893 = vmax.f32 %v1775, 0.0
      %v1894 = vmax.f32 %v1780, 0.0
      %v1895 = vmax.f32 %v1785, 0.0
      %v1896 = vmax.f32 %v1790, 0.0
      %v1897 = vmax.f32 %v1795, 0.0
      %v1898 = vmax.f32 %v1800, 0.0
      %v1899 = vmax.f32 %v1805, 0.0
      %v1900 = vmax.f32 %v1810, 0.0
      %v1901 = vmax.f32 %v1815, 0.0
      %v1902 = vmax.f32 %v1820, 0.0
      %v1903 = vmax.f32 %v1825, 0.0
      %v1904 = vmax.f32 %v1830, 0.0
      %v1905 = vmax.f32 %v1835, 0.0
      %v1906 = vmax.f32 %v1840, 0.0
      %v1907 = vmax.f32 %v1845, 0.0
      %v1908 = vmax.f32 %v1850, 0.0
      %v1909 = vmax.f32 %v1855, 0.0
      %v1910 = vmax.f32 %v1860, 0.0
      %v1911 = vmax.f32 %v1865, 0.0
      %v1912 = vmax.f32 %v1870, 0.0
      %v1913 = vmax.f32 %v1875, 0.0
      %v1914 = vmax.f32 %v1880, 0.0
      %v1915 = vmax.f32 %v1498, %v1883
      %v1916 = vmax.f32 %v1499, %v1884
      %v1917 = vmax.f32 %v1500, %v1885
      %v1918 = vmax.f32 %v1501, %v1886
      %v1919 = vmax.f32 %v1502, %v1887
      %v1920 = vmax.f32 %v1503, %v1888
      %v1921 = vmax.f32 %v1504, %v1889
      %v1922 = vmax.f32 %v1505, %v1890
      %v1923 = vmax.f32 %v1506, %v1891
      %v1924 = vmax.f32 %v1507, %v1892
      %v1925 = vmax.f32 %v1508, %v1893
      %v1926 = vmax.f32 %v1509, %v1894
      %v1927 = vmax.f32 %v1510, %v1895
      %v1928 = vmax.f32 %v1511, %v1896
      %v1929 = vmax.f32 %v1512, %v1897
      %v1930 = vmax.f32 %v1513, %v1898
      %v1931 = vmax.f32 %v1514, %v1899
      %v1932 = vmax.f32 %v1515, %v1900
      %v1933 = vmax.f32 %v1516, %v1901
      %v1934 = vmax.f32 %v1517, %v1902
      %v1935 = vmax.f32 %v1518, %v1903
      %v1936 = vmax.f32 %v1519, %v1904
      %v1937 = vmax.f32 %v1520, %v1905
      %v1938 = vmax.f32 %v1521, %v1906
      %v1939 = vmax.f32 %v1522, %v1907
      %v1940 = vmax.f32 %v1523, %v1908
      %v1941 = vmax.f32 %v1524, %v1909
      %v1942 = vmax.f32 %v1525, %v1910
      %v1943 = vmax.f32 %v1526, %v1911
      %v1944 = vmax.f32 %v1527, %v1912
      %v1945 = vmax.f32 %v1528, %v1913
      %v1946 = vmax.f32 %v1529, %v1914
      %v1947 = vmax.f32 %v1113, %v1915
      %v1948 = vmax.f32 %v1114, %v1916
      %v1949 = vmax.f32 %v1115, %v1917
      %v1950 = vmax.f32 %v1116, %v1918
      %v1951 = vmax.f32 %v1117, %v1919
      %v1952 = vmax.f32 %v1118, %v1920
      %v1953 = vmax.f32 %v1119, %v1921
      %v1954 = vmax.f32 %v1120, %v1922
      %v1955 = vmax.f32 %v1121, %v1923
      %v1956 = vmax.f32 %v1122, %v1924
      %v1957 = vmax.f32 %v1123, %v1925
      %v1958 = vmax.f32 %v1124, %v1926
      %v1959 = vmax.f32 %v1125, %v1927
      %v1960 = vmax.f32 %v1126, %v1928
      %v1961 = vmax.f32 %v1127, %v1929
      %v1962 = vmax.f32 %v1128, %v1930
      %v1963 = vmax.f32 %v1129, %v1931
      %v1964 = vmax.f32 %v1130, %v1932
      %v1965 = vmax.f32 %v1131, %v1933
      %v1966 = vmax.f32 %v1132, %v1934
      %v1967 = vmax.f32 %v1133, %v1935
      %v1968 = vmax.f32 %v1134, %v1936
      %v1969 = vmax.f32 %v1135, %v1937
      %v1970 = vmax.f32 %v1136, %v1938
      %v1971 = vmax.f32 %v1137, %v1939
      %v1972 = vmax.f32 %v1138, %v1940
      %v1973 = vmax.f32 %v1139, %v1941
      %v1974 = vmax.f32 %v1140, %v1942
      %v1975 = vmax.f32 %v1141, %v1943
      %v1976 = vmax.f32 %v1142, %v1944
      %v1977 = vmax.f32 %v1143, %v1945
      %v1978 = vmax.f32 %v1144, %v1946
      %vm1979 = vcmask 48128
      %1980 = vst.msk [vmem:[%s319] sm:$0xff] %vm1979, %v1947
      %1981 = vst.msk [vmem:[%s319 + $0x8] sm:$0xff] %vm1979, %v1948
      %1982 = vst.msk [vmem:[%s319 + $0x10] sm:$0xff] %vm1979, %v1949
      %1983 = vst.msk [vmem:[%s319 + $0x18] sm:$0xff] %vm1979, %v1950
      %1984 = vst.msk [vmem:[%s319 + $0x20] sm:$0xff] %vm1979, %v1951
      %1985 = vst.msk [vmem:[%s319 + $0x28] sm:$0xff] %vm1979, %v1952
      %1986 = vst.msk [vmem:[%s319 + $0x30] sm:$0xff] %vm1979, %v1953
      %1987 = vst.msk [vmem:[%s319 + $0x38] sm:$0xff] %vm1979, %v1954
      %1988 = vst.msk [vmem:[%s319 + $0x40] sm:$0xff] %vm1979, %v1955
      %1989 = vst.msk [vmem:[%s319 + $0x48] sm:$0xff] %vm1979, %v1956
      %1990 = vst.msk [vmem:[%s319 + $0x50] sm:$0xff] %vm1979, %v1957
      %1991 = vst.msk [vmem:[%s319 + $0x58] sm:$0xff] %vm1979, %v1958
      %1992 = vst.msk [vmem:[%s319 + $0x60] sm:$0xff] %vm1979, %v1959
      %1993 = vst.msk [vmem:[%s319 + $0x68] sm:$0xff] %vm1979, %v1960
      %1994 = vst.msk [vmem:[%s319 + $0x70] sm:$0xff] %vm1979, %v1961
      %1995 = vst.msk [vmem:[%s319 + $0x78] sm:$0xff] %vm1979, %v1962
      %1996 = vst.msk [vmem:[%s319 + $0x80] sm:$0xff] %vm1979, %v1963
      %1997 = vst.msk [vmem:[%s319 + $0x88] sm:$0xff] %vm1979, %v1964
      %1998 = vst.msk [vmem:[%s319 + $0x90] sm:$0xff] %vm1979, %v1965
      %1999 = vst.msk [vmem:[%s319 + $0x98] sm:$0xff] %vm1979, %v1966
      %2000 = vst.msk [vmem:[%s319 + $0xa0] sm:$0xff] %vm1979, %v1967
      %2001 = vst.msk [vmem:[%s319 + $0xa8] sm:$0xff] %vm1979, %v1968
      %2002 = vst.msk [vmem:[%s319 + $0xb0] sm:$0xff] %vm1979, %v1969
      %2003 = vst.msk [vmem:[%s319 + $0xb8] sm:$0xff] %vm1979, %v1970
      %2004 = vst.msk [vmem:[%s319 + $0xc0] sm:$0xff] %vm1979, %v1971
      %2005 = vst.msk [vmem:[%s319 + $0xc8] sm:$0xff] %vm1979, %v1972
      %2006 = vst.msk [vmem:[%s319 + $0xd0] sm:$0xff] %vm1979, %v1973
      %2007 = vst.msk [vmem:[%s319 + $0xd8] sm:$0xff] %vm1979, %v1974
      %2008 = vst.msk [vmem:[%s319 + $0xe0] sm:$0xff] %vm1979, %v1975
      %2009 = vst.msk [vmem:[%s319 + $0xe8] sm:$0xff] %vm1979, %v1976
      %2010 = vst.msk [vmem:[%s319 + $0xf0] sm:$0xff] %vm1979, %v1977
      %2011 = vst.msk [vmem:[%s319 + $0xf8] sm:$0xff] %vm1979, %v1978
      %s2012 = smul.u32 32, %s17
      %p2013 = scmp.lt.s32.totalorder %s2012, 63
      %s2014 = scalar_select %p2013, %s2012, 63
      %s2015 = smul.addr %s2014, 8
      %s2016 = scalar_lea.vmem %s6, %s2015
      // Predicated region
      $region45: #{cnn_image_forward.3} parent=43 // pred_check
        %p2017 = pneg %p181
      $region46: #{cnn_image_forward.3} parent=43 // pred_check_branch
        %2019 = sbr.rel (%p2017) target = $region48
      $region47: #{cnn_image_forward.3} parent=43 // pred_region
        %s2020 = smul.u32 32, %s17
      $region48: #{cnn_image_forward.3} parent=43 // pred_fallthru
        _
    $region44: #{cnn_image_forward.3} parent=5 // pred_fallthru
      _
    %p2021 = scmp.le.s32.totalorder 2, %s12
    // Predicated region
    $region49: #{cnn_image_forward.3} parent=5 // pred_check
      %p2022 = pneg %p2021
    $region50: #{cnn_image_forward.3} parent=5 // pred_check_branch
      %2024 = sbr.rel (%p2022) target = $region52
    $region51: #{cnn_image_forward.3} parent=5 // pred_region
      %s2025 = ssub.s32 %s12, 2
      // Predicated region
      $region53: #{cnn_image_forward.3} parent=51 // pred_check
        %p2026 = pneg %p187
      $region54: #{cnn_image_forward.3} parent=51 // pred_check_branch
        %2028 = sbr.rel (%p2026) target = $region56
      $region55: #{cnn_image_forward.3} parent=51 // pred_region
        %s2029 = smul.u32 32, %s18
        %p2030 = scmp.lt.s32.totalorder %s2029, 63
        %s2031 = scalar_select %p2030, %s2029, 63
        %s2032 = smul.addr %s2031, 8
        %s2033 = scalar_lea.vmem %s6, %s2032
      $region56: #{cnn_image_forward.3} parent=51 // pred_fallthru
        _
    $region52: #{cnn_image_forward.3} parent=5 // pred_fallthru
      _
  $region6: #{cnn_image_forward.3} parent=0 // loop_footer
    %s16 = sadd.s32 1, %s12
  $region7: #{cnn_image_forward.3} parent=0 // loop_footer_branch
    %11 = sbr.rel target = $region3
  $region8: #{cnn_image_forward.3} parent=0 // loop_exit
    _

// kernel: cnn_image_forward.4
$region0: #{cnn_image_forward.4}
  #allocation0 [shape = 'u32[]', space=smem, size = 0x4, offset = 0x4, fixed_abs, tag = 'smem constant byte address 0x4 - core index']
  #allocation1 [shape = 'u32[144,128]{1,0:T(1,128)}', space=vmem, size = 0x12000, scoped, tag = 'internal scratch']
  %s0 = inlined_call_operand.vmem [shape: f32[56,150], index: 0, kind: input, shape index: {}]
  %s1 = inlined_call_operand.vmem [shape: f32[56,150], index: 1, kind: input, shape index: {}]
  %s2 = inlined_call_operand.vmem [shape: f32[56,150], index: 2, kind: input, shape index: {}]
  %s3 = inlined_call_operand.vmem [shape: f32[56,150], index: 3, kind: input, shape index: {}]
  %s4 = inlined_call_operand.vmem [shape: f32[150,16], index: 4, kind: input, shape index: {}]
  %s5 = inlined_call_operand.vmem [shape: f32[1,16], index: 5, kind: input, shape index: {}]
  %s6 = inlined_call_operand.vmem [shape: f32[56,16], index: 6, kind: output, shape index: {}]
  %s7 = sld [smem:[#allocation0]]
  $region34: #{cnn_image_forward.4} parent=0
    _
  %s9 = ssub.s32 1, %s7
  %s10 = scalar_select 0, %s9, %s7
  // Predicated region
  $region2: #{cnn_image_forward.4} parent=0 // pred_check
    _
  $region3: #{cnn_image_forward.4} parent=0 // pred_check_branch
    %12 = sbr.rel (0) target = $region5
  $region4: #{cnn_image_forward.4} parent=0 // pred_region
    _
  $region5: #{cnn_image_forward.4} parent=0 // pred_fallthru
    _
  // Predicated region
  $region6: #{cnn_image_forward.4} parent=0 // pred_check
    _
  $region7: #{cnn_image_forward.4} parent=0 // pred_check_branch
    %14 = sbr.rel (0) target = $region9
  $region8: #{cnn_image_forward.4} parent=0 // pred_region
    _
  $region9: #{cnn_image_forward.4} parent=0 // pred_fallthru
    _
  // Predicated region
  $region10: #{cnn_image_forward.4} parent=0 // pred_check
    _
  $region11: #{cnn_image_forward.4} parent=0 // pred_check_branch
    %16 = sbr.rel (0) target = $region13
  $region12: #{cnn_image_forward.4} parent=0 // pred_region
    _
  $region13: #{cnn_image_forward.4} parent=0 // pred_fallthru
    _
  // Predicated region
  $region14: #{cnn_image_forward.4} parent=0 // pred_check
    _
  $region15: #{cnn_image_forward.4} parent=0 // pred_check_branch
    %18 = sbr.rel (0) target = $region17
  $region16: #{cnn_image_forward.4} parent=0 // pred_region
    _
  $region17: #{cnn_image_forward.4} parent=0 // pred_fallthru
    _
  // Predicated region
  $region18: #{cnn_image_forward.4} parent=0 // pred_check
    _
  $region19: #{cnn_image_forward.4} parent=0 // pred_check_branch
    %20 = sbr.rel (0) target = $region21
  $region20: #{cnn_image_forward.4} parent=0 // pred_region
    _
  $region21: #{cnn_image_forward.4} parent=0 // pred_fallthru
    _
  // Predicated region
  $region22: #{cnn_image_forward.4} parent=0 // pred_check
    _
  $region23: #{cnn_image_forward.4} parent=0 // pred_check_branch
    %22 = sbr.rel (0) target = $region25
  $region24: #{cnn_image_forward.4} parent=0 // pred_region
    _
  $region25: #{cnn_image_forward.4} parent=0 // pred_fallthru
    _
  %v23 = vld [vmem:[%s4] sm:$0xff]
  %v24 = vld [vmem:[%s4 + $0x8] sm:$0xff]
  %v25 = vld [vmem:[%s4 + $0x10] sm:$0xff]
  %v26 = vld [vmem:[%s4 + $0x18] sm:$0xff]
  %v27 = vld [vmem:[%s4 + $0x20] sm:$0xff]
  %v28 = vld [vmem:[%s4 + $0x28] sm:$0xff]
  %v29 = vld [vmem:[%s4 + $0x30] sm:$0xff]
  %v30 = vld [vmem:[%s4 + $0x38] sm:$0xff]
  %v31 = vld [vmem:[%s4 + $0x40] sm:$0xff]
  %v32 = vld [vmem:[%s4 + $0x48] sm:$0xff]
  %v33 = vld [vmem:[%s4 + $0x50] sm:$0xff]
  %v34 = vld [vmem:[%s4 + $0x58] sm:$0xff]
  %v35 = vld [vmem:[%s4 + $0x60] sm:$0xff]
  %v36 = vld [vmem:[%s4 + $0x68] sm:$0xff]
  %v37 = vld [vmem:[%s4 + $0x70] sm:$0xff]
  %v38 = vld [vmem:[%s4 + $0x78] sm:$0xff]
  %v39 = vld [vmem:[%s4 + $0x80] sm:$0xff]
  %v40 = vld [vmem:[%s4 + $0x88] sm:$0xff]
  %v41 = vld [vmem:[%s4 + $0x90] sm:$0x3f]
  %v42 = vld [vmem:[%s5] sm:$0x1]
  %v43 = vld [vmem:[%s0] sm:$0xff]
  %v44 = vld [vmem:[%s0 + $0x8] sm:$0xff]
  %v45 = vld [vmem:[%s0 + $0x10] sm:$0xff]
  %v46 = vld [vmem:[%s0 + $0x18] sm:$0xff]
  %v47 = vld [vmem:[%s0 + $0x20] sm:$0xff]
  %v48 = vld [vmem:[%s0 + $0x28] sm:$0xff]
  %v49 = vld [vmem:[%s0 + $0x30] sm:$0xff]
  %v50 = vld [vmem:[%s0 + $0x38] sm:$0xff]
  %v51 = vld [vmem:[%s0 + $0x40] sm:$0xff]
  %v52 = vld [vmem:[%s0 + $0x48] sm:$0xff]
  %v53 = vld [vmem:[%s0 + $0x50] sm:$0xff]
  %v54 = vld [vmem:[%s0 + $0x58] sm:$0xff]
  %v55 = vld [vmem:[%s0 + $0x60] sm:$0xff]
  %v56 = vld [vmem:[%s0 + $0x68] sm:$0xff]
  %v58 = vlaneseq
  %v59 = vshrl.u32 %v58, 7
  %v60 = vsub.s32 0, %v59
  %v61 = vrot.slane %v42, %v60
  %vm63 = vcmask 179200
  %v65 = vsel %vm63, %v44, 0
  %v68 = vsel %vm63, %v46, 0
  %v71 = vsel %vm63, %v48, 0
  %v74 = vsel %vm63, %v50, 0
  %v77 = vsel %vm63, %v52, 0
  %v80 = vsel %vm63, %v54, 0
  %v83 = vsel %vm63, %v56, 0
  %vm85 = vcmask 1045504
  %v87 = vsel %vm85, %v41, 0
  %89 = vmatprep.subr.mxu0 0.0
  %90 = vmatpush1.msra.mxu0 %v23
  %91 = vmatprep.subr.mxu0 0.0
  %92 = vmatpush1.msra.mxu0 %v24
  %93 = vmatprep.subr.mxu0 0.0
  %94 = vmatpush1.msra.mxu0 %v25
  %95 = vmatprep.subr.mxu0 0.0
  %96 = vmatpush1.msra.mxu0 %v26
  %97 = vmatprep.subr.mxu0 0.0
  %98 = vmatpush1.msra.mxu0 %v27
  %99 = vmatprep.subr.mxu0 0.0
  %100 = vmatpush1.msra.mxu0 %v28
  %101 = vmatprep.subr.mxu0 0.0
  %102 = vmatpush1.msra.mxu0 %v29
  %103 = vmatprep.subr.mxu0 0.0
  %104 = vmatpush1.msra.mxu0 %v30
  %105 = vmatprep.subr.mxu0 0.0
  %106 = vmatpush1.msra.mxu0 %v31
  %107 = vmatprep.subr.mxu0 0.0
  %108 = vmatpush1.msra.mxu0 %v32
  %109 = vmatprep.subr.mxu0 0.0
  %110 = vmatpush1.msra.mxu0 %v33
  %111 = vmatprep.subr.mxu0 0.0
  %112 = vmatpush1.msra.mxu0 %v34
  %113 = vmatprep.subr.mxu0 0.0
  %114 = vmatpush1.msra.mxu0 %v35
  %115 = vmatprep.subr.mxu0 0.0
  %116 = vmatpush1.msra.mxu0 %v36
  %117 = vmatprep.subr.mxu0 0.0
  %118 = vmatpush1.msra.mxu0 %v37
  %119 = vmatprep.subr.mxu0 0.0
  %120 = vmatpush1.msra.mxu0 %v38
  %121 = vmatprep.subr.mxu0 0.0
  %122 = vmatpush1.msra.mxu0 %v39
  %123 = vmatprep.subr.mxu0 0.0
  %124 = vmatpush1.msra.mxu0 %v40
  %125 = vmatprep.subr.mxu0 0.0
  %126 = vmatpush1.msra.mxu0 %v87
  %127 = vmatprep.subr.mxu0 0.0
  %128 = vmatpush1.msra.mxu0 0.0
  %129 = vmatprep.subr.mxu0 0.0
  %130 = vmatpush1.msra.mxu0 0.0
  %131 = vmatprep.subr.mxu0 0.0
  %132 = vmatpush1.msra.mxu0 0.0
  %133 = vmatprep.subr.mxu0 0.0
  %134 = vmatpush1.msra.mxu0 0.0
  %135 = vmatprep.subr.mxu0 0.0
  %136 = vmatpush1.msra.mxu0 0.0
  %137 = vmatprep.subr.mxu0 0.0
  %138 = vmatpush1.msra.mxu0 0.0
  %139 = vmatprep.subr.mxu0 0.0
  %140 = vmatpush1.msra.mxu0 0.0
  %141 = vmatprep.subr.mxu0 0.0
  %142 = vmatpush1.msra.mxu0 0.0
  %143 = vmatprep.subr.mxu0 0.0
  %144 = vmatpush1.msra.mxu0 0.0
  %145 = vmatprep.subr.mxu0 0.0
  %146 = vmatpush1.msra.mxu0 0.0
  %147 = vmatprep.subr.mxu0 0.0
  %148 = vmatpush1.msra.mxu0 0.0
  %149 = vmatprep.subr.mxu0 0.0
  %150 = vmatpush1.msra.mxu0 0.0
  %151 = vmatprep.subr.mxu0 0.0
  %152 = vmatpush1.msra.mxu0 0.0
  %153 = vmatprep.mubr.f32.mxu0 %v65
  %154 = vmatmul.mubr.f32.gmra.mrb[0].mxu0 %v43
  %v155 = vpop.f32.mrb[0].mxu0
  %v156 = vadd.f32 %v61, %v155
  %v157 = vpop.f32.mrb[0].mxu0
  %158 = vmatprep.mubr.f32.mxu0 %v68
  %159 = vmatmul.mubr.f32.gmra.mrb[0].mxu0 %v45
  %v160 = vpop.f32.mrb[0].mxu0
  %v161 = vadd.f32 %v61, %v160
  %v162 = vpop.f32.mrb[0].mxu0
  %163 = vmatprep.mubr.f32.mxu0 %v71
  %164 = vmatmul.mubr.f32.gmra.mrb[0].mxu0 %v47
  %v165 = vpop.f32.mrb[0].mxu0
  %v166 = vadd.f32 %v61, %v165
  %v167 = vpop.f32.mrb[0].mxu0
  %168 = vmatprep.mubr.f32.mxu0 %v74
  %169 = vmatmul.mubr.f32.gmra.mrb[0].mxu0 %v49
  %v170 = vpop.f32.mrb[0].mxu0
  %v171 = vadd.f32 %v61, %v170
  %v172 = vpop.f32.mrb[0].mxu0
  %173 = vmatprep.mubr.f32.mxu0 %v77
  %174 = vmatmul.mubr.f32.gmra.mrb[0].mxu0 %v51
  %v175 = vpop.f32.mrb[0].mxu0
  %v176 = vadd.f32 %v61, %v175
  %v177 = vpop.f32.mrb[0].mxu0
  %178 = vmatprep.mubr.f32.mxu0 %v80
  %179 = vmatmul.mubr.f32.gmra.mrb[0].mxu0 %v53
  %v180 = vpop.f32.mrb[0].mxu0
  %v181 = vadd.f32 %v61, %v180
  %v182 = vpop.f32.mrb[0].mxu0
  %183 = vmatprep.mubr.f32.mxu0 %v83
  %184 = vmatmul.mubr.f32.gmra.mrb[0].mxu0 %v55
  %v185 = vpop.f32.mrb[0].mxu0
  %v186 = vadd.f32 %v61, %v185
  %v187 = vpop.f32.mrb[0].mxu0
  %188 = vdwg.mxu0
  %v189 = vmax.f32 %v156, 0.0
  %v190 = vmax.f32 %v161, 0.0
  %v191 = vmax.f32 %v166, 0.0
  %v192 = vmax.f32 %v171, 0.0
  %v193 = vmax.f32 %v176, 0.0
  %v194 = vmax.f32 %v181, 0.0
  %v195 = vmax.f32 %v186, 0.0
  %v196 = vld [vmem:[%s1] sm:$0xff]
  %v197 = vld [vmem:[%s1 + $0x8] sm:$0xff]
  %v198 = vld [vmem:[%s1 + $0x10] sm:$0xff]
  %v199 = vld [vmem:[%s1 + $0x18] sm:$0xff]
  %v200 = vld [vmem:[%s1 + $0x20] sm:$0xff]
  %v201 = vld [vmem:[%s1 + $0x28] sm:$0xff]
  %v202 = vld [vmem:[%s1 + $0x30] sm:$0xff]
  %v203 = vld [vmem:[%s1 + $0x38] sm:$0xff]
  %v204 = vld [vmem:[%s1 + $0x40] sm:$0xff]
  %v205 = vld [vmem:[%s1 + $0x48] sm:$0xff]
  %v206 = vld [vmem:[%s1 + $0x50] sm:$0xff]
  %v207 = vld [vmem:[%s1 + $0x58] sm:$0xff]
  %v208 = vld [vmem:[%s1 + $0x60] sm:$0xff]
  %v209 = vld [vmem:[%s1 + $0x68] sm:$0xff]
  %v211 = vsel %vm63, %v197, 0
  %v214 = vsel %vm63, %v199, 0
  %v217 = vsel %vm63, %v201, 0
  %v220 = vsel %vm63, %v203, 0
  %v223 = vsel %vm63, %v205, 0
  %v226 = vsel %vm63, %v207, 0
  %v229 = vsel %vm63, %v209, 0
  %231 = vmatprep.subr.mxu0 0.0
  %232 = vmatpush1.msra.mxu0 %v23
  %233 = vmatprep.subr.mxu0 0.0
  %234 = vmatpush1.msra.mxu0 %v24
  %235 = vmatprep.subr.mxu0 0.0
  %236 = vmatpush1.msra.mxu0 %v25
  %237 = vmatprep.subr.mxu0 0.0
  %238 = vmatpush1.msra.mxu0 %v26
  %239 = vmatprep.subr.mxu0 0.0
  %240 = vmatpush1.msra.mxu0 %v27
  %241 = vmatprep.subr.mxu0 0.0
  %242 = vmatpush1.msra.mxu0 %v28
  %243 = vmatprep.subr.mxu0 0.0
  %244 = vmatpush1.msra.mxu0 %v29
  %245 = vmatprep.subr.mxu0 0.0
  %246 = vmatpush1.msra.mxu0 %v30
  %247 = vmatprep.subr.mxu0 0.0
  %248 = vmatpush1.msra.mxu0 %v31
  %249 = vmatprep.subr.mxu0 0.0
  %250 = vmatpush1.msra.mxu0 %v32
  %251 = vmatprep.subr.mxu0 0.0
  %252 = vmatpush1.msra.mxu0 %v33
  %253 = vmatprep.subr.mxu0 0.0
  %254 = vmatpush1.msra.mxu0 %v34
  %255 = vmatprep.subr.mxu0 0.0
  %256 = vmatpush1.msra.mxu0 %v35
  %257 = vmatprep.subr.mxu0 0.0
  %258 = vmatpush1.msra.mxu0 %v36
  %259 = vmatprep.subr.mxu0 0.0
  %260 = vmatpush1.msra.mxu0 %v37
  %261 = vmatprep.subr.mxu0 0.0
  %262 = vmatpush1.msra.mxu0 %v38
  %263 = vmatprep.subr.mxu0 0.0
  %264 = vmatpush1.msra.mxu0 %v39
  %265 = vmatprep.subr.mxu0 0.0
  %266 = vmatpush1.msra.mxu0 %v40
  %267 = vmatprep.subr.mxu0 0.0
  %268 = vmatpush1.msra.mxu0 %v87
  %269 = vmatprep.subr.mxu0 0.0
  %270 = vmatpush1.msra.mxu0 0.0
  %271 = vmatprep.subr.mxu0 0.0
  %272 = vmatpush1.msra.mxu0 0.0
  %273 = vmatprep.subr.mxu0 0.0
  %274 = vmatpush1.msra.mxu0 0.0
  %275 = vmatprep.subr.mxu0 0.0
  %276 = vmatpush1.msra.mxu0 0.0
  %277 = vmatprep.subr.mxu0 0.0
  %278 = vmatpush1.msra.mxu0 0.0
  %279 = vmatprep.subr.mxu0 0.0
  %280 = vmatpush1.msra.mxu0 0.0
  %281 = vmatprep.subr.mxu0 0.0
  %282 = vmatpush1.msra.mxu0 0.0
  %283 = vmatprep.subr.mxu0 0.0
  %284 = vmatpush1.msra.mxu0 0.0
  %285 = vmatprep.subr.mxu0 0.0
  %286 = vmatpush1.msra.mxu0 0.0
  %287 = vmatprep.subr.mxu0 0.0
  %288 = vmatpush1.msra.mxu0 0.0
  %289 = vmatprep.subr.mxu0 0.0
  %290 = vmatpush1.msra.mxu0 0.0
  %291 = vmatprep.subr.mxu0 0.0
  %292 = vmatpush1.msra.mxu0 0.0
  %293 = vmatprep.subr.mxu0 0.0
  %294 = vmatpush1.msra.mxu0 0.0
  %295 = vmatprep.mubr.f32.mxu0 %v211
  %296 = vmatmul.mubr.f32.gmra.mrb[0].mxu0 %v196
  %v297 = vpop.f32.mrb[0].mxu0
  %v298 = vadd.f32 %v61, %v297
  %v299 = vpop.f32.mrb[0].mxu0
  %300 = vmatprep.mubr.f32.mxu0 %v214
  %301 = vmatmul.mubr.f32.gmra.mrb[0].mxu0 %v198
  %v302 = vpop.f32.mrb[0].mxu0
  %v303 = vadd.f32 %v61, %v302
  %v304 = vpop.f32.mrb[0].mxu0
  %305 = vmatprep.mubr.f32.mxu0 %v217
  %306 = vmatmul.mubr.f32.gmra.mrb[0].mxu0 %v200
  %v307 = vpop.f32.mrb[0].mxu0
  %v308 = vadd.f32 %v61, %v307
  %v309 = vpop.f32.mrb[0].mxu0
  %310 = vmatprep.mubr.f32.mxu0 %v220
  %311 = vmatmul.mubr.f32.gmra.mrb[0].mxu0 %v202
  %v312 = vpop.f32.mrb[0].mxu0
  %v313 = vadd.f32 %v61, %v312
  %v314 = vpop.f32.mrb[0].mxu0
  %315 = vmatprep.mubr.f32.mxu0 %v223
  %316 = vmatmul.mubr.f32.gmra.mrb[0].mxu0 %v204
  %v317 = vpop.f32.mrb[0].mxu0
  %v318 = vadd.f32 %v61, %v317
  %v319 = vpop.f32.mrb[0].mxu0
  %320 = vmatprep.mubr.f32.mxu0 %v226
  %321 = vmatmul.mubr.f32.gmra.mrb[0].mxu0 %v206
  %v322 = vpop.f32.mrb[0].mxu0
  %v323 = vadd.f32 %v61, %v322
  %v324 = vpop.f32.mrb[0].mxu0
  %325 = vmatprep.mubr.f32.mxu0 %v229
  %326 = vmatmul.mubr.f32.gmra.mrb[0].mxu0 %v208
  %v327 = vpop.f32.mrb[0].mxu0
  %v328 = vadd.f32 %v61, %v327
  %v329 = vpop.f32.mrb[0].mxu0
  %330 = vdwg.mxu0
  %v331 = vmax.f32 %v298, 0.0
  %v332 = vmax.f32 %v303, 0.0
  %v333 = vmax.f32 %v308, 0.0
  %v334 = vmax.f32 %v313, 0.0
  %v335 = vmax.f32 %v318, 0.0
  %v336 = vmax.f32 %v323, 0.0
  %v337 = vmax.f32 %v328, 0.0
  %v338 = vmax.f32 %v189, %v331
  %v339 = vmax.f32 %v190, %v332
  %v340 = vmax.f32 %v191, %v333
  %v341 = vmax.f32 %v192, %v334
  %v342 = vmax.f32 %v193, %v335
  %v343 = vmax.f32 %v194, %v336
  %v344 = vmax.f32 %v195, %v337
  %v345 = vld [vmem:[%s2] sm:$0xff]
  %v346 = vld [vmem:[%s2 + $0x8] sm:$0xff]
  %v347 = vld [vmem:[%s2 + $0x10] sm:$0xff]
  %v348 = vld [vmem:[%s2 + $0x18] sm:$0xff]
  %v349 = vld [vmem:[%s2 + $0x20] sm:$0xff]
  %v350 = vld [vmem:[%s2 + $0x28] sm:$0xff]
  %v351 = vld [vmem:[%s2 + $0x30] sm:$0xff]
  %v352 = vld [vmem:[%s2 + $0x38] sm:$0xff]
  %v353 = vld [vmem:[%s2 + $0x40] sm:$0xff]
  %v354 = vld [vmem:[%s2 + $0x48] sm:$0xff]
  %v355 = vld [vmem:[%s2 + $0x50] sm:$0xff]
  %v356 = vld [vmem:[%s2 + $0x58] sm:$0xff]
  %v357 = vld [vmem:[%s2 + $0x60] sm:$0xff]
  %v358 = vld [vmem:[%s2 + $0x68] sm:$0xff]
  %v360 = vsel %vm63, %v346, 0
  %v363 = vsel %vm63, %v348, 0
  %v366 = vsel %vm63, %v350, 0
  %v369 = vsel %vm63, %v352, 0
  %v372 = vsel %vm63, %v354, 0
  %v375 = vsel %vm63, %v356, 0
  %v378 = vsel %vm63, %v358, 0
  %380 = vmatprep.subr.mxu0 0.0
  %381 = vmatpush1.msra.mxu0 %v23
  %382 = vmatprep.subr.mxu0 0.0
  %383 = vmatpush1.msra.mxu0 %v24
  %384 = vmatprep.subr.mxu0 0.0
  %385 = vmatpush1.msra.mxu0 %v25
  %386 = vmatprep.subr.mxu0 0.0
  %387 = vmatpush1.msra.mxu0 %v26
  %388 = vmatprep.subr.mxu0 0.0
  %389 = vmatpush1.msra.mxu0 %v27
  %390 = vmatprep.subr.mxu0 0.0
  %391 = vmatpush1.msra.mxu0 %v28
  %392 = vmatprep.subr.mxu0 0.0
  %393 = vmatpush1.msra.mxu0 %v29
  %394 = vmatprep.subr.mxu0 0.0
  %395 = vmatpush1.msra.mxu0 %v30
  %396 = vmatprep.subr.mxu0 0.0
  %397 = vmatpush1.msra.mxu0 %v31
  %398 = vmatprep.subr.mxu0 0.0
  %399 = vmatpush1.msra.mxu0 %v32
  %400 = vmatprep.subr.mxu0 0.0
  %401 = vmatpush1.msra.mxu0 %v33
  %402 = vmatprep.subr.mxu0 0.0
  %403 = vmatpush1.msra.mxu0 %v34
  %404 = vmatprep.subr.mxu0 0.0
  %405 = vmatpush1.msra.mxu0 %v35
  %406 = vmatprep.subr.mxu0 0.0
  %407 = vmatpush1.msra.mxu0 %v36
  %408 = vmatprep.subr.mxu0 0.0
  %409 = vmatpush1.msra.mxu0 %v37
  %410 = vmatprep.subr.mxu0 0.0
  %411 = vmatpush1.msra.mxu0 %v38
  %412 = vmatprep.subr.mxu0 0.0
  %413 = vmatpush1.msra.mxu0 %v39
  %414 = vmatprep.subr.mxu0 0.0
  %415 = vmatpush1.msra.mxu0 %v40
  %416 = vmatprep.subr.mxu0 0.0
  %417 = vmatpush1.msra.mxu0 %v87
  %418 = vmatprep.subr.mxu0 0.0
  %419 = vmatpush1.msra.mxu0 0.0
  %420 = vmatprep.subr.mxu0 0.0
  %421 = vmatpush1.msra.mxu0 0.0
  %422 = vmatprep.subr.mxu0 0.0
  %423 = vmatpush1.msra.mxu0 0.0
  %424 = vmatprep.subr.mxu0 0.0
  %425 = vmatpush1.msra.mxu0 0.0
  %426 = vmatprep.subr.mxu0 0.0
  %427 = vmatpush1.msra.mxu0 0.0
  %428 = vmatprep.subr.mxu0 0.0
  %429 = vmatpush1.msra.mxu0 0.0
  %430 = vmatprep.subr.mxu0 0.0
  %431 = vmatpush1.msra.mxu0 0.0
  %432 = vmatprep.subr.mxu0 0.0
  %433 = vmatpush1.msra.mxu0 0.0
  %434 = vmatprep.subr.mxu0 0.0
  %435 = vmatpush1.msra.mxu0 0.0
  %436 = vmatprep.subr.mxu0 0.0
  %437 = vmatpush1.msra.mxu0 0.0
  %438 = vmatprep.subr.mxu0 0.0
  %439 = vmatpush1.msra.mxu0 0.0
  %440 = vmatprep.subr.mxu0 0.0
  %441 = vmatpush1.msra.mxu0 0.0
  %442 = vmatprep.subr.mxu0 0.0
  %443 = vmatpush1.msra.mxu0 0.0
  %444 = vmatprep.mubr.f32.mxu0 %v360
  %445 = vmatmul.mubr.f32.gmra.mrb[0].mxu0 %v345
  %v446 = vpop.f32.mrb[0].mxu0
  %v447 = vadd.f32 %v61, %v446
  %v448 = vpop.f32.mrb[0].mxu0
  %449 = vmatprep.mubr.f32.mxu0 %v363
  %450 = vmatmul.mubr.f32.gmra.mrb[0].mxu0 %v347
  %v451 = vpop.f32.mrb[0].mxu0
  %v452 = vadd.f32 %v61, %v451
  %v453 = vpop.f32.mrb[0].mxu0
  %454 = vmatprep.mubr.f32.mxu0 %v366
  %455 = vmatmul.mubr.f32.gmra.mrb[0].mxu0 %v349
  %v456 = vpop.f32.mrb[0].mxu0
  %v457 = vadd.f32 %v61, %v456
  %v458 = vpop.f32.mrb[0].mxu0
  %459 = vmatprep.mubr.f32.mxu0 %v369
  %460 = vmatmul.mubr.f32.gmra.mrb[0].mxu0 %v351
  %v461 = vpop.f32.mrb[0].mxu0
  %v462 = vadd.f32 %v61, %v461
  %v463 = vpop.f32.mrb[0].mxu0
  %464 = vmatprep.mubr.f32.mxu0 %v372
  %465 = vmatmul.mubr.f32.gmra.mrb[0].mxu0 %v353
  %v466 = vpop.f32.mrb[0].mxu0
  %v467 = vadd.f32 %v61, %v466
  %v468 = vpop.f32.mrb[0].mxu0
  %469 = vmatprep.mubr.f32.mxu0 %v375
  %470 = vmatmul.mubr.f32.gmra.mrb[0].mxu0 %v355
  %v471 = vpop.f32.mrb[0].mxu0
  %v472 = vadd.f32 %v61, %v471
  %v473 = vpop.f32.mrb[0].mxu0
  %474 = vmatprep.mubr.f32.mxu0 %v378
  %475 = vmatmul.mubr.f32.gmra.mrb[0].mxu0 %v357
  %v476 = vpop.f32.mrb[0].mxu0
  %v477 = vadd.f32 %v61, %v476
  %v478 = vpop.f32.mrb[0].mxu0
  %479 = vdwg.mxu0
  %v480 = vmax.f32 %v447, 0.0
  %v481 = vmax.f32 %v452, 0.0
  %v482 = vmax.f32 %v457, 0.0
  %v483 = vmax.f32 %v462, 0.0
  %v484 = vmax.f32 %v467, 0.0
  %v485 = vmax.f32 %v472, 0.0
  %v486 = vmax.f32 %v477, 0.0
  %v487 = vld [vmem:[%s3] sm:$0xff]
  %v488 = vld [vmem:[%s3 + $0x8] sm:$0xff]
  %v489 = vld [vmem:[%s3 + $0x10] sm:$0xff]
  %v490 = vld [vmem:[%s3 + $0x18] sm:$0xff]
  %v491 = vld [vmem:[%s3 + $0x20] sm:$0xff]
  %v492 = vld [vmem:[%s3 + $0x28] sm:$0xff]
  %v493 = vld [vmem:[%s3 + $0x30] sm:$0xff]
  %v494 = vld [vmem:[%s3 + $0x38] sm:$0xff]
  %v495 = vld [vmem:[%s3 + $0x40] sm:$0xff]
  %v496 = vld [vmem:[%s3 + $0x48] sm:$0xff]
  %v497 = vld [vmem:[%s3 + $0x50] sm:$0xff]
  %v498 = vld [vmem:[%s3 + $0x58] sm:$0xff]
  %v499 = vld [vmem:[%s3 + $0x60] sm:$0xff]
  %v500 = vld [vmem:[%s3 + $0x68] sm:$0xff]
  %v502 = vsel %vm63, %v488, 0
  %v505 = vsel %vm63, %v490, 0
  %v508 = vsel %vm63, %v492, 0
  %v511 = vsel %vm63, %v494, 0
  %v514 = vsel %vm63, %v496, 0
  %v517 = vsel %vm63, %v498, 0
  %v520 = vsel %vm63, %v500, 0
  %522 = vmatprep.subr.mxu0 0.0
  %523 = vmatpush1.msra.mxu0 %v23
  %524 = vmatprep.subr.mxu0 0.0
  %525 = vmatpush1.msra.mxu0 %v24
  %526 = vmatprep.subr.mxu0 0.0
  %527 = vmatpush1.msra.mxu0 %v25
  %528 = vmatprep.subr.mxu0 0.0
  %529 = vmatpush1.msra.mxu0 %v26
  %530 = vmatprep.subr.mxu0 0.0
  %531 = vmatpush1.msra.mxu0 %v27
  %532 = vmatprep.subr.mxu0 0.0
  %533 = vmatpush1.msra.mxu0 %v28
  %534 = vmatprep.subr.mxu0 0.0
  %535 = vmatpush1.msra.mxu0 %v29
  %536 = vmatprep.subr.mxu0 0.0
  %537 = vmatpush1.msra.mxu0 %v30
  %538 = vmatprep.subr.mxu0 0.0
  %539 = vmatpush1.msra.mxu0 %v31
  %540 = vmatprep.subr.mxu0 0.0
  %541 = vmatpush1.msra.mxu0 %v32
  %542 = vmatprep.subr.mxu0 0.0
  %543 = vmatpush1.msra.mxu0 %v33
  %544 = vmatprep.subr.mxu0 0.0
  %545 = vmatpush1.msra.mxu0 %v34
  %546 = vmatprep.subr.mxu0 0.0
  %547 = vmatpush1.msra.mxu0 %v35
  %548 = vmatprep.subr.mxu0 0.0
  %549 = vmatpush1.msra.mxu0 %v36
  %550 = vmatprep.subr.mxu0 0.0
  %551 = vmatpush1.msra.mxu0 %v37
  %552 = vmatprep.subr.mxu0 0.0
  %553 = vmatpush1.msra.mxu0 %v38
  %554 = vmatprep.subr.mxu0 0.0
  %555 = vmatpush1.msra.mxu0 %v39
  %556 = vmatprep.subr.mxu0 0.0
  %557 = vmatpush1.msra.mxu0 %v40
  %558 = vmatprep.subr.mxu0 0.0
  %559 = vmatpush1.msra.mxu0 %v87
  %560 = vmatprep.subr.mxu0 0.0
  %561 = vmatpush1.msra.mxu0 0.0
  %562 = vmatprep.subr.mxu0 0.0
  %563 = vmatpush1.msra.mxu0 0.0
  %564 = vmatprep.subr.mxu0 0.0
  %565 = vmatpush1.msra.mxu0 0.0
  %566 = vmatprep.subr.mxu0 0.0
  %567 = vmatpush1.msra.mxu0 0.0
  %568 = vmatprep.subr.mxu0 0.0
  %569 = vmatpush1.msra.mxu0 0.0
  %570 = vmatprep.subr.mxu0 0.0
  %571 = vmatpush1.msra.mxu0 0.0
  %572 = vmatprep.subr.mxu0 0.0
  %573 = vmatpush1.msra.mxu0 0.0
  %574 = vmatprep.subr.mxu0 0.0
  %575 = vmatpush1.msra.mxu0 0.0
  %576 = vmatprep.subr.mxu0 0.0
  %577 = vmatpush1.msra.mxu0 0.0
  %578 = vmatprep.subr.mxu0 0.0
  %579 = vmatpush1.msra.mxu0 0.0
  %580 = vmatprep.subr.mxu0 0.0
  %581 = vmatpush1.msra.mxu0 0.0
  %582 = vmatprep.subr.mxu0 0.0
  %583 = vmatpush1.msra.mxu0 0.0
  %584 = vmatprep.subr.mxu0 0.0
  %585 = vmatpush1.msra.mxu0 0.0
  %586 = vmatprep.mubr.f32.mxu0 %v502
  %587 = vmatmul.mubr.f32.gmra.mrb[0].mxu0 %v487
  %v588 = vpop.f32.mrb[0].mxu0
  %v589 = vadd.f32 %v61, %v588
  %v590 = vpop.f32.mrb[0].mxu0
  %591 = vmatprep.mubr.f32.mxu0 %v505
  %592 = vmatmul.mubr.f32.gmra.mrb[0].mxu0 %v489
  %v593 = vpop.f32.mrb[0].mxu0
  %v594 = vadd.f32 %v61, %v593
  %v595 = vpop.f32.mrb[0].mxu0
  %596 = vmatprep.mubr.f32.mxu0 %v508
  %597 = vmatmul.mubr.f32.gmra.mrb[0].mxu0 %v491
  %v598 = vpop.f32.mrb[0].mxu0
  %v599 = vadd.f32 %v61, %v598
  %v600 = vpop.f32.mrb[0].mxu0
  %601 = vmatprep.mubr.f32.mxu0 %v511
  %602 = vmatmul.mubr.f32.gmra.mrb[0].mxu0 %v493
  %v603 = vpop.f32.mrb[0].mxu0
  %v604 = vadd.f32 %v61, %v603
  %v605 = vpop.f32.mrb[0].mxu0
  %606 = vmatprep.mubr.f32.mxu0 %v514
  %607 = vmatmul.mubr.f32.gmra.mrb[0].mxu0 %v495
  %v608 = vpop.f32.mrb[0].mxu0
  %v609 = vadd.f32 %v61, %v608
  %v610 = vpop.f32.mrb[0].mxu0
  %611 = vmatprep.mubr.f32.mxu0 %v517
  %612 = vmatmul.mubr.f32.gmra.mrb[0].mxu0 %v497
  %v613 = vpop.f32.mrb[0].mxu0
  %v614 = vadd.f32 %v61, %v613
  %v615 = vpop.f32.mrb[0].mxu0
  %616 = vmatprep.mubr.f32.mxu0 %v520
  %617 = vmatmul.mubr.f32.gmra.mrb[0].mxu0 %v499
  %v618 = vpop.f32.mrb[0].mxu0
  %v619 = vadd.f32 %v61, %v618
  %v620 = vpop.f32.mrb[0].mxu0
  %621 = vdwg.mxu0
  %v622 = vmax.f32 %v589, 0.0
  %v623 = vmax.f32 %v594, 0.0
  %v624 = vmax.f32 %v599, 0.0
  %v625 = vmax.f32 %v604, 0.0
  %v626 = vmax.f32 %v609, 0.0
  %v627 = vmax.f32 %v614, 0.0
  %v628 = vmax.f32 %v619, 0.0
  %v629 = vmax.f32 %v480, %v622
  %v630 = vmax.f32 %v481, %v623
  %v631 = vmax.f32 %v482, %v624
  %v632 = vmax.f32 %v483, %v625
  %v633 = vmax.f32 %v484, %v626
  %v634 = vmax.f32 %v485, %v627
  %v635 = vmax.f32 %v486, %v628
  %v636 = vmax.f32 %v338, %v629
  %v637 = vmax.f32 %v339, %v630
  %v638 = vmax.f32 %v340, %v631
  %v639 = vmax.f32 %v341, %v632
  %v640 = vmax.f32 %v342, %v633
  %v641 = vmax.f32 %v343, %v634
  %v642 = vmax.f32 %v344, %v635
  %vm643 = vcmask 130048
  %644 = vst.msk [vmem:[%s6] sm:$0xff] %vm643, %v636
  %645 = vst.msk [vmem:[%s6 + $0x8] sm:$0xff] %vm643, %v637
  %646 = vst.msk [vmem:[%s6 + $0x10] sm:$0xff] %vm643, %v638
  %647 = vst.msk [vmem:[%s6 + $0x18] sm:$0xff] %vm643, %v639
  %648 = vst.msk [vmem:[%s6 + $0x20] sm:$0xff] %vm643, %v640
  %649 = vst.msk [vmem:[%s6 + $0x28] sm:$0xff] %vm643, %v641
  %650 = vst.msk [vmem:[%s6 + $0x30] sm:$0xff] %vm643, %v642
  // Predicated region
  $region26: #{cnn_image_forward.4} parent=0 // pred_check
    _
  $region27: #{cnn_image_forward.4} parent=0 // pred_check_branch
    %652 = sbr.rel (0) target = $region29
  $region28: #{cnn_image_forward.4} parent=0 // pred_region
    _
  $region29: #{cnn_image_forward.4} parent=0 // pred_fallthru
    _
  // Predicated region
  $region30: #{cnn_image_forward.4} parent=0 // pred_check
    _
  $region31: #{cnn_image_forward.4} parent=0 // pred_check_branch
    %654 = sbr.rel (0) target = $region33
  $region32: #{cnn_image_forward.4} parent=0 // pred_region
    _
  $region33: #{cnn_image_forward.4} parent=0 // pred_fallthru
    _

// kernel: cnn_image_forward.5
$region0: #{cnn_image_forward.5}
  #allocation0 [shape = 'u32[]', space=smem, size = 0x4, offset = 0x4, fixed_abs, tag = 'smem constant byte address 0x4 - core index']
  #allocation1 [shape = 'u32[144,128]{1,0:T(1,128)}', space=vmem, size = 0x12000, scoped, tag = 'internal scratch']
  %s0 = inlined_call_operand.vmem [shape: f32[8,400], index: 0, kind: input, shape index: {}]
  %s1 = inlined_call_operand.vmem [shape: f32[400,120], index: 1, kind: input, shape index: {}]
  %s2 = inlined_call_operand.vmem [shape: f32[1,120], index: 2, kind: input, shape index: {}]
  %s3 = inlined_call_operand.vmem [shape: f32[120,84], index: 3, kind: input, shape index: {}]
  %s4 = inlined_call_operand.vmem [shape: f32[1,84], index: 4, kind: input, shape index: {}]
  %s5 = inlined_call_operand.vmem [shape: f32[84,10], index: 5, kind: input, shape index: {}]
  %s6 = inlined_call_operand.vmem [shape: f32[1,10], index: 6, kind: input, shape index: {}]
  %s7 = inlined_call_operand.vmem [shape: f32[8,10], index: 7, kind: output, shape index: {}]
  %s8 = sld [smem:[#allocation0]]
  $region38: #{cnn_image_forward.5} parent=0
    _
  %s10 = ssub.s32 1, %s8
  %s11 = scalar_select 0, %s10, %s8
  // Predicated region
  $region2: #{cnn_image_forward.5} parent=0 // pred_check
    _
  $region3: #{cnn_image_forward.5} parent=0 // pred_check_branch
    %13 = sbr.rel (0) target = $region5
  $region4: #{cnn_image_forward.5} parent=0 // pred_region
    _
  $region5: #{cnn_image_forward.5} parent=0 // pred_fallthru
    _
  // Predicated region
  $region6: #{cnn_image_forward.5} parent=0 // pred_check
    _
  $region7: #{cnn_image_forward.5} parent=0 // pred_check_branch
    %15 = sbr.rel (0) target = $region9
  $region8: #{cnn_image_forward.5} parent=0 // pred_region
    _
  $region9: #{cnn_image_forward.5} parent=0 // pred_fallthru
    _
  // Predicated region
  $region10: #{cnn_image_forward.5} parent=0 // pred_check
    _
  $region11: #{cnn_image_forward.5} parent=0 // pred_check_branch
    %17 = sbr.rel (0) target = $region13
  $region12: #{cnn_image_forward.5} parent=0 // pred_region
    _
  $region13: #{cnn_image_forward.5} parent=0 // pred_fallthru
    _
  // Predicated region
  $region14: #{cnn_image_forward.5} parent=0 // pred_check
    _
  $region15: #{cnn_image_forward.5} parent=0 // pred_check_branch
    %19 = sbr.rel (0) target = $region17
  $region16: #{cnn_image_forward.5} parent=0 // pred_region
    _
  $region17: #{cnn_image_forward.5} parent=0 // pred_fallthru
    _
  // Predicated region
  $region18: #{cnn_image_forward.5} parent=0 // pred_check
    _
  $region19: #{cnn_image_forward.5} parent=0 // pred_check_branch
    %21 = sbr.rel (0) target = $region21
  $region20: #{cnn_image_forward.5} parent=0 // pred_region
    _
  $region21: #{cnn_image_forward.5} parent=0 // pred_fallthru
    _
  // Predicated region
  $region22: #{cnn_image_forward.5} parent=0 // pred_check
    _
  $region23: #{cnn_image_forward.5} parent=0 // pred_check_branch
    %23 = sbr.rel (0) target = $region25
  $region24: #{cnn_image_forward.5} parent=0 // pred_region
    _
  $region25: #{cnn_image_forward.5} parent=0 // pred_fallthru
    _
  // Predicated region
  $region26: #{cnn_image_forward.5} parent=0 // pred_check
    _
  $region27: #{cnn_image_forward.5} parent=0 // pred_check_branch
    %25 = sbr.rel (0) target = $region29
  $region28: #{cnn_image_forward.5} parent=0 // pred_region
    _
  $region29: #{cnn_image_forward.5} parent=0 // pred_fallthru
    _
  %v26 = vld [vmem:[%s0] sm:$0xff]
  %v27 = vld [vmem:[%s0 + $0x8] sm:$0xff]
  %v28 = vld [vmem:[%s0 + $0x10] sm:$0xff]
  %v29 = vld [vmem:[%s0 + $0x18] sm:$0xff]
  %v30 = vld [vmem:[%s1] sm:$0xff]
  %v31 = vld [vmem:[%s1 + $0x8] sm:$0xff]
  %v32 = vld [vmem:[%s1 + $0x10] sm:$0xff]
  %v33 = vld [vmem:[%s1 + $0x18] sm:$0xff]
  %v34 = vld [vmem:[%s1 + $0x20] sm:$0xff]
  %v35 = vld [vmem:[%s1 + $0x28] sm:$0xff]
  %v36 = vld [vmem:[%s1 + $0x30] sm:$0xff]
  %v37 = vld [vmem:[%s1 + $0x38] sm:$0xff]
  %v38 = vld [vmem:[%s1 + $0x40] sm:$0xff]
  %v39 = vld [vmem:[%s1 + $0x48] sm:$0xff]
  %v40 = vld [vmem:[%s1 + $0x50] sm:$0xff]
  %v41 = vld [vmem:[%s1 + $0x58] sm:$0xff]
  %v42 = vld [vmem:[%s1 + $0x60] sm:$0xff]
  %v43 = vld [vmem:[%s1 + $0x68] sm:$0xff]
  %v44 = vld [vmem:[%s1 + $0x70] sm:$0xff]
  %v45 = vld [vmem:[%s1 + $0x78] sm:$0xff]
  %v46 = vld [vmem:[%s1 + $0x80] sm:$0xff]
  %v47 = vld [vmem:[%s1 + $0x88] sm:$0xff]
  %v48 = vld [vmem:[%s1 + $0x90] sm:$0xff]
  %v49 = vld [vmem:[%s1 + $0x98] sm:$0xff]
  %v50 = vld [vmem:[%s1 + $0xa0] sm:$0xff]
  %v51 = vld [vmem:[%s1 + $0xa8] sm:$0xff]
  %v52 = vld [vmem:[%s1 + $0xb0] sm:$0xff]
  %v53 = vld [vmem:[%s1 + $0xb8] sm:$0xff]
  %v54 = vld [vmem:[%s1 + $0xc0] sm:$0xff]
  %v55 = vld [vmem:[%s1 + $0xc8] sm:$0xff]
  %v56 = vld [vmem:[%s1 + $0xd0] sm:$0xff]
  %v57 = vld [vmem:[%s1 + $0xd8] sm:$0xff]
  %v58 = vld [vmem:[%s1 + $0xe0] sm:$0xff]
  %v59 = vld [vmem:[%s1 + $0xe8] sm:$0xff]
  %v60 = vld [vmem:[%s1 + $0xf0] sm:$0xff]
  %v61 = vld [vmem:[%s1 + $0xf8] sm:$0xff]
  %v62 = vld [vmem:[%s1 + $0x100] sm:$0xff]
  %v63 = vld [vmem:[%s1 + $0x108] sm:$0xff]
  %v64 = vld [vmem:[%s1 + $0x110] sm:$0xff]
  %v65 = vld [vmem:[%s1 + $0x118] sm:$0xff]
  %v66 = vld [vmem:[%s1 + $0x120] sm:$0xff]
  %v67 = vld [vmem:[%s1 + $0x128] sm:$0xff]
  %v68 = vld [vmem:[%s1 + $0x130] sm:$0xff]
  %v69 = vld [vmem:[%s1 + $0x138] sm:$0xff]
  %v70 = vld [vmem:[%s1 + $0x140] sm:$0xff]
  %v71 = vld [vmem:[%s1 + $0x148] sm:$0xff]
  %v72 = vld [vmem:[%s1 + $0x150] sm:$0xff]
  %v73 = vld [vmem:[%s1 + $0x158] sm:$0xff]
  %v74 = vld [vmem:[%s1 + $0x160] sm:$0xff]
  %v75 = vld [vmem:[%s1 + $0x168] sm:$0xff]
  %v76 = vld [vmem:[%s1 + $0x170] sm:$0xff]
  %v77 = vld [vmem:[%s1 + $0x178] sm:$0xff]
  %v78 = vld [vmem:[%s1 + $0x180] sm:$0xff]
  %v79 = vld [vmem:[%s1 + $0x188] sm:$0xff]
  %v80 = vld [vmem:[%s2] sm:$0x1]
  %v82 = vlaneseq
  %v83 = vshrl.u32 %v82, 7
  %v84 = vsub.s32 0, %v83
  %v85 = vrot.slane %v80, %v84
  %vm87 = vcmask 130048
  %v89 = vsel %vm87, %v29, 0
  %91 = vmatprep.subr.mxu0 0.0
  %92 = vmatpush1.msra.mxu0 %v30
  %93 = vmatprep.subr.mxu0 0.0
  %94 = vmatpush1.msra.mxu0 %v31
  %95 = vmatprep.subr.mxu0 0.0
  %96 = vmatpush1.msra.mxu0 %v32
  %97 = vmatprep.subr.mxu0 0.0
  %98 = vmatpush1.msra.mxu0 %v33
  %99 = vmatprep.subr.mxu0 0.0
  %100 = vmatpush1.msra.mxu0 %v34
  %101 = vmatprep.subr.mxu0 0.0
  %102 = vmatpush1.msra.mxu0 %v35
  %103 = vmatprep.subr.mxu0 0.0
  %104 = vmatpush1.msra.mxu0 %v36
  %105 = vmatprep.subr.mxu0 0.0
  %106 = vmatpush1.msra.mxu0 %v37
  %107 = vmatprep.subr.mxu0 0.0
  %108 = vmatpush1.msra.mxu0 %v38
  %109 = vmatprep.subr.mxu0 0.0
  %110 = vmatpush1.msra.mxu0 %v39
  %111 = vmatprep.subr.mxu0 0.0
  %112 = vmatpush1.msra.mxu0 %v40
  %113 = vmatprep.subr.mxu0 0.0
  %114 = vmatpush1.msra.mxu0 %v41
  %115 = vmatprep.subr.mxu0 0.0
  %116 = vmatpush1.msra.mxu0 %v42
  %117 = vmatprep.subr.mxu0 0.0
  %118 = vmatpush1.msra.mxu0 %v43
  %119 = vmatprep.subr.mxu0 0.0
  %120 = vmatpush1.msra.mxu0 %v44
  %121 = vmatprep.subr.mxu0 0.0
  %122 = vmatpush1.msra.mxu0 %v45
  %123 = vmatprep.subr.mxu0 0.0
  %124 = vmatpush1.msra.mxu0 %v46
  %125 = vmatprep.subr.mxu0 0.0
  %126 = vmatpush1.msra.mxu0 %v47
  %127 = vmatprep.subr.mxu0 0.0
  %128 = vmatpush1.msra.mxu0 %v48
  %129 = vmatprep.subr.mxu0 0.0
  %130 = vmatpush1.msra.mxu0 %v49
  %131 = vmatprep.subr.mxu0 0.0
  %132 = vmatpush1.msra.mxu0 %v50
  %133 = vmatprep.subr.mxu0 0.0
  %134 = vmatpush1.msra.mxu0 %v51
  %135 = vmatprep.subr.mxu0 0.0
  %136 = vmatpush1.msra.mxu0 %v52
  %137 = vmatprep.subr.mxu0 0.0
  %138 = vmatpush1.msra.mxu0 %v53
  %139 = vmatprep.subr.mxu0 0.0
  %140 = vmatpush1.msra.mxu0 %v54
  %141 = vmatprep.subr.mxu0 0.0
  %142 = vmatpush1.msra.mxu0 %v55
  %143 = vmatprep.subr.mxu0 0.0
  %144 = vmatpush1.msra.mxu0 %v56
  %145 = vmatprep.subr.mxu0 0.0
  %146 = vmatpush1.msra.mxu0 %v57
  %147 = vmatprep.subr.mxu0 0.0
  %148 = vmatpush1.msra.mxu0 %v58
  %149 = vmatprep.subr.mxu0 0.0
  %150 = vmatpush1.msra.mxu0 %v59
  %151 = vmatprep.subr.mxu0 0.0
  %152 = vmatpush1.msra.mxu0 %v60
  %153 = vmatprep.subr.mxu0 0.0
  %154 = vmatpush1.msra.mxu0 %v61
  %155 = vmatprep.mubr.f32.mxu0 %v27
  %156 = vmatmul.mubr.f32.gmra.mrb[0].mxu0 %v26
  %v157 = vpop.f32.mrb[0].mxu0
  %v158 = vadd.f32 %v85, %v157
  %v159 = vpop.f32.mrb[0].mxu0
  %160 = vdwg.mxu0
  %161 = vmatprep.subr.mxu0 0.0
  %162 = vmatpush1.msra.mxu0 %v62
  %163 = vmatprep.subr.mxu0 0.0
  %164 = vmatpush1.msra.mxu0 %v63
  %165 = vmatprep.subr.mxu0 0.0
  %166 = vmatpush1.msra.mxu0 %v64
  %167 = vmatprep.subr.mxu0 0.0
  %168 = vmatpush1.msra.mxu0 %v65
  %169 = vmatprep.subr.mxu0 0.0
  %170 = vmatpush1.msra.mxu0 %v66
  %171 = vmatprep.subr.mxu0 0.0
  %172 = vmatpush1.msra.mxu0 %v67
  %173 = vmatprep.subr.mxu0 0.0
  %174 = vmatpush1.msra.mxu0 %v68
  %175 = vmatprep.subr.mxu0 0.0
  %176 = vmatpush1.msra.mxu0 %v69
  %177 = vmatprep.subr.mxu0 0.0
  %178 = vmatpush1.msra.mxu0 %v70
  %179 = vmatprep.subr.mxu0 0.0
  %180 = vmatpush1.msra.mxu0 %v71
  %181 = vmatprep.subr.mxu0 0.0
  %182 = vmatpush1.msra.mxu0 %v72
  %183 = vmatprep.subr.mxu0 0.0
  %184 = vmatpush1.msra.mxu0 %v73
  %185 = vmatprep.subr.mxu0 0.0
  %186 = vmatpush1.msra.mxu0 %v74
  %187 = vmatprep.subr.mxu0 0.0
  %188 = vmatpush1.msra.mxu0 %v75
  %189 = vmatprep.subr.mxu0 0.0
  %190 = vmatpush1.msra.mxu0 %v76
  %191 = vmatprep.subr.mxu0 0.0
  %192 = vmatpush1.msra.mxu0 %v77
  %193 = vmatprep.subr.mxu0 0.0
  %194 = vmatpush1.msra.mxu0 %v78
  %195 = vmatprep.subr.mxu0 0.0
  %196 = vmatpush1.msra.mxu0 %v79
  %197 = vmatprep.subr.mxu0 0.0
  %198 = vmatpush1.msra.mxu0 0.0
  %199 = vmatprep.subr.mxu0 0.0
  %200 = vmatpush1.msra.mxu0 0.0
  %201 = vmatprep.subr.mxu0 0.0
  %202 = vmatpush1.msra.mxu0 0.0
  %203 = vmatprep.subr.mxu0 0.0
  %204 = vmatpush1.msra.mxu0 0.0
  %205 = vmatprep.subr.mxu0 0.0
  %206 = vmatpush1.msra.mxu0 0.0
  %207 = vmatprep.subr.mxu0 0.0
  %208 = vmatpush1.msra.mxu0 0.0
  %209 = vmatprep.subr.mxu0 0.0
  %210 = vmatpush1.msra.mxu0 0.0
  %211 = vmatprep.subr.mxu0 0.0
  %212 = vmatpush1.msra.mxu0 0.0
  %213 = vmatprep.subr.mxu0 0.0
  %214 = vmatpush1.msra.mxu0 0.0
  %215 = vmatprep.subr.mxu0 0.0
  %216 = vmatpush1.msra.mxu0 0.0
  %217 = vmatprep.subr.mxu0 0.0
  %218 = vmatpush1.msra.mxu0 0.0
  %219 = vmatprep.subr.mxu0 0.0
  %220 = vmatpush1.msra.mxu0 0.0
  %221 = vmatprep.subr.mxu0 0.0
  %222 = vmatpush1.msra.mxu0 0.0
  %223 = vmatprep.subr.mxu0 0.0
  %224 = vmatpush1.msra.mxu0 0.0
  %225 = vmatprep.mubr.f32.mxu0 %v89
  %226 = vmatmul.mubr.f32.gmra.mrb[0].mxu0 %v28
  %v227 = vpop.f32.mrb[0].mxu0
  %v228 = vadd.f32 %v158, %v227
  %v229 = vpop.f32.mrb[0].mxu0
  %230 = vdwg.mxu0
  %v231 = vmax.f32 %v228, 0.0
  %v232 = vld [vmem:[%s3] sm:$0xff]
  %v233 = vld [vmem:[%s3 + $0x8] sm:$0xff]
  %v234 = vld [vmem:[%s3 + $0x10] sm:$0xff]
  %v235 = vld [vmem:[%s3 + $0x18] sm:$0xff]
  %v236 = vld [vmem:[%s3 + $0x20] sm:$0xff]
  %v237 = vld [vmem:[%s3 + $0x28] sm:$0xff]
  %v238 = vld [vmem:[%s3 + $0x30] sm:$0xff]
  %v239 = vld [vmem:[%s3 + $0x38] sm:$0xff]
  %v240 = vld [vmem:[%s3 + $0x40] sm:$0xff]
  %v241 = vld [vmem:[%s3 + $0x48] sm:$0xff]
  %v242 = vld [vmem:[%s3 + $0x50] sm:$0xff]
  %v243 = vld [vmem:[%s3 + $0x58] sm:$0xff]
  %v244 = vld [vmem:[%s3 + $0x60] sm:$0xff]
  %v245 = vld [vmem:[%s3 + $0x68] sm:$0xff]
  %v246 = vld [vmem:[%s3 + $0x70] sm:$0xff]
  %v247 = vld [vmem:[%s4] sm:$0x1]
  %v249 = vlaneseq
  %v250 = vshrl.u32 %v249, 7
  %v251 = vsub.s32 0, %v250
  %v252 = vrot.slane %v247, %v251
  %vm254 = vcmask 982016
  %v256 = vsel %vm254, %v231, 0
  %258 = vmatprep.subr.mxu0 0.0
  %259 = vmatpush1.msra.mxu0 %v232
  %260 = vmatprep.subr.mxu0 0.0
  %261 = vmatpush1.msra.mxu0 %v233
  %262 = vmatprep.subr.mxu0 0.0
  %263 = vmatpush1.msra.mxu0 %v234
  %264 = vmatprep.subr.mxu0 0.0
  %265 = vmatpush1.msra.mxu0 %v235
  %266 = vmatprep.subr.mxu0 0.0
  %267 = vmatpush1.msra.mxu0 %v236
  %268 = vmatprep.subr.mxu0 0.0
  %269 = vmatpush1.msra.mxu0 %v237
  %270 = vmatprep.subr.mxu0 0.0
  %271 = vmatpush1.msra.mxu0 %v238
  %272 = vmatprep.subr.mxu0 0.0
  %273 = vmatpush1.msra.mxu0 %v239
  %274 = vmatprep.subr.mxu0 0.0
  %275 = vmatpush1.msra.mxu0 %v240
  %276 = vmatprep.subr.mxu0 0.0
  %277 = vmatpush1.msra.mxu0 %v241
  %278 = vmatprep.subr.mxu0 0.0
  %279 = vmatpush1.msra.mxu0 %v242
  %280 = vmatprep.subr.mxu0 0.0
  %281 = vmatpush1.msra.mxu0 %v243
  %282 = vmatprep.subr.mxu0 0.0
  %283 = vmatpush1.msra.mxu0 %v244
  %284 = vmatprep.subr.mxu0 0.0
  %285 = vmatpush1.msra.mxu0 %v245
  %286 = vmatprep.subr.mxu0 0.0
  %287 = vmatpush1.msra.mxu0 %v246
  %288 = vmatprep.subr.mxu0 0.0
  %289 = vmatpush1.msra.mxu0 0.0
  %290 = vmatprep.subr.mxu0 0.0
  %291 = vmatpush1.msra.mxu0 0.0
  %292 = vmatprep.subr.mxu0 0.0
  %293 = vmatpush1.msra.mxu0 0.0
  %294 = vmatprep.subr.mxu0 0.0
  %295 = vmatpush1.msra.mxu0 0.0
  %296 = vmatprep.subr.mxu0 0.0
  %297 = vmatpush1.msra.mxu0 0.0
  %298 = vmatprep.subr.mxu0 0.0
  %299 = vmatpush1.msra.mxu0 0.0
  %300 = vmatprep.subr.mxu0 0.0
  %301 = vmatpush1.msra.mxu0 0.0
  %302 = vmatprep.subr.mxu0 0.0
  %303 = vmatpush1.msra.mxu0 0.0
  %304 = vmatprep.subr.mxu0 0.0
  %305 = vmatpush1.msra.mxu0 0.0
  %306 = vmatprep.subr.mxu0 0.0
  %307 = vmatpush1.msra.mxu0 0.0
  %308 = vmatprep.subr.mxu0 0.0
  %309 = vmatpush1.msra.mxu0 0.0
  %310 = vmatprep.subr.mxu0 0.0
  %311 = vmatpush1.msra.mxu0 0.0
  %312 = vmatprep.subr.mxu0 0.0
  %313 = vmatpush1.msra.mxu0 0.0
  %314 = vmatprep.subr.mxu0 0.0
  %315 = vmatpush1.msra.mxu0 0.0
  %316 = vmatprep.subr.mxu0 0.0
  %317 = vmatpush1.msra.mxu0 0.0
  %318 = vmatprep.subr.mxu0 0.0
  %319 = vmatpush1.msra.mxu0 0.0
  %320 = vmatprep.subr.mxu0 0.0
  %321 = vmatpush1.msra.mxu0 0.0
  %322 = vmatprep.mubr.f32.mxu0 0.0
  %323 = vmatmul.mubr.f32.gmra.mrb[0].mxu0 %v256
  %v324 = vpop.f32.mrb[0].mxu0
  %v325 = vadd.f32 %v252, %v324
  %v326 = vpop.f32.mrb[0].mxu0
  %327 = vdwg.mxu0
  %v328 = vmax.f32 %v325, 0.0
  %v329 = vld [vmem:[%s5] sm:$0xff]
  %v330 = vld [vmem:[%s5 + $0x8] sm:$0xff]
  %v331 = vld [vmem:[%s5 + $0x10] sm:$0xff]
  %v332 = vld [vmem:[%s5 + $0x18] sm:$0xff]
  %v333 = vld [vmem:[%s5 + $0x20] sm:$0xff]
  %v334 = vld [vmem:[%s5 + $0x28] sm:$0xff]
  %v335 = vld [vmem:[%s5 + $0x30] sm:$0xff]
  %v336 = vld [vmem:[%s5 + $0x38] sm:$0xff]
  %v337 = vld [vmem:[%s5 + $0x40] sm:$0xff]
  %v338 = vld [vmem:[%s5 + $0x48] sm:$0xff]
  %v339 = vld [vmem:[%s5 + $0x50] sm:$0xf]
  %v340 = vld [vmem:[%s6] sm:$0x1]
  %v342 = vlaneseq
  %v343 = vshrl.u32 %v342, 7
  %v344 = vsub.s32 0, %v343
  %v345 = vrot.slane %v340, %v344
  %vm347 = vcmask 687104
  %v349 = vsel %vm347, %v328, 0
  %vm351 = vcmask 1043456
  %v353 = vsel %vm351, %v339, 0
  %355 = vmatprep.subr.mxu0 0.0
  %356 = vmatpush1.msra.mxu0 %v329
  %357 = vmatprep.subr.mxu0 0.0
  %358 = vmatpush1.msra.mxu0 %v330
  %359 = vmatprep.subr.mxu0 0.0
  %360 = vmatpush1.msra.mxu0 %v331
  %361 = vmatprep.subr.mxu0 0.0
  %362 = vmatpush1.msra.mxu0 %v332
  %363 = vmatprep.subr.mxu0 0.0
  %364 = vmatpush1.msra.mxu0 %v333
  %365 = vmatprep.subr.mxu0 0.0
  %366 = vmatpush1.msra.mxu0 %v334
  %367 = vmatprep.subr.mxu0 0.0
  %368 = vmatpush1.msra.mxu0 %v335
  %369 = vmatprep.subr.mxu0 0.0
  %370 = vmatpush1.msra.mxu0 %v336
  %371 = vmatprep.subr.mxu0 0.0
  %372 = vmatpush1.msra.mxu0 %v337
  %373 = vmatprep.subr.mxu0 0.0
  %374 = vmatpush1.msra.mxu0 %v338
  %375 = vmatprep.subr.mxu0 0.0
  %376 = vmatpush1.msra.mxu0 %v353
  %377 = vmatprep.subr.mxu0 0.0
  %378 = vmatpush1.msra.mxu0 0.0
  %379 = vmatprep.subr.mxu0 0.0
  %380 = vmatpush1.msra.mxu0 0.0
  %381 = vmatprep.subr.mxu0 0.0
  %382 = vmatpush1.msra.mxu0 0.0
  %383 = vmatprep.subr.mxu0 0.0
  %384 = vmatpush1.msra.mxu0 0.0
  %385 = vmatprep.subr.mxu0 0.0
  %386 = vmatpush1.msra.mxu0 0.0
  %387 = vmatprep.subr.mxu0 0.0
  %388 = vmatpush1.msra.mxu0 0.0
  %389 = vmatprep.subr.mxu0 0.0
  %390 = vmatpush1.msra.mxu0 0.0
  %391 = vmatprep.subr.mxu0 0.0
  %392 = vmatpush1.msra.mxu0 0.0
  %393 = vmatprep.subr.mxu0 0.0
  %394 = vmatpush1.msra.mxu0 0.0
  %395 = vmatprep.subr.mxu0 0.0
  %396 = vmatpush1.msra.mxu0 0.0
  %397 = vmatprep.subr.mxu0 0.0
  %398 = vmatpush1.msra.mxu0 0.0
  %399 = vmatprep.subr.mxu0 0.0
  %400 = vmatpush1.msra.mxu0 0.0
  %401 = vmatprep.subr.mxu0 0.0
  %402 = vmatpush1.msra.mxu0 0.0
  %403 = vmatprep.subr.mxu0 0.0
  %404 = vmatpush1.msra.mxu0 0.0
  %405 = vmatprep.subr.mxu0 0.0
  %406 = vmatpush1.msra.mxu0 0.0
  %407 = vmatprep.subr.mxu0 0.0
  %408 = vmatpush1.msra.mxu0 0.0
  %409 = vmatprep.subr.mxu0 0.0
  %410 = vmatpush1.msra.mxu0 0.0
  %411 = vmatprep.subr.mxu0 0.0
  %412 = vmatpush1.msra.mxu0 0.0
  %413 = vmatprep.subr.mxu0 0.0
  %414 = vmatpush1.msra.mxu0 0.0
  %415 = vmatprep.subr.mxu0 0.0
  %416 = vmatpush1.msra.mxu0 0.0
  %417 = vmatprep.subr.mxu0 0.0
  %418 = vmatpush1.msra.mxu0 0.0
  %419 = vmatprep.mubr.f32.mxu0 0.0
  %420 = vmatmul.mubr.f32.gmra.mrb[0].mxu0 %v349
  %v421 = vpop.f32.mrb[0].mxu0
  %v422 = vadd.f32 %v345, %v421
  %v423 = vpop.f32.mrb[0].mxu0
  %424 = vdwg.mxu0
  %vm425 = vcmask 80896
  %426 = vst.msk [vmem:[%s7] sm:$0xff] %vm425, %v422
  // Predicated region
  $region30: #{cnn_image_forward.5} parent=0 // pred_check
    _
  $region31: #{cnn_image_forward.5} parent=0 // pred_check_branch
    %428 = sbr.rel (0) target = $region33
  $region32: #{cnn_image_forward.5} parent=0 // pred_region
    _
  $region33: #{cnn_image_forward.5} parent=0 // pred_fallthru
    _
  // Predicated region
  $region34: #{cnn_image_forward.5} parent=0 // pred_check
    _
  $region35: #{cnn_image_forward.5} parent=0 // pred_check_branch
    %430 = sbr.rel (0) target = $region37
  $region36: #{cnn_image_forward.5} parent=0 // pred_region
    _
  $region37: #{cnn_image_forward.5} parent=0 // pred_fallthru
    _

</llo_original>
